<compile_context>
chip_gen: v6e
topology: v6e:2x2x1
jax: 0.10.0
libtpu: 0.0.40
codegen_flags: <defaults>
</compile_context>

<pallas_src>
import functools

import jax
import jax.numpy as jnp
from jax import lax
from jax.experimental import pallas as pl
from jax.experimental.pallas import tpu as pltpu

WIDEN_FACTOR = 4
BN_EPS = 1e-5
LANE = 128


def _rup(n, m):
    return ((n + m - 1) // m) * m


def _bottleneck_kernel(x_ref, mask_ref, s1_ref, b1_ref, w1_ref, s2_ref, b2_ref,
                       w2_ref, s3_ref, b3_ref, w3_ref, s4_ref, b4_ref, wsc_ref,
                       o_ref, *, Wp, R):
    """One halo-padded image per grid step.  x_ref block: (1, R, Cp)."""
    f32 = jnp.float32
    bf16 = jnp.bfloat16

    x = x_ref[0, :, :]                                       # (R, Cp) f32

    # bn1 (folded scale/bias) -- VPU math stays f32 (no bf16 VALU on v5e).
    y1 = x * s1_ref[...] + b1_ref[...]
    y1b = y1.astype(bf16)                                    # shared matmul operand

    # conv1 (1x1) -> bn2 -> relu
    h = jnp.dot(y1b, w1_ref[...], preferred_element_type=f32)
    h = jnp.maximum(h * s2_ref[...] + b2_ref[...], 0.0)      # (R, Pp)

    # Zero the spatial halo once (replaces nine per-tap masks): the halo rows of
    # x are zero, but the bn1 / bn2 biases make them nonzero again before conv2.
    h = h * mask_ref[...]                                    # (R,1) lane-broadcast

    # conv2: 3x3, padding=1, stride=1, as ONE im2col matmul.
    # tap (oh,ow) at row p is h[p + oh*Wp + ow]; with the halo, interior rows
    # never wrap, so a circular sublane roll is exact and needs no mask.
    taps = []
    for oh in (-1, 0, 1):
        for ow in (-1, 0, 1):
            shift = (-(oh * Wp + ow)) % R
            taps.append(pltpu.roll(h, shift, 0))
    im2col = jnp.concatenate(taps, axis=1).astype(bf16)      # (R, 9*Pp)
    acc = jnp.dot(im2col, w2_ref[...], preferred_element_type=f32)

    # bn3 -> relu -> conv3 (1x1) -> bn4
    h2 = jnp.maximum(acc * s3_ref[...] + b3_ref[...], 0.0)
    h3 = jnp.dot(h2.astype(bf16), w3_ref[...], preferred_element_type=f32)
    out = h3 * s4_ref[...] + b4_ref[...]

    # TODO(synk): self.se is called in forward() but never defined in __init__
    # (the reference PyTorch module would raise AttributeError); treated as identity.

    # shortcut: 1x1 conv on the bn1 output, computed late to shorten live ranges.
    out = out + jnp.dot(y1b, wsc_ref[...], preferred_element_type=f32)

    o_ref[0, :, :] = out.astype(o_ref.dtype)


def preact_bottleneck_pallas(x_nchw, params, *, stride=1):
    # TODO(synk): stride > 1 (strided conv2 / strided shortcut subsampling) is
    # not implemented in-kernel; this instantiation uses stride=1.
    assert stride == 1, "only stride=1 implemented in the Pallas kernel"
    N, cin, H, W = x_nchw.shape
    planes = params["w1_pt"].shape[0]
    cout = planes * WIDEN_FACTOR

    Hp, Wp = H + 2, W + 2
    HWp = Hp * Wp
    R = _rup(HWp, 8)                               # sublane-aligned rows / image
    Cp, Pp, Op = _rup(cin, LANE), _rup(planes, LANE), _rup(cout, LANE)

    # NCHW -> NHWC, add zero spatial halo, zero-pad channels to lane width,
    # flatten spatial, pad row count to a multiple of 8.
    x_nhwc = jnp.transpose(x_nchw, (0, 2, 3, 1))
    x_pad = jnp.pad(x_nhwc, ((0, 0), (1, 1), (1, 1), (0, Cp - cin)))
    x_rows = jnp.pad(x_pad.reshape(N, HWp, Cp),
                     ((0, 0), (0, R - HWp), (0, 0))).astype(jnp.float32)

    # Interior (non-halo) row mask, shared across images / grid steps.
    p = jnp.arange(R)
    rr, cc = p // Wp, p % Wp
    interior = (rr >= 1) & (rr <= H) & (cc >= 1) & (cc <= W) & (p < HWp)
    mask = interior.astype(jnp.float32).reshape(R, 1)

    # PyTorch conv weights (out, in, kh, kw) -> zero-padded bf16 matmul layouts.
    def pad2(w, r, c):
        return jnp.pad(w, ((0, r - w.shape[0]), (0, c - w.shape[1])))

    w1 = pad2(jnp.transpose(params["w1_pt"][:, :, 0, 0]), Cp, Pp).astype(jnp.bfloat16)
    w3 = pad2(jnp.transpose(params["w3_pt"][:, :, 0, 0]), Pp, Op).astype(jnp.bfloat16)
    wsc = pad2(jnp.transpose(params["wsc_pt"][:, :, 0, 0]), Cp, Op).astype(jnp.bfloat16)
    # conv2: (out,in,3,3) -> (3,3,in,out) -> zero-pad -> (9*Pp, Pp) im2col layout.
    w2 = jnp.transpose(params["w2_pt"], (2, 3, 1, 0))
    w2 = jnp.pad(w2, ((0, 0), (0, 0), (0, Pp - planes), (0, Pp - planes)))
    w2 = w2.reshape(9 * Pp, Pp).astype(jnp.bfloat16)

    def row(v, c):
        return jnp.pad(v, (0, c - v.shape[0])).reshape(1, c).astype(jnp.float32)

    args = (x_rows, mask,
            row(params["s1"], Cp), row(params["b1"], Cp), w1,
            row(params["s2"], Pp), row(params["b2"], Pp), w2,
            row(params["s3"], Pp), row(params["b3"], Pp), w3,
            row(params["s4"], Op), row(params["b4"], Op), wsc)

    const2 = lambda n: (0, 0)   # weights / scales / mask: constant block index
    kernel = functools.partial(_bottleneck_kernel, Wp=Wp, R=R)
    out_rows = pl.pallas_call(
        kernel,
        out_shape=jax.ShapeDtypeStruct((N, R, Op), x_nchw.dtype),
        grid_spec=pltpu.PrefetchScalarGridSpec(
            num_scalar_prefetch=0,
            grid=(N,),
            in_specs=[
                pl.BlockSpec((1, R, Cp), lambda n: (n, 0, 0)),    # x (halo-padded)
                pl.BlockSpec((R, 1), const2),                     # halo mask
                pl.BlockSpec((1, Cp), const2),                    # bn1 scale
                pl.BlockSpec((1, Cp), const2),                    # bn1 bias
                pl.BlockSpec((Cp, Pp), const2),                   # conv1 W
                pl.BlockSpec((1, Pp), const2),                    # bn2 scale
                pl.BlockSpec((1, Pp), const2),                    # bn2 bias
                pl.BlockSpec((9 * Pp, Pp), const2),               # conv2 W (im2col)
                pl.BlockSpec((1, Pp), const2),                    # bn3 scale
                pl.BlockSpec((1, Pp), const2),                    # bn3 bias
                pl.BlockSpec((Pp, Op), const2),                   # conv3 W
                pl.BlockSpec((1, Op), const2),                    # bn4 scale
                pl.BlockSpec((1, Op), const2),                    # bn4 bias
                pl.BlockSpec((Cp, Op), const2),                   # shortcut W
            ],
            out_specs=pl.BlockSpec((1, R, Op), lambda n: (n, 0, 0)),
        ),
        compiler_params=pltpu.CompilerParams(
            dimension_semantics=("parallel",),        # batch images independent
            vmem_limit_bytes=32 * 1024 * 1024),
    )(*args)

    # (N, R, Op) -> crop halo / channel padding -> NCHW
    out = out_rows[:, :HWp, :cout].reshape(N, Hp, Wp, cout)[:, 1:-1, 1:-1, :]
    return jnp.transpose(out, (0, 3, 1, 2))


# ----------------------------- parameters -----------------------------

def init_params(key, in_planes, planes):
    cout = planes * WIDEN_FACTOR
    ks = jax.random.split(key, 8)

    def bn_params(k, c):
        k1, k2, k3, k4 = jax.random.split(k, 4)
        gamma = jax.random.uniform(k1, (c,), jnp.float32, 0.5, 1.5)
        beta = jax.random.normal(k2, (c,), jnp.float32) * 0.1
        mean = jax.random.normal(k3, (c,), jnp.float32) * 0.1
        var = jax.random.uniform(k4, (c,), jnp.float32, 0.5, 1.5)
        scale = gamma / jnp.sqrt(var + BN_EPS)
        bias = beta - mean * scale
        return scale, bias

    s1, b1 = bn_params(ks[0], in_planes)
    s2, b2 = bn_params(ks[1], planes)
    s3, b3 = bn_params(ks[2], planes)
    s4, b4 = bn_params(ks[3], cout)

    # PyTorch conv weight layout (out, in, kh, kw), bias=False everywhere.
    w1_pt = jax.random.normal(ks[4], (planes, in_planes, 1, 1), jnp.float32) * 0.3
    w2_pt = jax.random.normal(ks[5], (planes, planes, 3, 3), jnp.float32) * 0.2
    w3_pt = jax.random.normal(ks[6], (cout, planes, 1, 1), jnp.float32) * 0.3
    wsc_pt = jax.random.normal(ks[7], (cout, in_planes, 1, 1), jnp.float32) * 0.3
    return dict(s1=s1, b1=b1, s2=s2, b2=b2, s3=s3, b3=b3, s4=s4, b4=b4,
                w1_pt=w1_pt, w2_pt=w2_pt, w3_pt=w3_pt, wsc_pt=wsc_pt)


# ----------------------------- plain-JAX reference -----------------------------

def _conv2d_nchw(x, w, stride=1, padding=0):
    return lax.conv_general_dilated(
        x, w, (stride, stride), [(padding, padding), (padding, padding)],
        dimension_numbers=("NCHW", "OIHW", "NCHW"))


def preact_bottleneck_reference(x, params, *, stride=1):
    def aff(v, s, b):
        return v * s[None, :, None, None] + b[None, :, None, None]

    out = aff(x, params["s1"], params["b1"])                       # bn1
    shortcut = _conv2d_nchw(out, params["wsc_pt"], stride=stride)  # shortcut
    out = _conv2d_nchw(out, params["w1_pt"])                       # conv1
    out = jax.nn.relu(aff(out, params["s2"], params["b2"]))        # bn2 + relu
    out = _conv2d_nchw(out, params["w2_pt"], stride=stride, padding=1)  # conv2
    out = jax.nn.relu(aff(out, params["s3"], params["b3"]))        # bn3 + relu
    out = _conv2d_nchw(out, params["w3_pt"])                       # conv3
    out = aff(out, params["s4"], params["b4"])                     # bn4
    # self.se: undefined in __init__ -> identity (see TODO in kernel)
    return out + shortcut


# ----------------------------- demo -----------------------------

if __name__ == "__main__":
    key = jax.random.PRNGKey(0)
    k_x, k_p = jax.random.split(key)

    # in_planes != 4*planes -> shortcut conv active (matches PyTorch condition).
    N, in_planes, planes, H, W = 2, 4, 4, 16, 16
    x = jax.random.normal(k_x, (N, in_planes, H, W), jnp.float32)
    params = init_params(k_p, in_planes, planes)

    out = preact_bottleneck_pallas(x, params, stride=1)
    out = jax.block_until_ready(out)

    ref = preact_bottleneck_reference(x, params, stride=1)
    assert out.shape == (N, planes * WIDEN_FACTOR, H, W)
    max_err = float(jnp.max(jnp.abs(out - ref)))
    ref_scale = float(jnp.max(jnp.abs(ref)))
    tol = 1e-2 + 2e-2 * ref_scale        # bf16 MXU operands, f32 accumulation
    if max_err > tol:
        raise AssertionError(f"mismatch vs reference: max abs err {max_err} (tol {tol})")
    print("KERNEL_OK")
</pallas_src>

<mosaic_0001>
module attributes {stable_mosaic.version = 11 : i64} {
  func.func @_bottleneck_kernel(%arg0: i32, %arg1: memref<1x328x128xf32, #tpu.memory_space<vmem>>, %arg2: memref<328x1xf32, #tpu.memory_space<vmem>>, %arg3: memref<1x128xf32, #tpu.memory_space<vmem>>, %arg4: memref<1x128xf32, #tpu.memory_space<vmem>>, %arg5: memref<128x128xbf16, #tpu.memory_space<vmem>>, %arg6: memref<1x128xf32, #tpu.memory_space<vmem>>, %arg7: memref<1x128xf32, #tpu.memory_space<vmem>>, %arg8: memref<1152x128xbf16, #tpu.memory_space<vmem>>, %arg9: memref<1x128xf32, #tpu.memory_space<vmem>>, %arg10: memref<1x128xf32, #tpu.memory_space<vmem>>, %arg11: memref<128x128xbf16, #tpu.memory_space<vmem>>, %arg12: memref<1x128xf32, #tpu.memory_space<vmem>>, %arg13: memref<1x128xf32, #tpu.memory_space<vmem>>, %arg14: memref<128x128xbf16, #tpu.memory_space<vmem>>, %arg15: memref<1x328x128xf32, #tpu.memory_space<vmem>>) attributes {dimension_semantics = [#tpu.dimension_semantics<parallel>], iteration_bounds = array<i64: 2>, scalar_prefetch = 0 : i64, scratch_operands = 0 : i64, tpu.core_type = #tpu.core_type<tc>, window_params = [{transform_indices = @transform_0, window_bounds = array<i64: 1, 328, 128>}, {pipeline_mode = #tpu.pipeline_mode<synchronous>, transform_indices = @transform_1, window_bounds = array<i64: 328, 1>}, {pipeline_mode = #tpu.pipeline_mode<synchronous>, transform_indices = @transform_2, window_bounds = array<i64: 1, 128>}, {pipeline_mode = #tpu.pipeline_mode<synchronous>, transform_indices = @transform_3, window_bounds = array<i64: 1, 128>}, {pipeline_mode = #tpu.pipeline_mode<synchronous>, transform_indices = @transform_4, window_bounds = array<i64: 128, 128>}, {pipeline_mode = #tpu.pipeline_mode<synchronous>, transform_indices = @transform_5, window_bounds = array<i64: 1, 128>}, {pipeline_mode = #tpu.pipeline_mode<synchronous>, transform_indices = @transform_6, window_bounds = array<i64: 1, 128>}, {pipeline_mode = #tpu.pipeline_mode<synchronous>, transform_indices = @transform_7, window_bounds = array<i64: 1152, 128>}, {pipeline_mode = #tpu.pipeline_mode<synchronous>, transform_indices = @transform_8, window_bounds = array<i64: 1, 128>}, {pipeline_mode = #tpu.pipeline_mode<synchronous>, transform_indices = @transform_9, window_bounds = array<i64: 1, 128>}, {pipeline_mode = #tpu.pipeline_mode<synchronous>, transform_indices = @transform_10, window_bounds = array<i64: 128, 128>}, {pipeline_mode = #tpu.pipeline_mode<synchronous>, transform_indices = @transform_11, window_bounds = array<i64: 1, 128>}, {pipeline_mode = #tpu.pipeline_mode<synchronous>, transform_indices = @transform_12, window_bounds = array<i64: 1, 128>}, {pipeline_mode = #tpu.pipeline_mode<synchronous>, transform_indices = @transform_13, window_bounds = array<i64: 128, 128>}, {transform_indices = @transform_14, window_bounds = array<i64: 1, 328, 128>}]} {
    %c0 = arith.constant 0 : index
    %c0_0 = arith.constant 0 : index
    %c0_1 = arith.constant 0 : index
    %0 = vector.load %arg1[%c0, %c0_0, %c0_1] : memref<1x328x128xf32, #tpu.memory_space<vmem>>, vector<1x328x128xf32>
    %1 = vector.shape_cast %0 : vector<1x328x128xf32> to vector<328x128xf32>
    %c0_2 = arith.constant 0 : index
    %c0_3 = arith.constant 0 : index
    %2 = vector.load %arg3[%c0_2, %c0_3] : memref<1x128xf32, #tpu.memory_space<vmem>>, vector<1x128xf32>
    %3 = vector.broadcast %2 : vector<1x128xf32> to vector<328x128xf32>
    %4 = arith.mulf %1, %3 : vector<328x128xf32>
    %c0_4 = arith.constant 0 : index
    %c0_5 = arith.constant 0 : index
    %5 = vector.load %arg4[%c0_4, %c0_5] : memref<1x128xf32, #tpu.memory_space<vmem>>, vector<1x128xf32>
    %6 = vector.broadcast %5 : vector<1x128xf32> to vector<328x128xf32>
    %7 = arith.addf %4, %6 : vector<328x128xf32>
    %8 = arith.truncf %7 : vector<328x128xf32> to vector<328x128xbf16>
    %c0_6 = arith.constant 0 : index
    %c0_7 = arith.constant 0 : index
    %9 = vector.load %arg5[%c0_6, %c0_7] : memref<128x128xbf16, #tpu.memory_space<vmem>>, vector<128x128xbf16>
    %cst = arith.constant dense<0.000000e+00> : vector<328x128xf32>
    %10 = tpu.matmul %8, %9, %cst {dimension_numbers = #tpu.dot_dimension_numbers<[1], [0], [0], [1], [0, 0, 1, 1], [], []>} : vector<328x128xbf16>, vector<128x128xbf16>, vector<328x128xf32> -> vector<328x128xf32>
    %c0_8 = arith.constant 0 : index
    %c0_9 = arith.constant 0 : index
    %11 = vector.load %arg6[%c0_8, %c0_9] : memref<1x128xf32, #tpu.memory_space<vmem>>, vector<1x128xf32>
    %12 = vector.broadcast %11 : vector<1x128xf32> to vector<328x128xf32>
    %13 = arith.mulf %10, %12 : vector<328x128xf32>
    %c0_10 = arith.constant 0 : index
    %c0_11 = arith.constant 0 : index
    %14 = vector.load %arg7[%c0_10, %c0_11] : memref<1x128xf32, #tpu.memory_space<vmem>>, vector<1x128xf32>
    %15 = vector.broadcast %14 : vector<1x128xf32> to vector<328x128xf32>
    %16 = arith.addf %13, %15 : vector<328x128xf32>
    %cst_12 = arith.constant 0.000000e+00 : f32
    %17 = vector.broadcast %cst_12 : f32 to vector<328x128xf32>
    %18 = arith.maximumf %16, %17 : vector<328x128xf32>
    %c0_13 = arith.constant 0 : index
    %c0_14 = arith.constant 0 : index
    %19 = vector.load %arg2[%c0_13, %c0_14] : memref<328x1xf32, #tpu.memory_space<vmem>>, vector<328x1xf32>
    %20 = vector.broadcast %19 : vector<328x1xf32> to vector<328x128xf32>
    %21 = arith.mulf %18, %20 : vector<328x128xf32>
    %c19_i32 = arith.constant 19 : i32
    %22 = tpu.dynamic_rotate %21 by %c19_i32 dim 0 : vector<328x128xf32>, i32 -> vector<328x128xf32>
    %c18_i32 = arith.constant 18 : i32
    %23 = tpu.dynamic_rotate %21 by %c18_i32 dim 0 : vector<328x128xf32>, i32 -> vector<328x128xf32>
    %c17_i32 = arith.constant 17 : i32
    %24 = tpu.dynamic_rotate %21 by %c17_i32 dim 0 : vector<328x128xf32>, i32 -> vector<328x128xf32>
    %c1_i32 = arith.constant 1 : i32
    %25 = tpu.dynamic_rotate %21 by %c1_i32 dim 0 : vector<328x128xf32>, i32 -> vector<328x128xf32>
    %c0_i32 = arith.constant 0 : i32
    %26 = tpu.dynamic_rotate %21 by %c0_i32 dim 0 : vector<328x128xf32>, i32 -> vector<328x128xf32>
    %c327_i32 = arith.constant 327 : i32
    %27 = tpu.dynamic_rotate %21 by %c327_i32 dim 0 : vector<328x128xf32>, i32 -> vector<328x128xf32>
    %c311_i32 = arith.constant 311 : i32
    %28 = tpu.dynamic_rotate %21 by %c311_i32 dim 0 : vector<328x128xf32>, i32 -> vector<328x128xf32>
    %c310_i32 = arith.constant 310 : i32
    %29 = tpu.dynamic_rotate %21 by %c310_i32 dim 0 : vector<328x128xf32>, i32 -> vector<328x128xf32>
    %c309_i32 = arith.constant 309 : i32
    %30 = tpu.dynamic_rotate %21 by %c309_i32 dim 0 : vector<328x128xf32>, i32 -> vector<328x128xf32>
    %31 = tpu.concatenate %22, %23, %24, %25, %26, %27, %28, %29, %30 in 1 : vector<328x128xf32>, vector<328x128xf32>, vector<328x128xf32>, vector<328x128xf32>, vector<328x128xf32>, vector<328x128xf32>, vector<328x128xf32>, vector<328x128xf32>, vector<328x128xf32> -> vector<328x1152xf32>
    %32 = arith.truncf %31 : vector<328x1152xf32> to vector<328x1152xbf16>
    %c0_15 = arith.constant 0 : index
    %c0_16 = arith.constant 0 : index
    %33 = vector.load %arg8[%c0_15, %c0_16] : memref<1152x128xbf16, #tpu.memory_space<vmem>>, vector<1152x128xbf16>
    %cst_17 = arith.constant dense<0.000000e+00> : vector<328x128xf32>
    %34 = tpu.matmul %32, %33, %cst_17 {dimension_numbers = #tpu.dot_dimension_numbers<[1], [0], [0], [1], [0, 0, 1, 1], [], []>} : vector<328x1152xbf16>, vector<1152x128xbf16>, vector<328x128xf32> -> vector<328x128xf32>
    %c0_18 = arith.constant 0 : index
    %c0_19 = arith.constant 0 : index
    %35 = vector.load %arg9[%c0_18, %c0_19] : memref<1x128xf32, #tpu.memory_space<vmem>>, vector<1x128xf32>
    %36 = vector.broadcast %35 : vector<1x128xf32> to vector<328x128xf32>
    %37 = arith.mulf %34, %36 : vector<328x128xf32>
    %c0_20 = arith.constant 0 : index
    %c0_21 = arith.constant 0 : index
    %38 = vector.load %arg10[%c0_20, %c0_21] : memref<1x128xf32, #tpu.memory_space<vmem>>, vector<1x128xf32>
    %39 = vector.broadcast %38 : vector<1x128xf32> to vector<328x128xf32>
    %40 = arith.addf %37, %39 : vector<328x128xf32>
    %cst_22 = arith.constant 0.000000e+00 : f32
    %41 = vector.broadcast %cst_22 : f32 to vector<328x128xf32>
    %42 = arith.maximumf %40, %41 : vector<328x128xf32>
    %43 = arith.truncf %42 : vector<328x128xf32> to vector<328x128xbf16>
    %c0_23 = arith.constant 0 : index
    %c0_24 = arith.constant 0 : index
    %44 = vector.load %arg11[%c0_23, %c0_24] : memref<128x128xbf16, #tpu.memory_space<vmem>>, vector<128x128xbf16>
    %cst_25 = arith.constant dense<0.000000e+00> : vector<328x128xf32>
    %45 = tpu.matmul %43, %44, %cst_25 {dimension_numbers = #tpu.dot_dimension_numbers<[1], [0], [0], [1], [0, 0, 1, 1], [], []>} : vector<328x128xbf16>, vector<128x128xbf16>, vector<328x128xf32> -> vector<328x128xf32>
    %c0_26 = arith.constant 0 : index
    %c0_27 = arith.constant 0 : index
    %46 = vector.load %arg12[%c0_26, %c0_27] : memref<1x128xf32, #tpu.memory_space<vmem>>, vector<1x128xf32>
    %47 = vector.broadcast %46 : vector<1x128xf32> to vector<328x128xf32>
    %48 = arith.mulf %45, %47 : vector<328x128xf32>
    %c0_28 = arith.constant 0 : index
    %c0_29 = arith.constant 0 : index
    %49 = vector.load %arg13[%c0_28, %c0_29] : memref<1x128xf32, #tpu.memory_space<vmem>>, vector<1x128xf32>
    %50 = vector.broadcast %49 : vector<1x128xf32> to vector<328x128xf32>
    %51 = arith.addf %48, %50 : vector<328x128xf32>
    %c0_30 = arith.constant 0 : index
    %c0_31 = arith.constant 0 : index
    %52 = vector.load %arg14[%c0_30, %c0_31] : memref<128x128xbf16, #tpu.memory_space<vmem>>, vector<128x128xbf16>
    %cst_32 = arith.constant dense<0.000000e+00> : vector<328x128xf32>
    %53 = tpu.matmul %8, %52, %cst_32 {dimension_numbers = #tpu.dot_dimension_numbers<[1], [0], [0], [1], [0, 0, 1, 1], [], []>} : vector<328x128xbf16>, vector<128x128xbf16>, vector<328x128xf32> -> vector<328x128xf32>
    %54 = arith.addf %51, %53 : vector<328x128xf32>
    %c0_33 = arith.constant 0 : index
    %c0_34 = arith.constant 0 : index
    %c0_35 = arith.constant 0 : index
    %55 = vector.load %arg15[%c0_33, %c0_34, %c0_35] : memref<1x328x128xf32, #tpu.memory_space<vmem>>, vector<1x328x128xf32>
    %56 = vector.shape_cast %55 : vector<1x328x128xf32> to vector<328x128xf32>
    %57 = vector.shape_cast %54 : vector<328x128xf32> to vector<1x328x128xf32>
    tpu.vector_store %arg15[%c0_33, %c0_34, %c0_35], %57 {strides = array<i32>} : memref<1x328x128xf32, #tpu.memory_space<vmem>>, vector<1x328x128xf32>,
    return
  }
  func.func @transform_0(%arg0: i32) -> (i32, i32, i32) {
    %c0_i32 = arith.constant 0 : i32
    %c0_i32_0 = arith.constant 0 : i32
    %c0_i32_1 = arith.constant 0 : i32
    return %arg0, %c0_i32, %c0_i32_0 : i32, i32, i32
  }
  func.func @transform_1(%arg0: i32) -> (i32, i32) {
    %c0_i32 = arith.constant 0 : i32
    %c0_i32_0 = arith.constant 0 : i32
    %c0_i32_1 = arith.constant 0 : i32
    return %c0_i32, %c0_i32_0 : i32, i32
  }
  func.func @transform_2(%arg0: i32) -> (i32, i32) {
    %c0_i32 = arith.constant 0 : i32
    %c0_i32_0 = arith.constant 0 : i32
    %c0_i32_1 = arith.constant 0 : i32
    return %c0_i32, %c0_i32_0 : i32, i32
  }
  func.func @transform_3(%arg0: i32) -> (i32, i32) {
    %c0_i32 = arith.constant 0 : i32
    %c0_i32_0 = arith.constant 0 : i32
    %c0_i32_1 = arith.constant 0 : i32
    return %c0_i32, %c0_i32_0 : i32, i32
  }
  func.func @transform_4(%arg0: i32) -> (i32, i32) {
    %c0_i32 = arith.constant 0 : i32
    %c0_i32_0 = arith.constant 0 : i32
    %c0_i32_1 = arith.constant 0 : i32
    return %c0_i32, %c0_i32_0 : i32, i32
  }
  func.func @transform_5(%arg0: i32) -> (i32, i32) {
    %c0_i32 = arith.constant 0 : i32
    %c0_i32_0 = arith.constant 0 : i32
    %c0_i32_1 = arith.constant 0 : i32
    return %c0_i32, %c0_i32_0 : i32, i32
  }
  func.func @transform_6(%arg0: i32) -> (i32, i32) {
    %c0_i32 = arith.constant 0 : i32
    %c0_i32_0 = arith.constant 0 : i32
    %c0_i32_1 = arith.constant 0 : i32
    return %c0_i32, %c0_i32_0 : i32, i32
  }
  func.func @transform_7(%arg0: i32) -> (i32, i32) {
    %c0_i32 = arith.constant 0 : i32
    %c0_i32_0 = arith.constant 0 : i32
    %c0_i32_1 = arith.constant 0 : i32
    return %c0_i32, %c0_i32_0 : i32, i32
  }
  func.func @transform_8(%arg0: i32) -> (i32, i32) {
    %c0_i32 = arith.constant 0 : i32
    %c0_i32_0 = arith.constant 0 : i32
    %c0_i32_1 = arith.constant 0 : i32
    return %c0_i32, %c0_i32_0 : i32, i32
  }
  func.func @transform_9(%arg0: i32) -> (i32, i32) {
    %c0_i32 = arith.constant 0 : i32
    %c0_i32_0 = arith.constant 0 : i32
    %c0_i32_1 = arith.constant 0 : i32
    return %c0_i32, %c0_i32_0 : i32, i32
  }
  func.func @transform_10(%arg0: i32) -> (i32, i32) {
    %c0_i32 = arith.constant 0 : i32
    %c0_i32_0 = arith.constant 0 : i32
    %c0_i32_1 = arith.constant 0 : i32
    return %c0_i32, %c0_i32_0 : i32, i32
  }
  func.func @transform_11(%arg0: i32) -> (i32, i32) {
    %c0_i32 = arith.constant 0 : i32
    %c0_i32_0 = arith.constant 0 : i32
    %c0_i32_1 = arith.constant 0 : i32
    return %c0_i32, %c0_i32_0 : i32, i32
  }
  func.func @transform_12(%arg0: i32) -> (i32, i32) {
    %c0_i32 = arith.constant 0 : i32
    %c0_i32_0 = arith.constant 0 : i32
    %c0_i32_1 = arith.constant 0 : i32
    return %c0_i32, %c0_i32_0 : i32, i32
  }
  func.func @transform_13(%arg0: i32) -> (i32, i32) {
    %c0_i32 = arith.constant 0 : i32
    %c0_i32_0 = arith.constant 0 : i32
    %c0_i32_1 = arith.constant 0 : i32
    return %c0_i32, %c0_i32_0 : i32, i32
  }
  func.func @transform_14(%arg0: i32) -> (i32, i32, i32) {
    %c0_i32 = arith.constant 0 : i32
    %c0_i32_0 = arith.constant 0 : i32
    %c0_i32_1 = arith.constant 0 : i32
    return %arg0, %c0_i32, %c0_i32_0 : i32, i32, i32
  }
}

</mosaic_0001>

<llo_original>
// kernel: tpu_custom_call.1
$region0: #{tpu_custom_call.1}
  #allocation0 [shape = 'u32[]', space=smem, size = 0x4, offset = 0x4, fixed_abs, tag = 'smem constant byte address 0x4 - core index']
  #allocation1 [shape = 'u32[144,128]{1,0:T(1,128)}', space=vmem, size = 0x12000, scoped, tag = 'internal scratch']
  %s0 = inlined_call_operand.hbm [shape: f32[2,328,128], index: 0, kind: input, shape index: {}]
  %s1 = inlined_call_operand.vmem [shape: f32[328,1], index: 1, kind: input, shape index: {}]
  %s2 = inlined_call_operand.vmem [shape: f32[1,128], index: 2, kind: input, shape index: {}]
  %s3 = inlined_call_operand.vmem [shape: f32[1,128], index: 3, kind: input, shape index: {}]
  %s4 = inlined_call_operand.vmem [shape: bf16[128,128], index: 4, kind: input, shape index: {}]
  %s5 = inlined_call_operand.vmem [shape: f32[1,128], index: 5, kind: input, shape index: {}]
  %s6 = inlined_call_operand.vmem [shape: f32[1,128], index: 6, kind: input, shape index: {}]
  %s7 = inlined_call_operand.hbm [shape: bf16[1152,128], index: 7, kind: input, shape index: {}]
  %s8 = inlined_call_operand.vmem [shape: f32[1,128], index: 8, kind: input, shape index: {}]
  %s9 = inlined_call_operand.vmem [shape: f32[1,128], index: 9, kind: input, shape index: {}]
  %s10 = inlined_call_operand.vmem [shape: bf16[128,128], index: 10, kind: input, shape index: {}]
  %s11 = inlined_call_operand.vmem [shape: f32[1,128], index: 11, kind: input, shape index: {}]
  %s12 = inlined_call_operand.vmem [shape: f32[1,128], index: 12, kind: input, shape index: {}]
  %s13 = inlined_call_operand.vmem [shape: bf16[128,128], index: 13, kind: input, shape index: {}]
  %s14 = inlined_call_operand.hbm [shape: f32[2,328,128], index: 14, kind: output, shape index: {}]
  %s15 = sld [smem:[#allocation0]]
  $region97: #{tpu_custom_call.1} parent=0
    _
  %s17 = ssub.s32 1, %s15
  %s18 = scalar_select 0, %s17, %s15
  $region1: #{tpu_custom_call.1} parent=0
    #allocation2 [shape = 'u8[335872]{0}', space=vmem, size = 0x52000, scoped, tag = 'input window, operand 0']
    #allocation3 [shape = 's32[2]{0}', space=sflag, size = 0x8, scoped, tag = 'scoped memory for tpu_custom_call.1']
    #allocation4 [shape = 's32[2]{0}', space=sflag, size = 0x8, scoped, tag = 'scoped memory for tpu_custom_call.1']
    #allocation5 [shape = 'u8[294912]{0}', space=vmem, size = 0x48000, scoped, tag = 'input window, operand 7, single buffered']
    #allocation6 [shape = 's32[1]{0}', space=sflag, size = 0x4, scoped, tag = 'scoped memory for tpu_custom_call.1']
    #allocation7 [shape = 'u8[335872]{0}', space=vmem, size = 0x52000, scoped, tag = 'output window, operand 0']
    %19 = vsyncpa [#allocation3], 0
    %s20 = scalar_lea.sflag [#allocation3], 1
    %21 = vsyncpa %s20, 0
    %22 = vsyncpa [#allocation6], 0
    %23 = vsyncpa [#allocation4], 0
    %s24 = scalar_lea.sflag [#allocation4], 1
    %25 = vsyncpa %s24, 0
    loop: start=0, step=1, limit=4
    $region2: #{tpu_custom_call.1} parent=1 // loop_pre_header
      _
    $region3: #{tpu_custom_call.1} parent=1 // loop_header
      %s27 = sphi 0, %s31
      %p28 = scmp.ge.s32.totalorder %s27, 4
      %s37 = sphi 0, %s39
      %s40 = sphi 0, %s37
      %s41 = sphi 0, %s40
      %s57 = sphi 0, %s41
      %s61 = sphi 0, %s61
      %s63 = sphi 0, %s61
      %s64 = sphi 0, %s63
      %s78 = sphi 0, %s64
      %s82 = sphi 0, %s82
      %s84 = sphi 0, %s82
      %s85 = sphi 0, %s84
      %s99 = sphi 0, %s85
      %s103 = sphi 0, %s103
      %s105 = sphi 0, %s103
      %s106 = sphi 0, %s105
      %s120 = sphi 0, %s106
      %s124 = sphi 0, %s124
      %s126 = sphi 0, %s124
      %s127 = sphi 0, %s126
      %s141 = sphi 0, %s127
      %s145 = sphi 0, %s145
      %s147 = sphi 0, %s145
      %s148 = sphi 0, %s147
      %s162 = sphi 0, %s148
      %s166 = sphi 0, %s166
      %s168 = sphi 0, %s166
      %s169 = sphi 0, %s168
      %s183 = sphi 0, %s169
      %s187 = sphi 0, %s187
      %s189 = sphi 0, %s187
      %s190 = sphi 0, %s189
      %s204 = sphi 0, %s190
      %s208 = sphi 0, %s208
      %s210 = sphi 0, %s208
      %s211 = sphi 0, %s210
      %s225 = sphi 0, %s211
      %s229 = sphi 0, %s229
      %s231 = sphi 0, %s229
      %s232 = sphi 0, %s231
      %s246 = sphi 0, %s232
      %s250 = sphi 0, %s250
      %s252 = sphi 0, %s250
      %s253 = sphi 0, %s252
      %s267 = sphi 0, %s253
      %s271 = sphi 0, %s271
      %s273 = sphi 0, %s271
      %s274 = sphi 0, %s273
      %s288 = sphi 0, %s274
      %s292 = sphi 0, %s292
      %s294 = sphi 0, %s292
      %s295 = sphi 0, %s294
      %s309 = sphi 0, %s295
      %s313 = sphi 0, %s313
      %s315 = sphi 0, %s313
      %s316 = sphi 0, %s315
      %s330 = sphi 0, %s316
      %s336 = sphi 0, %s338
      %s339 = sphi 0, %s336
      %s340 = sphi 0, %s339
      %s356 = sphi 0, %s340
    $region4: #{tpu_custom_call.1} parent=1 // loop_header_branch
      %30 = sbr.rel (%p28) target = $region8
    $region5: #{tpu_custom_call.1} parent=1 // loop_body
      %s32 = ssub.s32 %s27, 1
      %s33 = ssub.s32 %s27, 2
      %s34 = sadd.s32 %s27, 1
      %s35 = ssub.s32 %s27, %s34
      %p36 = scmp.eq.s32.totalorder %s35, 0
      %s38 = sadd.s32 %s37, 1
      %s39 = scalar_select %p36, %s37, %s38
      %p42 = pneg %p36
      %p43 = scmp.eq.s32.totalorder %s27, 1
      %p44 = por %p42, %p43
      %p45 = scmp.ne.s32.totalorder %s37, %s40
      %p46 = scmp.eq.s32.totalorder %s27, 0
      %p47 = por %p45, %p46
      %p48 = scmp.ne.s32.totalorder %s37, %s40
      %p49 = scmp.eq.s32.totalorder %s32, 1
      %p50 = por %p48, %p49
      %p51 = scmp.ne.s32.totalorder %s40, %s41
      %p52 = scmp.eq.s32.totalorder %s32, 0
      %p53 = por %p51, %p52
      %p54 = scmp.ne.s32.totalorder %s40, %s41
      %p55 = scmp.eq.s32.totalorder %s33, 1
      %p56 = por %p54, %p55
      %p58 = scmp.ne.s32.totalorder %s41, %s57
      %p59 = scmp.eq.s32.totalorder %s33, 0
      %p60 = por %p58, %p59
      %s62 = sadd.s32 %s61, 1
      %p65 = scmp.eq.s32.totalorder %s27, 1
      %p66 = scmp.ne.s32.totalorder %s61, %s63
      %p67 = scmp.eq.s32.totalorder %s27, 0
      %p68 = por %p66, %p67
      %p69 = scmp.ne.s32.totalorder %s61, %s63
      %p70 = scmp.eq.s32.totalorder %s32, 1
      %p71 = por %p69, %p70
      %p72 = scmp.ne.s32.totalorder %s63, %s64
      %p73 = scmp.eq.s32.totalorder %s32, 0
      %p74 = por %p72, %p73
      %p75 = scmp.ne.s32.totalorder %s63, %s64
      %p76 = scmp.eq.s32.totalorder %s33, 1
      %p77 = por %p75, %p76
      %p79 = scmp.ne.s32.totalorder %s64, %s78
      %p80 = scmp.eq.s32.totalorder %s33, 0
      %p81 = por %p79, %p80
      %s83 = sadd.s32 %s82, 1
      %p86 = scmp.eq.s32.totalorder %s27, 1
      %p87 = scmp.ne.s32.totalorder %s82, %s84
      %p88 = scmp.eq.s32.totalorder %s27, 0
      %p89 = por %p87, %p88
      %p90 = scmp.ne.s32.totalorder %s82, %s84
      %p91 = scmp.eq.s32.totalorder %s32, 1
      %p92 = por %p90, %p91
      %p93 = scmp.ne.s32.totalorder %s84, %s85
      %p94 = scmp.eq.s32.totalorder %s32, 0
      %p95 = por %p93, %p94
      %p96 = scmp.ne.s32.totalorder %s84, %s85
      %p97 = scmp.eq.s32.totalorder %s33, 1
      %p98 = por %p96, %p97
      %p100 = scmp.ne.s32.totalorder %s85, %s99
      %p101 = scmp.eq.s32.totalorder %s33, 0
      %p102 = por %p100, %p101
      %s104 = sadd.s32 %s103, 1
      %p107 = scmp.eq.s32.totalorder %s27, 1
      %p108 = scmp.ne.s32.totalorder %s103, %s105
      %p109 = scmp.eq.s32.totalorder %s27, 0
      %p110 = por %p108, %p109
      %p111 = scmp.ne.s32.totalorder %s103, %s105
      %p112 = scmp.eq.s32.totalorder %s32, 1
      %p113 = por %p111, %p112
      %p114 = scmp.ne.s32.totalorder %s105, %s106
      %p115 = scmp.eq.s32.totalorder %s32, 0
      %p116 = por %p114, %p115
      %p117 = scmp.ne.s32.totalorder %s105, %s106
      %p118 = scmp.eq.s32.totalorder %s33, 1
      %p119 = por %p117, %p118
      %p121 = scmp.ne.s32.totalorder %s106, %s120
      %p122 = scmp.eq.s32.totalorder %s33, 0
      %p123 = por %p121, %p122
      %s125 = sadd.s32 %s124, 1
      %p128 = scmp.eq.s32.totalorder %s27, 1
      %p129 = scmp.ne.s32.totalorder %s124, %s126
      %p130 = scmp.eq.s32.totalorder %s27, 0
      %p131 = por %p129, %p130
      %p132 = scmp.ne.s32.totalorder %s124, %s126
      %p133 = scmp.eq.s32.totalorder %s32, 1
      %p134 = por %p132, %p133
      %p135 = scmp.ne.s32.totalorder %s126, %s127
      %p136 = scmp.eq.s32.totalorder %s32, 0
      %p137 = por %p135, %p136
      %p138 = scmp.ne.s32.totalorder %s126, %s127
      %p139 = scmp.eq.s32.totalorder %s33, 1
      %p140 = por %p138, %p139
      %p142 = scmp.ne.s32.totalorder %s127, %s141
      %p143 = scmp.eq.s32.totalorder %s33, 0
      %p144 = por %p142, %p143
      %s146 = sadd.s32 %s145, 1
      %p149 = scmp.eq.s32.totalorder %s27, 1
      %p150 = scmp.ne.s32.totalorder %s145, %s147
      %p151 = scmp.eq.s32.totalorder %s27, 0
      %p152 = por %p150, %p151
      %p153 = scmp.ne.s32.totalorder %s145, %s147
      %p154 = scmp.eq.s32.totalorder %s32, 1
      %p155 = por %p153, %p154
      %p156 = scmp.ne.s32.totalorder %s147, %s148
      %p157 = scmp.eq.s32.totalorder %s32, 0
      %p158 = por %p156, %p157
      %p159 = scmp.ne.s32.totalorder %s147, %s148
      %p160 = scmp.eq.s32.totalorder %s33, 1
      %p161 = por %p159, %p160
      %p163 = scmp.ne.s32.totalorder %s148, %s162
      %p164 = scmp.eq.s32.totalorder %s33, 0
      %p165 = por %p163, %p164
      %s167 = sadd.s32 %s166, 1
      %p170 = scmp.eq.s32.totalorder %s27, 1
      %p171 = scmp.ne.s32.totalorder %s166, %s168
      %p172 = scmp.eq.s32.totalorder %s27, 0
      %p173 = por %p171, %p172
      %p174 = scmp.ne.s32.totalorder %s166, %s168
      %p175 = scmp.eq.s32.totalorder %s32, 1
      %p176 = por %p174, %p175
      %p177 = scmp.ne.s32.totalorder %s168, %s169
      %p178 = scmp.eq.s32.totalorder %s32, 0
      %p179 = por %p177, %p178
      %p180 = scmp.ne.s32.totalorder %s168, %s169
      %p181 = scmp.eq.s32.totalorder %s33, 1
      %p182 = por %p180, %p181
      %p184 = scmp.ne.s32.totalorder %s169, %s183
      %p185 = scmp.eq.s32.totalorder %s33, 0
      %p186 = por %p184, %p185
      %s188 = sadd.s32 %s187, 1
      %p191 = scmp.eq.s32.totalorder %s27, 1
      %p192 = scmp.ne.s32.totalorder %s187, %s189
      %p193 = scmp.eq.s32.totalorder %s27, 0
      %p194 = por %p192, %p193
      %p195 = scmp.ne.s32.totalorder %s187, %s189
      %p196 = scmp.eq.s32.totalorder %s32, 1
      %p197 = por %p195, %p196
      %p198 = scmp.ne.s32.totalorder %s189, %s190
      %p199 = scmp.eq.s32.totalorder %s32, 0
      %p200 = por %p198, %p199
      %p201 = scmp.ne.s32.totalorder %s189, %s190
      %p202 = scmp.eq.s32.totalorder %s33, 1
      %p203 = por %p201, %p202
      %p205 = scmp.ne.s32.totalorder %s190, %s204
      %p206 = scmp.eq.s32.totalorder %s33, 0
      %p207 = por %p205, %p206
      %s209 = sadd.s32 %s208, 1
      %p212 = scmp.eq.s32.totalorder %s27, 1
      %p213 = scmp.ne.s32.totalorder %s208, %s210
      %p214 = scmp.eq.s32.totalorder %s27, 0
      %p215 = por %p213, %p214
      %p216 = scmp.ne.s32.totalorder %s208, %s210
      %p217 = scmp.eq.s32.totalorder %s32, 1
      %p218 = por %p216, %p217
      %p219 = scmp.ne.s32.totalorder %s210, %s211
      %p220 = scmp.eq.s32.totalorder %s32, 0
      %p221 = por %p219, %p220
      %p222 = scmp.ne.s32.totalorder %s210, %s211
      %p223 = scmp.eq.s32.totalorder %s33, 1
      %p224 = por %p222, %p223
      %p226 = scmp.ne.s32.totalorder %s211, %s225
      %p227 = scmp.eq.s32.totalorder %s33, 0
      %p228 = por %p226, %p227
      %s230 = sadd.s32 %s229, 1
      %p233 = scmp.eq.s32.totalorder %s27, 1
      %p234 = scmp.ne.s32.totalorder %s229, %s231
      %p235 = scmp.eq.s32.totalorder %s27, 0
      %p236 = por %p234, %p235
      %p237 = scmp.ne.s32.totalorder %s229, %s231
      %p238 = scmp.eq.s32.totalorder %s32, 1
      %p239 = por %p237, %p238
      %p240 = scmp.ne.s32.totalorder %s231, %s232
      %p241 = scmp.eq.s32.totalorder %s32, 0
      %p242 = por %p240, %p241
      %p243 = scmp.ne.s32.totalorder %s231, %s232
      %p244 = scmp.eq.s32.totalorder %s33, 1
      %p245 = por %p243, %p244
      %p247 = scmp.ne.s32.totalorder %s232, %s246
      %p248 = scmp.eq.s32.totalorder %s33, 0
      %p249 = por %p247, %p248
      %s251 = sadd.s32 %s250, 1
      %p254 = scmp.eq.s32.totalorder %s27, 1
      %p255 = scmp.ne.s32.totalorder %s250, %s252
      %p256 = scmp.eq.s32.totalorder %s27, 0
      %p257 = por %p255, %p256
      %p258 = scmp.ne.s32.totalorder %s250, %s252
      %p259 = scmp.eq.s32.totalorder %s32, 1
      %p260 = por %p258, %p259
      %p261 = scmp.ne.s32.totalorder %s252, %s253
      %p262 = scmp.eq.s32.totalorder %s32, 0
      %p263 = por %p261, %p262
      %p264 = scmp.ne.s32.totalorder %s252, %s253
      %p265 = scmp.eq.s32.totalorder %s33, 1
      %p266 = por %p264, %p265
      %p268 = scmp.ne.s32.totalorder %s253, %s267
      %p269 = scmp.eq.s32.totalorder %s33, 0
      %p270 = por %p268, %p269
      %s272 = sadd.s32 %s271, 1
      %p275 = scmp.eq.s32.totalorder %s27, 1
      %p276 = scmp.ne.s32.totalorder %s271, %s273
      %p277 = scmp.eq.s32.totalorder %s27, 0
      %p278 = por %p276, %p277
      %p279 = scmp.ne.s32.totalorder %s271, %s273
      %p280 = scmp.eq.s32.totalorder %s32, 1
      %p281 = por %p279, %p280
      %p282 = scmp.ne.s32.totalorder %s273, %s274
      %p283 = scmp.eq.s32.totalorder %s32, 0
      %p284 = por %p282, %p283
      %p285 = scmp.ne.s32.totalorder %s273, %s274
      %p286 = scmp.eq.s32.totalorder %s33, 1
      %p287 = por %p285, %p286
      %p289 = scmp.ne.s32.totalorder %s274, %s288
      %p290 = scmp.eq.s32.totalorder %s33, 0
      %p291 = por %p289, %p290
      %s293 = sadd.s32 %s292, 1
      %p296 = scmp.eq.s32.totalorder %s27, 1
      %p297 = scmp.ne.s32.totalorder %s292, %s294
      %p298 = scmp.eq.s32.totalorder %s27, 0
      %p299 = por %p297, %p298
      %p300 = scmp.ne.s32.totalorder %s292, %s294
      %p301 = scmp.eq.s32.totalorder %s32, 1
      %p302 = por %p300, %p301
      %p303 = scmp.ne.s32.totalorder %s294, %s295
      %p304 = scmp.eq.s32.totalorder %s32, 0
      %p305 = por %p303, %p304
      %p306 = scmp.ne.s32.totalorder %s294, %s295
      %p307 = scmp.eq.s32.totalorder %s33, 1
      %p308 = por %p306, %p307
      %p310 = scmp.ne.s32.totalorder %s295, %s309
      %p311 = scmp.eq.s32.totalorder %s33, 0
      %p312 = por %p310, %p311
      %s314 = sadd.s32 %s313, 1
      %p317 = scmp.eq.s32.totalorder %s27, 1
      %p318 = scmp.ne.s32.totalorder %s313, %s315
      %p319 = scmp.eq.s32.totalorder %s27, 0
      %p320 = por %p318, %p319
      %p321 = scmp.ne.s32.totalorder %s313, %s315
      %p322 = scmp.eq.s32.totalorder %s32, 1
      %p323 = por %p321, %p322
      %p324 = scmp.ne.s32.totalorder %s315, %s316
      %p325 = scmp.eq.s32.totalorder %s32, 0
      %p326 = por %p324, %p325
      %p327 = scmp.ne.s32.totalorder %s315, %s316
      %p328 = scmp.eq.s32.totalorder %s33, 1
      %p329 = por %p327, %p328
      %p331 = scmp.ne.s32.totalorder %s316, %s330
      %p332 = scmp.eq.s32.totalorder %s33, 0
      %p333 = por %p331, %p332
      %s334 = ssub.s32 %s27, %s34
      %p335 = scmp.eq.s32.totalorder %s334, 0
      %s337 = sadd.s32 %s336, 1
      %s338 = scalar_select %p335, %s336, %s337
      %p341 = pneg %p335
      %p342 = scmp.eq.s32.totalorder %s27, 1
      %p343 = por %p341, %p342
      %p344 = scmp.ne.s32.totalorder %s336, %s339
      %p345 = scmp.eq.s32.totalorder %s27, 0
      %p346 = por %p344, %p345
      %p347 = scmp.ne.s32.totalorder %s336, %s339
      %p348 = scmp.eq.s32.totalorder %s32, 1
      %p349 = por %p347, %p348
      %p350 = scmp.ne.s32.totalorder %s339, %s340
      %p351 = scmp.eq.s32.totalorder %s32, 0
      %p352 = por %p350, %p351
      %p353 = scmp.ne.s32.totalorder %s339, %s340
      %p354 = scmp.eq.s32.totalorder %s33, 1
      %p355 = por %p353, %p354
      %p357 = scmp.ne.s32.totalorder %s340, %s356
      %p358 = scmp.eq.s32.totalorder %s33, 0
      %p359 = por %p357, %p358
      %p360 = scmp.le.s32.totalorder 1, %s27
      %p361 = scmp.lt.s32.totalorder %s27, 3
      %p362 = pnand %p360, %p361
      %p363 = pneg %p362
      // Predicated region
      $region9: #{tpu_custom_call.1} parent=5 // pred_check
        _
      $region10: #{tpu_custom_call.1} parent=5 // pred_check_branch
        %365 = sbr.rel (%p362) target = $region12
      $region11: #{tpu_custom_call.1} parent=5 // pred_region
        %s366 = ssub.s32 %s27, 1
        // Predicated region
        $region13: #{tpu_custom_call.1} parent=11 // pred_check
          %p367 = pneg %p74
        $region14: #{tpu_custom_call.1} parent=11 // pred_check_branch
          %369 = sbr.rel (%p367) target = $region16
        $region15: #{tpu_custom_call.1} parent=11 // pred_region
          _
        $region16: #{tpu_custom_call.1} parent=11 // pred_fallthru
          _
        // Predicated region
        $region17: #{tpu_custom_call.1} parent=11 // pred_check
          %p370 = pneg %p95
        $region18: #{tpu_custom_call.1} parent=11 // pred_check_branch
          %372 = sbr.rel (%p370) target = $region20
        $region19: #{tpu_custom_call.1} parent=11 // pred_region
          _
        $region20: #{tpu_custom_call.1} parent=11 // pred_fallthru
          _
        // Predicated region
        $region21: #{tpu_custom_call.1} parent=11 // pred_check
          %p373 = pneg %p116
        $region22: #{tpu_custom_call.1} parent=11 // pred_check_branch
          %375 = sbr.rel (%p373) target = $region24
        $region23: #{tpu_custom_call.1} parent=11 // pred_region
          _
        $region24: #{tpu_custom_call.1} parent=11 // pred_fallthru
          _
        // Predicated region
        $region25: #{tpu_custom_call.1} parent=11 // pred_check
          %p376 = pneg %p137
        $region26: #{tpu_custom_call.1} parent=11 // pred_check_branch
          %378 = sbr.rel (%p376) target = $region28
        $region27: #{tpu_custom_call.1} parent=11 // pred_region
          _
        $region28: #{tpu_custom_call.1} parent=11 // pred_fallthru
          _
        // Predicated region
        $region29: #{tpu_custom_call.1} parent=11 // pred_check
          %p379 = pneg %p158
        $region30: #{tpu_custom_call.1} parent=11 // pred_check_branch
          %381 = sbr.rel (%p379) target = $region32
        $region31: #{tpu_custom_call.1} parent=11 // pred_region
          _
        $region32: #{tpu_custom_call.1} parent=11 // pred_fallthru
          _
        // Predicated region
        $region33: #{tpu_custom_call.1} parent=11 // pred_check
          %p382 = pneg %p179
        $region34: #{tpu_custom_call.1} parent=11 // pred_check_branch
          %384 = sbr.rel (%p382) target = $region36
        $region35: #{tpu_custom_call.1} parent=11 // pred_region
          _
        $region36: #{tpu_custom_call.1} parent=11 // pred_fallthru
          _
        // Predicated region
        $region37: #{tpu_custom_call.1} parent=11 // pred_check
          %p385 = pneg %p200
        $region38: #{tpu_custom_call.1} parent=11 // pred_check_branch
          %387 = sbr.rel (%p385) target = $region40
        $region39: #{tpu_custom_call.1} parent=11 // pred_region
          %s389 = ssub.s32 9216, 9216
          %390 = vsyncadd [#allocation6], %s389
          %s391 = sshll.u32 [#allocation5], 4
          %s392 = int_to_ptr.vmem [resolvable:$true] %s391
          %397 = dma.hbm_to_vmem [thread:$0]  %s7, 9216, %s392, [#allocation6], 64, 64, 4
        $region40: #{tpu_custom_call.1} parent=11 // pred_fallthru
          _
        // Predicated region
        $region41: #{tpu_custom_call.1} parent=11 // pred_check
          %p398 = pneg %p221
        $region42: #{tpu_custom_call.1} parent=11 // pred_check_branch
          %400 = sbr.rel (%p398) target = $region44
        $region43: #{tpu_custom_call.1} parent=11 // pred_region
          _
        $region44: #{tpu_custom_call.1} parent=11 // pred_fallthru
          _
        // Predicated region
        $region45: #{tpu_custom_call.1} parent=11 // pred_check
          %p401 = pneg %p242
        $region46: #{tpu_custom_call.1} parent=11 // pred_check_branch
          %403 = sbr.rel (%p401) target = $region48
        $region47: #{tpu_custom_call.1} parent=11 // pred_region
          _
        $region48: #{tpu_custom_call.1} parent=11 // pred_fallthru
          _
        // Predicated region
        $region49: #{tpu_custom_call.1} parent=11 // pred_check
          %p404 = pneg %p263
        $region50: #{tpu_custom_call.1} parent=11 // pred_check_branch
          %406 = sbr.rel (%p404) target = $region52
        $region51: #{tpu_custom_call.1} parent=11 // pred_region
          _
        $region52: #{tpu_custom_call.1} parent=11 // pred_fallthru
          _
        // Predicated region
        $region53: #{tpu_custom_call.1} parent=11 // pred_check
          %p407 = pneg %p284
        $region54: #{tpu_custom_call.1} parent=11 // pred_check_branch
          %409 = sbr.rel (%p407) target = $region56
        $region55: #{tpu_custom_call.1} parent=11 // pred_region
          _
        $region56: #{tpu_custom_call.1} parent=11 // pred_fallthru
          _
        // Predicated region
        $region57: #{tpu_custom_call.1} parent=11 // pred_check
          %p410 = pneg %p305
        $region58: #{tpu_custom_call.1} parent=11 // pred_check_branch
          %412 = sbr.rel (%p410) target = $region60
        $region59: #{tpu_custom_call.1} parent=11 // pred_region
          _
        $region60: #{tpu_custom_call.1} parent=11 // pred_fallthru
          _
        // Predicated region
        $region61: #{tpu_custom_call.1} parent=11 // pred_check
          %p413 = pneg %p326
        $region62: #{tpu_custom_call.1} parent=11 // pred_check_branch
          %415 = sbr.rel (%p413) target = $region64
        $region63: #{tpu_custom_call.1} parent=11 // pred_region
          _
        $region64: #{tpu_custom_call.1} parent=11 // pred_fallthru
          _
      $region12: #{tpu_custom_call.1} parent=5 // pred_fallthru
        _
      %p416 = scmp.lt.s32.totalorder %s27, 2
      // Predicated region
      $region65: #{tpu_custom_call.1} parent=5 // pred_check
        %p417 = pneg %p416
      $region66: #{tpu_custom_call.1} parent=5 // pred_check_branch
        %419 = sbr.rel (%p417) target = $region68
      $region67: #{tpu_custom_call.1} parent=5 // pred_region
        // Predicated region
        $region69: #{tpu_custom_call.1} parent=67 // pred_check
          %p420 = pneg %p47
        $region70: #{tpu_custom_call.1} parent=67 // pred_check_branch
          %422 = sbr.rel (%p420) target = $region72
        $region71: #{tpu_custom_call.1} parent=67 // pred_region
          %s423 = sand.u32 %s37, 1
          %s424 = scalar_lea.sflag [#allocation3], %s423
          %s425 = sand.u32 %s37, 1
          %s426 = smul.addr %s425, 328
          %s427 = scalar_lea.vmem [#allocation2], %s426
          %s429 = ssub.s32 5248, 5248
          %430 = vsyncadd %s424, %s429
          %s431 = smul.addr %s27, 41
          %s432 = smul.addr %s431, 128
          %s433 = scalar_lea.hbm %s0, %s432
          %s434 = sshll.u32 %s427, 4
          %s435 = int_to_ptr.vmem [resolvable:$true] %s434
          %440 = dma.hbm_to_vmem [thread:$0]  %s433, 5248, %s435, %s424, 128, 128, 8
        $region72: #{tpu_custom_call.1} parent=67 // pred_fallthru
          _
      $region68: #{tpu_custom_call.1} parent=5 // pred_fallthru
        _
      %p441 = scmp.le.s32.totalorder 1, %s27
      %p442 = scmp.lt.s32.totalorder %s27, 3
      %p443 = pnand %p441, %p442
      %p444 = pneg %p443
      // Predicated region
      $region73: #{tpu_custom_call.1} parent=5 // pred_check
        _
      $region74: #{tpu_custom_call.1} parent=5 // pred_check_branch
        %446 = sbr.rel (%p443) target = $region76
      $region75: #{tpu_custom_call.1} parent=5 // pred_region
        %s447 = ssub.s32 %s27, 1
        %s448 = sand.u32 %s40, 1
        %s449 = scalar_lea.sflag [#allocation3], %s448
        %s450 = sand.u32 %s40, 1
        %s451 = smul.addr %s450, 328
        %s452 = scalar_lea.vmem [#allocation2], %s451
        // Predicated region
        $region77: #{tpu_custom_call.1} parent=75 // pred_check
          %p453 = pneg %p53
        $region78: #{tpu_custom_call.1} parent=75 // pred_check_branch
          %455 = sbr.rel (%p453) target = $region80
        $region79: #{tpu_custom_call.1} parent=75 // pred_region
          %456 = dma.done %s449, 5248
        $region80: #{tpu_custom_call.1} parent=75 // pred_fallthru
          _
        // Predicated region
        $region81: #{tpu_custom_call.1} parent=75 // pred_check
          %p457 = pneg %p200
        $region82: #{tpu_custom_call.1} parent=75 // pred_check_branch
          %459 = sbr.rel (%p457) target = $region84
        $region83: #{tpu_custom_call.1} parent=75 // pred_region
          %460 = dma.done [#allocation6], 9216
        $region84: #{tpu_custom_call.1} parent=75 // pred_fallthru
          _
        %s461 = sand.u32 %s40, 1
        %s462 = scalar_lea.sflag [#allocation3], %s461
        %s463 = sand.u32 %s40, 1
        %s464 = smul.addr %s463, 328
        %s465 = scalar_lea.vmem [#allocation2], %s464
        %p466 = pneg %p53
        %p467 = pneg %p50
        %p468 = pneg %p74
        %p469 = pneg %p71
        %p470 = pneg %p95
        %p471 = pneg %p92
        %p472 = pneg %p116
        %p473 = pneg %p113
        %p474 = pneg %p137
        %p475 = pneg %p134
        %p476 = pneg %p158
        %p477 = pneg %p155
        %p478 = pneg %p179
        %p479 = pneg %p176
        %p480 = pneg %p200
        %p481 = pneg %p197
        %p482 = pneg %p221
        %p483 = pneg %p218
        %p484 = pneg %p242
        %p485 = pneg %p239
        %p486 = pneg %p263
        %p487 = pneg %p260
        %p488 = pneg %p284
        %p489 = pneg %p281
        %p490 = pneg %p305
        %p491 = pneg %p302
        %p492 = pneg %p326
        %p493 = pneg %p323
        %p494 = pneg %p352
        %p495 = pneg %p349
        %s496 = sand.u32 %s339, 1
        %s497 = scalar_lea.sflag [#allocation4], %s496
        %s498 = sand.u32 %s339, 1
        %s499 = smul.addr %s498, 328
        %s500 = scalar_lea.vmem [#allocation7], %s499
        %v502 = vld [vmem:[%s452] sm:$0xff]
        %v503 = vld [vmem:[%s452 + $0x8] sm:$0xff]
        %v504 = vld [vmem:[%s452 + $0x10] sm:$0xff]
        %v505 = vld [vmem:[%s452 + $0x18] sm:$0xff]
        %v506 = vld [vmem:[%s452 + $0x20] sm:$0xff]
        %v507 = vld [vmem:[%s452 + $0x28] sm:$0xff]
        %v508 = vld [vmem:[%s452 + $0x30] sm:$0xff]
        %v509 = vld [vmem:[%s452 + $0x38] sm:$0xff]
        %v510 = vld [vmem:[%s452 + $0x40] sm:$0xff]
        %v511 = vld [vmem:[%s452 + $0x48] sm:$0xff]
        %v512 = vld [vmem:[%s452 + $0x50] sm:$0xff]
        %v513 = vld [vmem:[%s452 + $0x58] sm:$0xff]
        %v514 = vld [vmem:[%s452 + $0x60] sm:$0xff]
        %v515 = vld [vmem:[%s452 + $0x68] sm:$0xff]
        %v516 = vld [vmem:[%s452 + $0x70] sm:$0xff]
        %v517 = vld [vmem:[%s452 + $0x78] sm:$0xff]
        %v518 = vld [vmem:[%s452 + $0x80] sm:$0xff]
        %v519 = vld [vmem:[%s452 + $0x88] sm:$0xff]
        %v520 = vld [vmem:[%s452 + $0x90] sm:$0xff]
        %v521 = vld [vmem:[%s452 + $0x98] sm:$0xff]
        %v522 = vld [vmem:[%s452 + $0xa0] sm:$0xff]
        %v523 = vld [vmem:[%s452 + $0xa8] sm:$0xff]
        %v524 = vld [vmem:[%s452 + $0xb0] sm:$0xff]
        %v525 = vld [vmem:[%s452 + $0xb8] sm:$0xff]
        %v526 = vld [vmem:[%s452 + $0xc0] sm:$0xff]
        %v527 = vld [vmem:[%s452 + $0xc8] sm:$0xff]
        %v528 = vld [vmem:[%s452 + $0xd0] sm:$0xff]
        %v529 = vld [vmem:[%s452 + $0xd8] sm:$0xff]
        %v530 = vld [vmem:[%s452 + $0xe0] sm:$0xff]
        %v531 = vld [vmem:[%s452 + $0xe8] sm:$0xff]
        %v532 = vld [vmem:[%s452 + $0xf0] sm:$0xff]
        %v533 = vld [vmem:[%s452 + $0xf8] sm:$0xff]
        %v534 = vld [vmem:[%s452 + $0x100] sm:$0xff]
        %v535 = vld [vmem:[%s452 + $0x108] sm:$0xff]
        %v536 = vld [vmem:[%s452 + $0x110] sm:$0xff]
        %v537 = vld [vmem:[%s452 + $0x118] sm:$0xff]
        %v538 = vld [vmem:[%s452 + $0x120] sm:$0xff]
        %v539 = vld [vmem:[%s452 + $0x128] sm:$0xff]
        %v540 = vld [vmem:[%s452 + $0x130] sm:$0xff]
        %v541 = vld [vmem:[%s452 + $0x138] sm:$0xff]
        %v542 = vld [vmem:[%s452 + $0x140] sm:$0xff]
        %v543 = vld [vmem:[%s2] sm:$0x1]
        %v545 = vlaneseq
        %v546 = vshrl.u32 %v545, 7
        %v547 = vsub.s32 0, %v546
        %v548 = vrot.slane %v543, %v547
        %v550 = vmul.f32 %v502, %v548
        %v551 = vmul.f32 %v503, %v548
        %v552 = vmul.f32 %v504, %v548
        %v553 = vmul.f32 %v505, %v548
        %v554 = vmul.f32 %v506, %v548
        %v555 = vmul.f32 %v507, %v548
        %v556 = vmul.f32 %v508, %v548
        %v557 = vmul.f32 %v509, %v548
        %v558 = vmul.f32 %v510, %v548
        %v559 = vmul.f32 %v511, %v548
        %v560 = vmul.f32 %v512, %v548
        %v561 = vmul.f32 %v513, %v548
        %v562 = vmul.f32 %v514, %v548
        %v563 = vmul.f32 %v515, %v548
        %v564 = vmul.f32 %v516, %v548
        %v565 = vmul.f32 %v517, %v548
        %v566 = vmul.f32 %v518, %v548
        %v567 = vmul.f32 %v519, %v548
        %v568 = vmul.f32 %v520, %v548
        %v569 = vmul.f32 %v521, %v548
        %v570 = vmul.f32 %v522, %v548
        %v571 = vmul.f32 %v523, %v548
        %v572 = vmul.f32 %v524, %v548
        %v573 = vmul.f32 %v525, %v548
        %v574 = vmul.f32 %v526, %v548
        %v575 = vmul.f32 %v527, %v548
        %v576 = vmul.f32 %v528, %v548
        %v577 = vmul.f32 %v529, %v548
        %v578 = vmul.f32 %v530, %v548
        %v579 = vmul.f32 %v531, %v548
        %v580 = vmul.f32 %v532, %v548
        %v581 = vmul.f32 %v533, %v548
        %v582 = vmul.f32 %v534, %v548
        %v583 = vmul.f32 %v535, %v548
        %v584 = vmul.f32 %v536, %v548
        %v585 = vmul.f32 %v537, %v548
        %v586 = vmul.f32 %v538, %v548
        %v587 = vmul.f32 %v539, %v548
        %v588 = vmul.f32 %v540, %v548
        %v589 = vmul.f32 %v541, %v548
        %v590 = vmul.f32 %v542, %v548
        %v591 = vld [vmem:[%s3] sm:$0x1]
        %v593 = vlaneseq
        %v594 = vshrl.u32 %v593, 7
        %v595 = vsub.s32 0, %v594
        %v596 = vrot.slane %v591, %v595
        %v598 = vadd.f32 %v550, %v596
        %v599 = vadd.f32 %v551, %v596
        %v600 = vadd.f32 %v552, %v596
        %v601 = vadd.f32 %v553, %v596
        %v602 = vadd.f32 %v554, %v596
        %v603 = vadd.f32 %v555, %v596
        %v604 = vadd.f32 %v556, %v596
        %v605 = vadd.f32 %v557, %v596
        %v606 = vadd.f32 %v558, %v596
        %v607 = vadd.f32 %v559, %v596
        %v608 = vadd.f32 %v560, %v596
        %v609 = vadd.f32 %v561, %v596
        %v610 = vadd.f32 %v562, %v596
        %v611 = vadd.f32 %v563, %v596
        %v612 = vadd.f32 %v564, %v596
        %v613 = vadd.f32 %v565, %v596
        %v614 = vadd.f32 %v566, %v596
        %v615 = vadd.f32 %v567, %v596
        %v616 = vadd.f32 %v568, %v596
        %v617 = vadd.f32 %v569, %v596
        %v618 = vadd.f32 %v570, %v596
        %v619 = vadd.f32 %v571, %v596
        %v620 = vadd.f32 %v572, %v596
        %v621 = vadd.f32 %v573, %v596
        %v622 = vadd.f32 %v574, %v596
        %v623 = vadd.f32 %v575, %v596
        %v624 = vadd.f32 %v576, %v596
        %v625 = vadd.f32 %v577, %v596
        %v626 = vadd.f32 %v578, %v596
        %v627 = vadd.f32 %v579, %v596
        %v628 = vadd.f32 %v580, %v596
        %v629 = vadd.f32 %v581, %v596
        %v630 = vadd.f32 %v582, %v596
        %v631 = vadd.f32 %v583, %v596
        %v632 = vadd.f32 %v584, %v596
        %v633 = vadd.f32 %v585, %v596
        %v634 = vadd.f32 %v586, %v596
        %v635 = vadd.f32 %v587, %v596
        %v636 = vadd.f32 %v588, %v596
        %v637 = vadd.f32 %v589, %v596
        %v638 = vadd.f32 %v590, %v596
        %v639 = vpack.c.bf16 %v599, %v598
        %v640 = vpack.c.bf16 %v601, %v600
        %v641 = vpack.c.bf16 %v603, %v602
        %v642 = vpack.c.bf16 %v605, %v604
        %v643 = vpack.c.bf16 %v607, %v606
        %v644 = vpack.c.bf16 %v609, %v608
        %v645 = vpack.c.bf16 %v611, %v610
        %v646 = vpack.c.bf16 %v613, %v612
        %v647 = vpack.c.bf16 %v615, %v614
        %v648 = vpack.c.bf16 %v617, %v616
        %v649 = vpack.c.bf16 %v619, %v618
        %v650 = vpack.c.bf16 %v621, %v620
        %v651 = vpack.c.bf16 %v623, %v622
        %v652 = vpack.c.bf16 %v625, %v624
        %v653 = vpack.c.bf16 %v627, %v626
        %v654 = vpack.c.bf16 %v629, %v628
        %v655 = vpack.c.bf16 %v631, %v630
        %v656 = vpack.c.bf16 %v633, %v632
        %v657 = vpack.c.bf16 %v635, %v634
        %v658 = vpack.c.bf16 %v637, %v636
        %v659 = vpack.c.bf16 %v638, %v638
        %v660 = vld [vmem:[%s4] sm:$0xf]
        %v661 = vld [vmem:[%s4 + $0x4] sm:$0xf]
        %v662 = vld [vmem:[%s4 + $0x8] sm:$0xf]
        %v663 = vld [vmem:[%s4 + $0xc] sm:$0xf]
        %v664 = vld [vmem:[%s4 + $0x10] sm:$0xf]
        %v665 = vld [vmem:[%s4 + $0x14] sm:$0xf]
        %v666 = vld [vmem:[%s4 + $0x18] sm:$0xf]
        %v667 = vld [vmem:[%s4 + $0x1c] sm:$0xf]
        %v668 = vld [vmem:[%s4 + $0x20] sm:$0xf]
        %v669 = vld [vmem:[%s4 + $0x24] sm:$0xf]
        %v670 = vld [vmem:[%s4 + $0x28] sm:$0xf]
        %v671 = vld [vmem:[%s4 + $0x2c] sm:$0xf]
        %v672 = vld [vmem:[%s4 + $0x30] sm:$0xf]
        %v673 = vld [vmem:[%s4 + $0x34] sm:$0xf]
        %v674 = vld [vmem:[%s4 + $0x38] sm:$0xf]
        %v675 = vld [vmem:[%s4 + $0x3c] sm:$0xf]
        %v692 = vunpack.c.l.b16 %v660
        %v693 = vunpack.c.l.b16 %v661
        %v694 = vunpack.c.l.b16 %v662
        %v695 = vunpack.c.l.b16 %v663
        %v696 = vunpack.c.l.b16 %v664
        %v697 = vunpack.c.l.b16 %v665
        %v698 = vunpack.c.l.b16 %v666
        %v699 = vunpack.c.l.b16 %v667
        %v700 = vunpack.c.l.b16 %v668
        %v701 = vunpack.c.l.b16 %v669
        %v702 = vunpack.c.l.b16 %v670
        %v703 = vunpack.c.l.b16 %v671
        %v704 = vunpack.c.l.b16 %v672
        %v705 = vunpack.c.l.b16 %v673
        %v706 = vunpack.c.l.b16 %v674
        %v707 = vunpack.c.l.b16 %v675
        %v708 = vpack.c.b16 %v693, %v692
        %v709 = vpack.c.b16 %v695, %v694
        %v710 = vpack.c.b16 %v697, %v696
        %v711 = vpack.c.b16 %v699, %v698
        %v712 = vpack.c.b16 %v701, %v700
        %v713 = vpack.c.b16 %v703, %v702
        %v714 = vpack.c.b16 %v705, %v704
        %v715 = vpack.c.b16 %v707, %v706
        %724 = vmatprep.subr.bf16.mxu0 0
        %725 = vmatpush1.bf16.msra.mxu0 %v715
        %726 = vmatprep.subr.bf16.mxu0 0
        %727 = vmatpush1.bf16.msra.mxu0 %v714
        %728 = vmatprep.subr.bf16.mxu0 0
        %729 = vmatpush1.bf16.msra.mxu0 %v713
        %730 = vmatprep.subr.bf16.mxu0 0
        %731 = vmatpush1.bf16.msra.mxu0 %v712
        %732 = vmatprep.subr.bf16.mxu0 0
        %733 = vmatpush1.bf16.msra.mxu0 %v711
        %734 = vmatprep.subr.bf16.mxu0 0
        %735 = vmatpush1.bf16.msra.mxu0 %v710
        %736 = vmatprep.subr.bf16.mxu0 0
        %737 = vmatpush1.bf16.msra.mxu0 %v709
        %738 = vmatprep.subr.bf16.mxu0 0
        %739 = vmatpush1.bf16.msra.mxu0 %v708
        %740 = vmatprep.subr.bf16.mxu0 0
        %741 = vmatpush2.bf16.msra.mxu0 0
        %742 = vmatprep.subr.bf16.mxu0 0
        %743 = vmatpush2.bf16.msra.mxu0 0
        %744 = vmatprep.subr.bf16.mxu0 0
        %745 = vmatpush2.bf16.msra.mxu0 0
        %746 = vmatprep.subr.bf16.mxu0 0
        %747 = vmatpush2.bf16.msra.mxu0 0
        %748 = vmatprep.subr.bf16.mxu0 0
        %749 = vmatpush2.bf16.msra.mxu0 0
        %750 = vmatprep.subr.bf16.mxu0 0
        %751 = vmatpush2.bf16.msra.mxu0 0
        %752 = vmatprep.subr.bf16.mxu0 0
        %753 = vmatpush2.bf16.msra.mxu0 0
        %754 = vmatprep.subr.bf16.mxu0 0
        %755 = vmatpush2.bf16.msra.mxu0 0
        %756 = vmatprep.mubr.bf16.mxu0 0
        %757 = vmatmul.mubr.bf16.gmra.mxu0 %v639
        %v758 = vpop.f32.mrf.mxu0
        %v759 = vadd.f32 0.0, %v758
        %v760 = vpop.f32.mrf.mxu0
        %v761 = vpop.f32.mrf.mxu0
        %v762 = vadd.f32 0.0, %v761
        %v763 = vpop.f32.mrf.mxu0
        %764 = vmatprep.mubr.bf16.mxu0 0
        %765 = vmatmul.mubr.bf16.gmra.mxu0 %v640
        %v766 = vpop.f32.mrf.mxu0
        %v767 = vadd.f32 0.0, %v766
        %v768 = vpop.f32.mrf.mxu0
        %v769 = vpop.f32.mrf.mxu0
        %v770 = vadd.f32 0.0, %v769
        %v771 = vpop.f32.mrf.mxu0
        %772 = vmatprep.mubr.bf16.mxu0 0
        %773 = vmatmul.mubr.bf16.gmra.mxu0 %v641
        %v774 = vpop.f32.mrf.mxu0
        %v775 = vadd.f32 0.0, %v774
        %v776 = vpop.f32.mrf.mxu0
        %v777 = vpop.f32.mrf.mxu0
        %v778 = vadd.f32 0.0, %v777
        %v779 = vpop.f32.mrf.mxu0
        %780 = vmatprep.mubr.bf16.mxu0 0
        %781 = vmatmul.mubr.bf16.gmra.mxu0 %v642
        %v782 = vpop.f32.mrf.mxu0
        %v783 = vadd.f32 0.0, %v782
        %v784 = vpop.f32.mrf.mxu0
        %v785 = vpop.f32.mrf.mxu0
        %v786 = vadd.f32 0.0, %v785
        %v787 = vpop.f32.mrf.mxu0
        %788 = vmatprep.mubr.bf16.mxu0 0
        %789 = vmatmul.mubr.bf16.gmra.mxu0 %v643
        %v790 = vpop.f32.mrf.mxu0
        %v791 = vadd.f32 0.0, %v790
        %v792 = vpop.f32.mrf.mxu0
        %v793 = vpop.f32.mrf.mxu0
        %v794 = vadd.f32 0.0, %v793
        %v795 = vpop.f32.mrf.mxu0
        %796 = vmatprep.mubr.bf16.mxu0 0
        %797 = vmatmul.mubr.bf16.gmra.mxu0 %v644
        %v798 = vpop.f32.mrf.mxu0
        %v799 = vadd.f32 0.0, %v798
        %v800 = vpop.f32.mrf.mxu0
        %v801 = vpop.f32.mrf.mxu0
        %v802 = vadd.f32 0.0, %v801
        %v803 = vpop.f32.mrf.mxu0
        %804 = vmatprep.mubr.bf16.mxu0 0
        %805 = vmatmul.mubr.bf16.gmra.mxu0 %v645
        %v806 = vpop.f32.mrf.mxu0
        %v807 = vadd.f32 0.0, %v806
        %v808 = vpop.f32.mrf.mxu0
        %v809 = vpop.f32.mrf.mxu0
        %v810 = vadd.f32 0.0, %v809
        %v811 = vpop.f32.mrf.mxu0
        %812 = vmatprep.mubr.bf16.mxu0 0
        %813 = vmatmul.mubr.bf16.gmra.mxu0 %v646
        %v814 = vpop.f32.mrf.mxu0
        %v815 = vadd.f32 0.0, %v814
        %v816 = vpop.f32.mrf.mxu0
        %v817 = vpop.f32.mrf.mxu0
        %v818 = vadd.f32 0.0, %v817
        %v819 = vpop.f32.mrf.mxu0
        %820 = vmatprep.mubr.bf16.mxu0 0
        %821 = vmatmul.mubr.bf16.gmra.mxu0 %v647
        %v822 = vpop.f32.mrf.mxu0
        %v823 = vadd.f32 0.0, %v822
        %v824 = vpop.f32.mrf.mxu0
        %v825 = vpop.f32.mrf.mxu0
        %v826 = vadd.f32 0.0, %v825
        %v827 = vpop.f32.mrf.mxu0
        %828 = vmatprep.mubr.bf16.mxu0 0
        %829 = vmatmul.mubr.bf16.gmra.mxu0 %v648
        %v830 = vpop.f32.mrf.mxu0
        %v831 = vadd.f32 0.0, %v830
        %v832 = vpop.f32.mrf.mxu0
        %v833 = vpop.f32.mrf.mxu0
        %v834 = vadd.f32 0.0, %v833
        %v835 = vpop.f32.mrf.mxu0
        %836 = vmatprep.mubr.bf16.mxu0 0
        %837 = vmatmul.mubr.bf16.gmra.mxu0 %v649
        %v838 = vpop.f32.mrf.mxu0
        %v839 = vadd.f32 0.0, %v838
        %v840 = vpop.f32.mrf.mxu0
        %v841 = vpop.f32.mrf.mxu0
        %v842 = vadd.f32 0.0, %v841
        %v843 = vpop.f32.mrf.mxu0
        %844 = vmatprep.mubr.bf16.mxu0 0
        %845 = vmatmul.mubr.bf16.gmra.mxu0 %v650
        %v846 = vpop.f32.mrf.mxu0
        %v847 = vadd.f32 0.0, %v846
        %v848 = vpop.f32.mrf.mxu0
        %v849 = vpop.f32.mrf.mxu0
        %v850 = vadd.f32 0.0, %v849
        %v851 = vpop.f32.mrf.mxu0
        %852 = vmatprep.mubr.bf16.mxu0 0
        %853 = vmatmul.mubr.bf16.gmra.mxu0 %v651
        %v854 = vpop.f32.mrf.mxu0
        %v855 = vadd.f32 0.0, %v854
        %v856 = vpop.f32.mrf.mxu0
        %v857 = vpop.f32.mrf.mxu0
        %v858 = vadd.f32 0.0, %v857
        %v859 = vpop.f32.mrf.mxu0
        %860 = vmatprep.mubr.bf16.mxu0 0
        %861 = vmatmul.mubr.bf16.gmra.mxu0 %v652
        %v862 = vpop.f32.mrf.mxu0
        %v863 = vadd.f32 0.0, %v862
        %v864 = vpop.f32.mrf.mxu0
        %v865 = vpop.f32.mrf.mxu0
        %v866 = vadd.f32 0.0, %v865
        %v867 = vpop.f32.mrf.mxu0
        %868 = vmatprep.mubr.bf16.mxu0 0
        %869 = vmatmul.mubr.bf16.gmra.mxu0 %v653
        %v870 = vpop.f32.mrf.mxu0
        %v871 = vadd.f32 0.0, %v870
        %v872 = vpop.f32.mrf.mxu0
        %v873 = vpop.f32.mrf.mxu0
        %v874 = vadd.f32 0.0, %v873
        %v875 = vpop.f32.mrf.mxu0
        %876 = vmatprep.mubr.bf16.mxu0 0
        %877 = vmatmul.mubr.bf16.gmra.mxu0 %v654
        %v878 = vpop.f32.mrf.mxu0
        %v879 = vadd.f32 0.0, %v878
        %v880 = vpop.f32.mrf.mxu0
        %v881 = vpop.f32.mrf.mxu0
        %v882 = vadd.f32 0.0, %v881
        %v883 = vpop.f32.mrf.mxu0
        %884 = vmatprep.mubr.bf16.mxu0 0
        %885 = vmatmul.mubr.bf16.gmra.mxu0 %v655
        %v886 = vpop.f32.mrf.mxu0
        %v887 = vadd.f32 0.0, %v886
        %v888 = vpop.f32.mrf.mxu0
        %v889 = vpop.f32.mrf.mxu0
        %v890 = vadd.f32 0.0, %v889
        %v891 = vpop.f32.mrf.mxu0
        %892 = vmatprep.mubr.bf16.mxu0 0
        %893 = vmatmul.mubr.bf16.gmra.mxu0 %v656
        %v894 = vpop.f32.mrf.mxu0
        %v895 = vadd.f32 0.0, %v894
        %v896 = vpop.f32.mrf.mxu0
        %v897 = vpop.f32.mrf.mxu0
        %v898 = vadd.f32 0.0, %v897
        %v899 = vpop.f32.mrf.mxu0
        %900 = vmatprep.mubr.bf16.mxu0 0
        %901 = vmatmul.mubr.bf16.gmra.mxu0 %v657
        %v902 = vpop.f32.mrf.mxu0
        %v903 = vadd.f32 0.0, %v902
        %v904 = vpop.f32.mrf.mxu0
        %v905 = vpop.f32.mrf.mxu0
        %v906 = vadd.f32 0.0, %v905
        %v907 = vpop.f32.mrf.mxu0
        %908 = vmatprep.mubr.bf16.mxu0 0
        %909 = vmatmul.mubr.bf16.gmra.mxu0 %v658
        %v910 = vpop.f32.mrf.mxu0
        %v911 = vadd.f32 0.0, %v910
        %v912 = vpop.f32.mrf.mxu0
        %v913 = vpop.f32.mrf.mxu0
        %v914 = vadd.f32 0.0, %v913
        %v915 = vpop.f32.mrf.mxu0
        %916 = vmatprep.mubr.bf16.mxu0 0
        %917 = vmatmul.mubr.bf16.gmra.mxu0 %v659
        %v918 = vpop.f32.mrf.mxu0
        %v919 = vadd.f32 0.0, %v918
        %v920 = vpop.f32.mrf.mxu0
        %v921 = vpop.f32.mrf.mxu0
        %v922 = vpop.f32.mrf.mxu0
        %923 = vdwg.mxu0
        %v924 = vld [vmem:[%s5] sm:$0x1]
        %v926 = vlaneseq
        %v927 = vshrl.u32 %v926, 7
        %v928 = vsub.s32 0, %v927
        %v929 = vrot.slane %v924, %v928
        %v931 = vmul.f32 %v759, %v929
        %v932 = vmul.f32 %v762, %v929
        %v933 = vmul.f32 %v767, %v929
        %v934 = vmul.f32 %v770, %v929
        %v935 = vmul.f32 %v775, %v929
        %v936 = vmul.f32 %v778, %v929
        %v937 = vmul.f32 %v783, %v929
        %v938 = vmul.f32 %v786, %v929
        %v939 = vmul.f32 %v791, %v929
        %v940 = vmul.f32 %v794, %v929
        %v941 = vmul.f32 %v799, %v929
        %v942 = vmul.f32 %v802, %v929
        %v943 = vmul.f32 %v807, %v929
        %v944 = vmul.f32 %v810, %v929
        %v945 = vmul.f32 %v815, %v929
        %v946 = vmul.f32 %v818, %v929
        %v947 = vmul.f32 %v823, %v929
        %v948 = vmul.f32 %v826, %v929
        %v949 = vmul.f32 %v831, %v929
        %v950 = vmul.f32 %v834, %v929
        %v951 = vmul.f32 %v839, %v929
        %v952 = vmul.f32 %v842, %v929
        %v953 = vmul.f32 %v847, %v929
        %v954 = vmul.f32 %v850, %v929
        %v955 = vmul.f32 %v855, %v929
        %v956 = vmul.f32 %v858, %v929
        %v957 = vmul.f32 %v863, %v929
        %v958 = vmul.f32 %v866, %v929
        %v959 = vmul.f32 %v871, %v929
        %v960 = vmul.f32 %v874, %v929
        %v961 = vmul.f32 %v879, %v929
        %v962 = vmul.f32 %v882, %v929
        %v963 = vmul.f32 %v887, %v929
        %v964 = vmul.f32 %v890, %v929
        %v965 = vmul.f32 %v895, %v929
        %v966 = vmul.f32 %v898, %v929
        %v967 = vmul.f32 %v903, %v929
        %v968 = vmul.f32 %v906, %v929
        %v969 = vmul.f32 %v911, %v929
        %v970 = vmul.f32 %v914, %v929
        %v971 = vmul.f32 %v919, %v929
        %v972 = vld [vmem:[%s6] sm:$0x1]
        %v974 = vlaneseq
        %v975 = vshrl.u32 %v974, 7
        %v976 = vsub.s32 0, %v975
        %v977 = vrot.slane %v972, %v976
        %v979 = vadd.f32 %v931, %v977
        %v980 = vadd.f32 %v932, %v977
        %v981 = vadd.f32 %v933, %v977
        %v982 = vadd.f32 %v934, %v977
        %v983 = vadd.f32 %v935, %v977
        %v984 = vadd.f32 %v936, %v977
        %v985 = vadd.f32 %v937, %v977
        %v986 = vadd.f32 %v938, %v977
        %v987 = vadd.f32 %v939, %v977
        %v988 = vadd.f32 %v940, %v977
        %v989 = vadd.f32 %v941, %v977
        %v990 = vadd.f32 %v942, %v977
        %v991 = vadd.f32 %v943, %v977
        %v992 = vadd.f32 %v944, %v977
        %v993 = vadd.f32 %v945, %v977
        %v994 = vadd.f32 %v946, %v977
        %v995 = vadd.f32 %v947, %v977
        %v996 = vadd.f32 %v948, %v977
        %v997 = vadd.f32 %v949, %v977
        %v998 = vadd.f32 %v950, %v977
        %v999 = vadd.f32 %v951, %v977
        %v1000 = vadd.f32 %v952, %v977
        %v1001 = vadd.f32 %v953, %v977
        %v1002 = vadd.f32 %v954, %v977
        %v1003 = vadd.f32 %v955, %v977
        %v1004 = vadd.f32 %v956, %v977
        %v1005 = vadd.f32 %v957, %v977
        %v1006 = vadd.f32 %v958, %v977
        %v1007 = vadd.f32 %v959, %v977
        %v1008 = vadd.f32 %v960, %v977
        %v1009 = vadd.f32 %v961, %v977
        %v1010 = vadd.f32 %v962, %v977
        %v1011 = vadd.f32 %v963, %v977
        %v1012 = vadd.f32 %v964, %v977
        %v1013 = vadd.f32 %v965, %v977
        %v1014 = vadd.f32 %v966, %v977
        %v1015 = vadd.f32 %v967, %v977
        %v1016 = vadd.f32 %v968, %v977
        %v1017 = vadd.f32 %v969, %v977
        %v1018 = vadd.f32 %v970, %v977
        %v1019 = vadd.f32 %v971, %v977
        %v1020 = vmax.f32 %v979, 0.0
        %v1021 = vmax.f32 %v980, 0.0
        %v1022 = vmax.f32 %v981, 0.0
        %v1023 = vmax.f32 %v982, 0.0
        %v1024 = vmax.f32 %v983, 0.0
        %v1025 = vmax.f32 %v984, 0.0
        %v1026 = vmax.f32 %v985, 0.0
        %v1027 = vmax.f32 %v986, 0.0
        %v1028 = vmax.f32 %v987, 0.0
        %v1029 = vmax.f32 %v988, 0.0
        %v1030 = vmax.f32 %v989, 0.0
        %v1031 = vmax.f32 %v990, 0.0
        %v1032 = vmax.f32 %v991, 0.0
        %v1033 = vmax.f32 %v992, 0.0
        %v1034 = vmax.f32 %v993, 0.0
        %v1035 = vmax.f32 %v994, 0.0
        %v1036 = vmax.f32 %v995, 0.0
        %v1037 = vmax.f32 %v996, 0.0
        %v1038 = vmax.f32 %v997, 0.0
        %v1039 = vmax.f32 %v998, 0.0
        %v1040 = vmax.f32 %v999, 0.0
        %v1041 = vmax.f32 %v1000, 0.0
        %v1042 = vmax.f32 %v1001, 0.0
        %v1043 = vmax.f32 %v1002, 0.0
        %v1044 = vmax.f32 %v1003, 0.0
        %v1045 = vmax.f32 %v1004, 0.0
        %v1046 = vmax.f32 %v1005, 0.0
        %v1047 = vmax.f32 %v1006, 0.0
        %v1048 = vmax.f32 %v1007, 0.0
        %v1049 = vmax.f32 %v1008, 0.0
        %v1050 = vmax.f32 %v1009, 0.0
        %v1051 = vmax.f32 %v1010, 0.0
        %v1052 = vmax.f32 %v1011, 0.0
        %v1053 = vmax.f32 %v1012, 0.0
        %v1054 = vmax.f32 %v1013, 0.0
        %v1055 = vmax.f32 %v1014, 0.0
        %v1056 = vmax.f32 %v1015, 0.0
        %v1057 = vmax.f32 %v1016, 0.0
        %v1058 = vmax.f32 %v1017, 0.0
        %v1059 = vmax.f32 %v1018, 0.0
        %v1060 = vmax.f32 %v1019, 0.0
        %v1061 = vld [vmem:[%s1] sm:$0xff]
        %v1062 = vld [vmem:[%s1 + $0x8] sm:$0xff]
        %v1063 = vld [vmem:[%s1 + $0x10] sm:$0xff]
        %v1064 = vld [vmem:[%s1 + $0x18] sm:$0xff]
        %v1065 = vld [vmem:[%s1 + $0x20] sm:$0xff]
        %v1066 = vld [vmem:[%s1 + $0x28] sm:$0xff]
        %v1067 = vld [vmem:[%s1 + $0x30] sm:$0xff]
        %v1068 = vld [vmem:[%s1 + $0x38] sm:$0xff]
        %v1069 = vld [vmem:[%s1 + $0x40] sm:$0xff]
        %v1070 = vld [vmem:[%s1 + $0x48] sm:$0xff]
        %v1071 = vld [vmem:[%s1 + $0x50] sm:$0xff]
        %v1072 = vld [vmem:[%s1 + $0x58] sm:$0xff]
        %v1073 = vld [vmem:[%s1 + $0x60] sm:$0xff]
        %v1074 = vld [vmem:[%s1 + $0x68] sm:$0xff]
        %v1075 = vld [vmem:[%s1 + $0x70] sm:$0xff]
        %v1076 = vld [vmem:[%s1 + $0x78] sm:$0xff]
        %v1077 = vld [vmem:[%s1 + $0x80] sm:$0xff]
        %v1078 = vld [vmem:[%s1 + $0x88] sm:$0xff]
        %v1079 = vld [vmem:[%s1 + $0x90] sm:$0xff]
        %v1080 = vld [vmem:[%s1 + $0x98] sm:$0xff]
        %v1081 = vld [vmem:[%s1 + $0xa0] sm:$0xff]
        %v1082 = vld [vmem:[%s1 + $0xa8] sm:$0xff]
        %v1083 = vld [vmem:[%s1 + $0xb0] sm:$0xff]
        %v1084 = vld [vmem:[%s1 + $0xb8] sm:$0xff]
        %v1085 = vld [vmem:[%s1 + $0xc0] sm:$0xff]
        %v1086 = vld [vmem:[%s1 + $0xc8] sm:$0xff]
        %v1087 = vld [vmem:[%s1 + $0xd0] sm:$0xff]
        %v1088 = vld [vmem:[%s1 + $0xd8] sm:$0xff]
        %v1089 = vld [vmem:[%s1 + $0xe0] sm:$0xff]
        %v1090 = vld [vmem:[%s1 + $0xe8] sm:$0xff]
        %v1091 = vld [vmem:[%s1 + $0xf0] sm:$0xff]
        %v1092 = vld [vmem:[%s1 + $0xf8] sm:$0xff]
        %v1093 = vld [vmem:[%s1 + $0x100] sm:$0xff]
        %v1094 = vld [vmem:[%s1 + $0x108] sm:$0xff]
        %v1095 = vld [vmem:[%s1 + $0x110] sm:$0xff]
        %v1096 = vld [vmem:[%s1 + $0x118] sm:$0xff]
        %v1097 = vld [vmem:[%s1 + $0x120] sm:$0xff]
        %v1098 = vld [vmem:[%s1 + $0x128] sm:$0xff]
        %v1099 = vld [vmem:[%s1 + $0x130] sm:$0xff]
        %v1100 = vld [vmem:[%s1 + $0x138] sm:$0xff]
        %v1101 = vld [vmem:[%s1 + $0x140] sm:$0xff]
        %1103 = vset.pattern.permute.xlu0 0
        %1104 = vperm.xlu0 %1103, %v1061
        %v1105 = vpop.permute.xlu0 %1104
        %1108 = vset.pattern.permute.xlu0 0
        %1109 = vperm.xlu0 %1108, %v1062
        %v1110 = vpop.permute.xlu0 %1109
        %1113 = vset.pattern.permute.xlu0 0
        %1114 = vperm.xlu0 %1113, %v1063
        %v1115 = vpop.permute.xlu0 %1114
        %1118 = vset.pattern.permute.xlu0 0
        %1119 = vperm.xlu0 %1118, %v1064
        %v1120 = vpop.permute.xlu0 %1119
        %1123 = vset.pattern.permute.xlu0 0
        %1124 = vperm.xlu0 %1123, %v1065
        %v1125 = vpop.permute.xlu0 %1124
        %1128 = vset.pattern.permute.xlu0 0
        %1129 = vperm.xlu0 %1128, %v1066
        %v1130 = vpop.permute.xlu0 %1129
        %1133 = vset.pattern.permute.xlu0 0
        %1134 = vperm.xlu0 %1133, %v1067
        %v1135 = vpop.permute.xlu0 %1134
        %1138 = vset.pattern.permute.xlu0 0
        %1139 = vperm.xlu0 %1138, %v1068
        %v1140 = vpop.permute.xlu0 %1139
        %1143 = vset.pattern.permute.xlu0 0
        %1144 = vperm.xlu0 %1143, %v1069
        %v1145 = vpop.permute.xlu0 %1144
        %1148 = vset.pattern.permute.xlu0 0
        %1149 = vperm.xlu0 %1148, %v1070
        %v1150 = vpop.permute.xlu0 %1149
        %1153 = vset.pattern.permute.xlu0 0
        %1154 = vperm.xlu0 %1153, %v1071
        %v1155 = vpop.permute.xlu0 %1154
        %1158 = vset.pattern.permute.xlu0 0
        %1159 = vperm.xlu0 %1158, %v1072
        %v1160 = vpop.permute.xlu0 %1159
        %1163 = vset.pattern.permute.xlu0 0
        %1164 = vperm.xlu0 %1163, %v1073
        %v1165 = vpop.permute.xlu0 %1164
        %1168 = vset.pattern.permute.xlu0 0
        %1169 = vperm.xlu0 %1168, %v1074
        %v1170 = vpop.permute.xlu0 %1169
        %1173 = vset.pattern.permute.xlu0 0
        %1174 = vperm.xlu0 %1173, %v1075
        %v1175 = vpop.permute.xlu0 %1174
        %1178 = vset.pattern.permute.xlu0 0
        %1179 = vperm.xlu0 %1178, %v1076
        %v1180 = vpop.permute.xlu0 %1179
        %1183 = vset.pattern.permute.xlu0 0
        %1184 = vperm.xlu0 %1183, %v1077
        %v1185 = vpop.permute.xlu0 %1184
        %1188 = vset.pattern.permute.xlu0 0
        %1189 = vperm.xlu0 %1188, %v1078
        %v1190 = vpop.permute.xlu0 %1189
        %1193 = vset.pattern.permute.xlu0 0
        %1194 = vperm.xlu0 %1193, %v1079
        %v1195 = vpop.permute.xlu0 %1194
        %1198 = vset.pattern.permute.xlu0 0
        %1199 = vperm.xlu0 %1198, %v1080
        %v1200 = vpop.permute.xlu0 %1199
        %1203 = vset.pattern.permute.xlu0 0
        %1204 = vperm.xlu0 %1203, %v1081
        %v1205 = vpop.permute.xlu0 %1204
        %1208 = vset.pattern.permute.xlu0 0
        %1209 = vperm.xlu0 %1208, %v1082
        %v1210 = vpop.permute.xlu0 %1209
        %1213 = vset.pattern.permute.xlu0 0
        %1214 = vperm.xlu0 %1213, %v1083
        %v1215 = vpop.permute.xlu0 %1214
        %1218 = vset.pattern.permute.xlu0 0
        %1219 = vperm.xlu0 %1218, %v1084
        %v1220 = vpop.permute.xlu0 %1219
        %1223 = vset.pattern.permute.xlu0 0
        %1224 = vperm.xlu0 %1223, %v1085
        %v1225 = vpop.permute.xlu0 %1224
        %1228 = vset.pattern.permute.xlu0 0
        %1229 = vperm.xlu0 %1228, %v1086
        %v1230 = vpop.permute.xlu0 %1229
        %1233 = vset.pattern.permute.xlu0 0
        %1234 = vperm.xlu0 %1233, %v1087
        %v1235 = vpop.permute.xlu0 %1234
        %1238 = vset.pattern.permute.xlu0 0
        %1239 = vperm.xlu0 %1238, %v1088
        %v1240 = vpop.permute.xlu0 %1239
        %1243 = vset.pattern.permute.xlu0 0
        %1244 = vperm.xlu0 %1243, %v1089
        %v1245 = vpop.permute.xlu0 %1244
        %1248 = vset.pattern.permute.xlu0 0
        %1249 = vperm.xlu0 %1248, %v1090
        %v1250 = vpop.permute.xlu0 %1249
        %1253 = vset.pattern.permute.xlu0 0
        %1254 = vperm.xlu0 %1253, %v1091
        %v1255 = vpop.permute.xlu0 %1254
        %1258 = vset.pattern.permute.xlu0 0
        %1259 = vperm.xlu0 %1258, %v1092
        %v1260 = vpop.permute.xlu0 %1259
        %1263 = vset.pattern.permute.xlu0 0
        %1264 = vperm.xlu0 %1263, %v1093
        %v1265 = vpop.permute.xlu0 %1264
        %1268 = vset.pattern.permute.xlu0 0
        %1269 = vperm.xlu0 %1268, %v1094
        %v1270 = vpop.permute.xlu0 %1269
        %1273 = vset.pattern.permute.xlu0 0
        %1274 = vperm.xlu0 %1273, %v1095
        %v1275 = vpop.permute.xlu0 %1274
        %1278 = vset.pattern.permute.xlu0 0
        %1279 = vperm.xlu0 %1278, %v1096
        %v1280 = vpop.permute.xlu0 %1279
        %1283 = vset.pattern.permute.xlu0 0
        %1284 = vperm.xlu0 %1283, %v1097
        %v1285 = vpop.permute.xlu0 %1284
        %1288 = vset.pattern.permute.xlu0 0
        %1289 = vperm.xlu0 %1288, %v1098
        %v1290 = vpop.permute.xlu0 %1289
        %1293 = vset.pattern.permute.xlu0 0
        %1294 = vperm.xlu0 %1293, %v1099
        %v1295 = vpop.permute.xlu0 %1294
        %1298 = vset.pattern.permute.xlu0 0
        %1299 = vperm.xlu0 %1298, %v1100
        %v1300 = vpop.permute.xlu0 %1299
        %1303 = vset.pattern.permute.xlu0 0
        %1304 = vperm.xlu0 %1303, %v1101
        %v1305 = vpop.permute.xlu0 %1304
        %v1307 = vmul.f32 %v1020, %v1105
        %v1308 = vmul.f32 %v1021, %v1110
        %v1309 = vmul.f32 %v1022, %v1115
        %v1310 = vmul.f32 %v1023, %v1120
        %v1311 = vmul.f32 %v1024, %v1125
        %v1312 = vmul.f32 %v1025, %v1130
        %v1313 = vmul.f32 %v1026, %v1135
        %v1314 = vmul.f32 %v1027, %v1140
        %v1315 = vmul.f32 %v1028, %v1145
        %v1316 = vmul.f32 %v1029, %v1150
        %v1317 = vmul.f32 %v1030, %v1155
        %v1318 = vmul.f32 %v1031, %v1160
        %v1319 = vmul.f32 %v1032, %v1165
        %v1320 = vmul.f32 %v1033, %v1170
        %v1321 = vmul.f32 %v1034, %v1175
        %v1322 = vmul.f32 %v1035, %v1180
        %v1323 = vmul.f32 %v1036, %v1185
        %v1324 = vmul.f32 %v1037, %v1190
        %v1325 = vmul.f32 %v1038, %v1195
        %v1326 = vmul.f32 %v1039, %v1200
        %v1327 = vmul.f32 %v1040, %v1205
        %v1328 = vmul.f32 %v1041, %v1210
        %v1329 = vmul.f32 %v1042, %v1215
        %v1330 = vmul.f32 %v1043, %v1220
        %v1331 = vmul.f32 %v1044, %v1225
        %v1332 = vmul.f32 %v1045, %v1230
        %v1333 = vmul.f32 %v1046, %v1235
        %v1334 = vmul.f32 %v1047, %v1240
        %v1335 = vmul.f32 %v1048, %v1245
        %v1336 = vmul.f32 %v1049, %v1250
        %v1337 = vmul.f32 %v1050, %v1255
        %v1338 = vmul.f32 %v1051, %v1260
        %v1339 = vmul.f32 %v1052, %v1265
        %v1340 = vmul.f32 %v1053, %v1270
        %v1341 = vmul.f32 %v1054, %v1275
        %v1342 = vmul.f32 %v1055, %v1280
        %v1343 = vmul.f32 %v1056, %v1285
        %v1344 = vmul.f32 %v1057, %v1290
        %v1345 = vmul.f32 %v1058, %v1295
        %v1346 = vmul.f32 %v1059, %v1300
        %v1347 = vmul.f32 %v1060, %v1305
        %v1348 = vrot.slane %v1307, 5
        %v1349 = vrot.slane %v1308, 5
        %v1350 = vrot.slane %v1309, 5
        %v1351 = vrot.slane %v1310, 5
        %v1352 = vrot.slane %v1311, 5
        %v1353 = vrot.slane %v1312, 5
        %v1354 = vrot.slane %v1313, 5
        %v1355 = vrot.slane %v1314, 5
        %v1356 = vrot.slane %v1315, 5
        %v1357 = vrot.slane %v1316, 5
        %v1358 = vrot.slane %v1317, 5
        %v1359 = vrot.slane %v1318, 5
        %v1360 = vrot.slane %v1319, 5
        %v1361 = vrot.slane %v1320, 5
        %v1362 = vrot.slane %v1321, 5
        %v1363 = vrot.slane %v1322, 5
        %v1364 = vrot.slane %v1323, 5
        %v1365 = vrot.slane %v1324, 5
        %v1366 = vrot.slane %v1325, 5
        %v1367 = vrot.slane %v1326, 5
        %v1368 = vrot.slane %v1327, 5
        %v1369 = vrot.slane %v1328, 5
        %v1370 = vrot.slane %v1329, 5
        %v1371 = vrot.slane %v1330, 5
        %v1372 = vrot.slane %v1331, 5
        %v1373 = vrot.slane %v1332, 5
        %v1374 = vrot.slane %v1333, 5
        %v1375 = vrot.slane %v1334, 5
        %v1376 = vrot.slane %v1335, 5
        %v1377 = vrot.slane %v1336, 5
        %v1378 = vrot.slane %v1337, 5
        %v1379 = vrot.slane %v1338, 5
        %v1380 = vrot.slane %v1339, 5
        %v1381 = vrot.slane %v1340, 5
        %v1382 = vrot.slane %v1341, 5
        %v1383 = vrot.slane %v1342, 5
        %v1384 = vrot.slane %v1343, 5
        %v1385 = vrot.slane %v1344, 5
        %v1386 = vrot.slane %v1345, 5
        %v1387 = vrot.slane %v1346, 5
        %v1388 = vrot.slane %v1347, 5
        %v1389 = vlaneseq
        %v1390 = vshrl.u32 %v1389, 7
        %vm1391 = vcmp.lt.s32.totalorder %v1390, 3
        %v1392 = vsel %vm1391, %v1387, %v1388
        %v1393 = vsel %vm1391, %v1386, %v1387
        %v1394 = vsel %vm1391, %v1385, %v1386
        %v1395 = vsel %vm1391, %v1384, %v1385
        %v1396 = vsel %vm1391, %v1383, %v1384
        %v1397 = vsel %vm1391, %v1382, %v1383
        %v1398 = vsel %vm1391, %v1381, %v1382
        %v1399 = vsel %vm1391, %v1380, %v1381
        %v1400 = vsel %vm1391, %v1379, %v1380
        %v1401 = vsel %vm1391, %v1378, %v1379
        %v1402 = vsel %vm1391, %v1377, %v1378
        %v1403 = vsel %vm1391, %v1376, %v1377
        %v1404 = vsel %vm1391, %v1375, %v1376
        %v1405 = vsel %vm1391, %v1374, %v1375
        %v1406 = vsel %vm1391, %v1373, %v1374
        %v1407 = vsel %vm1391, %v1372, %v1373
        %v1408 = vsel %vm1391, %v1371, %v1372
        %v1409 = vsel %vm1391, %v1370, %v1371
        %v1410 = vsel %vm1391, %v1369, %v1370
        %v1411 = vsel %vm1391, %v1368, %v1369
        %v1412 = vsel %vm1391, %v1367, %v1368
        %v1413 = vsel %vm1391, %v1366, %v1367
        %v1414 = vsel %vm1391, %v1365, %v1366
        %v1415 = vsel %vm1391, %v1364, %v1365
        %v1416 = vsel %vm1391, %v1363, %v1364
        %v1417 = vsel %vm1391, %v1362, %v1363
        %v1418 = vsel %vm1391, %v1361, %v1362
        %v1419 = vsel %vm1391, %v1360, %v1361
        %v1420 = vsel %vm1391, %v1359, %v1360
        %v1421 = vsel %vm1391, %v1358, %v1359
        %v1422 = vsel %vm1391, %v1357, %v1358
        %v1423 = vsel %vm1391, %v1356, %v1357
        %v1424 = vsel %vm1391, %v1355, %v1356
        %v1425 = vsel %vm1391, %v1354, %v1355
        %v1426 = vsel %vm1391, %v1353, %v1354
        %v1427 = vsel %vm1391, %v1352, %v1353
        %v1428 = vsel %vm1391, %v1351, %v1352
        %v1429 = vsel %vm1391, %v1350, %v1351
        %v1430 = vsel %vm1391, %v1349, %v1350
        %v1431 = vsel %vm1391, %v1348, %v1349
        %v1432 = vsel %vm1391, %v1388, %v1348
        %v1433 = vrot.slane %v1307, 6
        %v1434 = vrot.slane %v1308, 6
        %v1435 = vrot.slane %v1309, 6
        %v1436 = vrot.slane %v1310, 6
        %v1437 = vrot.slane %v1311, 6
        %v1438 = vrot.slane %v1312, 6
        %v1439 = vrot.slane %v1313, 6
        %v1440 = vrot.slane %v1314, 6
        %v1441 = vrot.slane %v1315, 6
        %v1442 = vrot.slane %v1316, 6
        %v1443 = vrot.slane %v1317, 6
        %v1444 = vrot.slane %v1318, 6
        %v1445 = vrot.slane %v1319, 6
        %v1446 = vrot.slane %v1320, 6
        %v1447 = vrot.slane %v1321, 6
        %v1448 = vrot.slane %v1322, 6
        %v1449 = vrot.slane %v1323, 6
        %v1450 = vrot.slane %v1324, 6
        %v1451 = vrot.slane %v1325, 6
        %v1452 = vrot.slane %v1326, 6
        %v1453 = vrot.slane %v1327, 6
        %v1454 = vrot.slane %v1328, 6
        %v1455 = vrot.slane %v1329, 6
        %v1456 = vrot.slane %v1330, 6
        %v1457 = vrot.slane %v1331, 6
        %v1458 = vrot.slane %v1332, 6
        %v1459 = vrot.slane %v1333, 6
        %v1460 = vrot.slane %v1334, 6
        %v1461 = vrot.slane %v1335, 6
        %v1462 = vrot.slane %v1336, 6
        %v1463 = vrot.slane %v1337, 6
        %v1464 = vrot.slane %v1338, 6
        %v1465 = vrot.slane %v1339, 6
        %v1466 = vrot.slane %v1340, 6
        %v1467 = vrot.slane %v1341, 6
        %v1468 = vrot.slane %v1342, 6
        %v1469 = vrot.slane %v1343, 6
        %v1470 = vrot.slane %v1344, 6
        %v1471 = vrot.slane %v1345, 6
        %v1472 = vrot.slane %v1346, 6
        %v1473 = vrot.slane %v1347, 6
        %vm1474 = vcmp.lt.s32.totalorder %v1390, 2
        %v1475 = vsel %vm1474, %v1472, %v1473
        %v1476 = vsel %vm1474, %v1471, %v1472
        %v1477 = vsel %vm1474, %v1470, %v1471
        %v1478 = vsel %vm1474, %v1469, %v1470
        %v1479 = vsel %vm1474, %v1468, %v1469
        %v1480 = vsel %vm1474, %v1467, %v1468
        %v1481 = vsel %vm1474, %v1466, %v1467
        %v1482 = vsel %vm1474, %v1465, %v1466
        %v1483 = vsel %vm1474, %v1464, %v1465
        %v1484 = vsel %vm1474, %v1463, %v1464
        %v1485 = vsel %vm1474, %v1462, %v1463
        %v1486 = vsel %vm1474, %v1461, %v1462
        %v1487 = vsel %vm1474, %v1460, %v1461
        %v1488 = vsel %vm1474, %v1459, %v1460
        %v1489 = vsel %vm1474, %v1458, %v1459
        %v1490 = vsel %vm1474, %v1457, %v1458
        %v1491 = vsel %vm1474, %v1456, %v1457
        %v1492 = vsel %vm1474, %v1455, %v1456
        %v1493 = vsel %vm1474, %v1454, %v1455
        %v1494 = vsel %vm1474, %v1453, %v1454
        %v1495 = vsel %vm1474, %v1452, %v1453
        %v1496 = vsel %vm1474, %v1451, %v1452
        %v1497 = vsel %vm1474, %v1450, %v1451
        %v1498 = vsel %vm1474, %v1449, %v1450
        %v1499 = vsel %vm1474, %v1448, %v1449
        %v1500 = vsel %vm1474, %v1447, %v1448
        %v1501 = vsel %vm1474, %v1446, %v1447
        %v1502 = vsel %vm1474, %v1445, %v1446
        %v1503 = vsel %vm1474, %v1444, %v1445
        %v1504 = vsel %vm1474, %v1443, %v1444
        %v1505 = vsel %vm1474, %v1442, %v1443
        %v1506 = vsel %vm1474, %v1441, %v1442
        %v1507 = vsel %vm1474, %v1440, %v1441
        %v1508 = vsel %vm1474, %v1439, %v1440
        %v1509 = vsel %vm1474, %v1438, %v1439
        %v1510 = vsel %vm1474, %v1437, %v1438
        %v1511 = vsel %vm1474, %v1436, %v1437
        %v1512 = vsel %vm1474, %v1435, %v1436
        %v1513 = vsel %vm1474, %v1434, %v1435
        %v1514 = vsel %vm1474, %v1433, %v1434
        %v1515 = vsel %vm1474, %v1473, %v1433
        %v1516 = vrot.slane %v1307, 7
        %v1517 = vrot.slane %v1308, 7
        %v1518 = vrot.slane %v1309, 7
        %v1519 = vrot.slane %v1310, 7
        %v1520 = vrot.slane %v1311, 7
        %v1521 = vrot.slane %v1312, 7
        %v1522 = vrot.slane %v1313, 7
        %v1523 = vrot.slane %v1314, 7
        %v1524 = vrot.slane %v1315, 7
        %v1525 = vrot.slane %v1316, 7
        %v1526 = vrot.slane %v1317, 7
        %v1527 = vrot.slane %v1318, 7
        %v1528 = vrot.slane %v1319, 7
        %v1529 = vrot.slane %v1320, 7
        %v1530 = vrot.slane %v1321, 7
        %v1531 = vrot.slane %v1322, 7
        %v1532 = vrot.slane %v1323, 7
        %v1533 = vrot.slane %v1324, 7
        %v1534 = vrot.slane %v1325, 7
        %v1535 = vrot.slane %v1326, 7
        %v1536 = vrot.slane %v1327, 7
        %v1537 = vrot.slane %v1328, 7
        %v1538 = vrot.slane %v1329, 7
        %v1539 = vrot.slane %v1330, 7
        %v1540 = vrot.slane %v1331, 7
        %v1541 = vrot.slane %v1332, 7
        %v1542 = vrot.slane %v1333, 7
        %v1543 = vrot.slane %v1334, 7
        %v1544 = vrot.slane %v1335, 7
        %v1545 = vrot.slane %v1336, 7
        %v1546 = vrot.slane %v1337, 7
        %v1547 = vrot.slane %v1338, 7
        %v1548 = vrot.slane %v1339, 7
        %v1549 = vrot.slane %v1340, 7
        %v1550 = vrot.slane %v1341, 7
        %v1551 = vrot.slane %v1342, 7
        %v1552 = vrot.slane %v1343, 7
        %v1553 = vrot.slane %v1344, 7
        %v1554 = vrot.slane %v1345, 7
        %v1555 = vrot.slane %v1346, 7
        %v1556 = vrot.slane %v1347, 7
        %vm1557 = vcmp.lt.s32.totalorder %v1390, 1
        %v1558 = vsel %vm1557, %v1555, %v1556
        %v1559 = vsel %vm1557, %v1554, %v1555
        %v1560 = vsel %vm1557, %v1553, %v1554
        %v1561 = vsel %vm1557, %v1552, %v1553
        %v1562 = vsel %vm1557, %v1551, %v1552
        %v1563 = vsel %vm1557, %v1550, %v1551
        %v1564 = vsel %vm1557, %v1549, %v1550
        %v1565 = vsel %vm1557, %v1548, %v1549
        %v1566 = vsel %vm1557, %v1547, %v1548
        %v1567 = vsel %vm1557, %v1546, %v1547
        %v1568 = vsel %vm1557, %v1545, %v1546
        %v1569 = vsel %vm1557, %v1544, %v1545
        %v1570 = vsel %vm1557, %v1543, %v1544
        %v1571 = vsel %vm1557, %v1542, %v1543
        %v1572 = vsel %vm1557, %v1541, %v1542
        %v1573 = vsel %vm1557, %v1540, %v1541
        %v1574 = vsel %vm1557, %v1539, %v1540
        %v1575 = vsel %vm1557, %v1538, %v1539
        %v1576 = vsel %vm1557, %v1537, %v1538
        %v1577 = vsel %vm1557, %v1536, %v1537
        %v1578 = vsel %vm1557, %v1535, %v1536
        %v1579 = vsel %vm1557, %v1534, %v1535
        %v1580 = vsel %vm1557, %v1533, %v1534
        %v1581 = vsel %vm1557, %v1532, %v1533
        %v1582 = vsel %vm1557, %v1531, %v1532
        %v1583 = vsel %vm1557, %v1530, %v1531
        %v1584 = vsel %vm1557, %v1529, %v1530
        %v1585 = vsel %vm1557, %v1528, %v1529
        %v1586 = vsel %vm1557, %v1527, %v1528
        %v1587 = vsel %vm1557, %v1526, %v1527
        %v1588 = vsel %vm1557, %v1525, %v1526
        %v1589 = vsel %vm1557, %v1524, %v1525
        %v1590 = vsel %vm1557, %v1523, %v1524
        %v1591 = vsel %vm1557, %v1522, %v1523
        %v1592 = vsel %vm1557, %v1521, %v1522
        %v1593 = vsel %vm1557, %v1520, %v1521
        %v1594 = vsel %vm1557, %v1519, %v1520
        %v1595 = vsel %vm1557, %v1518, %v1519
        %v1596 = vsel %vm1557, %v1517, %v1518
        %v1597 = vsel %vm1557, %v1516, %v1517
        %v1598 = vsel %vm1557, %v1556, %v1516
        %v1599 = vrot.slane %v1307, 1
        %v1600 = vrot.slane %v1308, 1
        %v1601 = vrot.slane %v1309, 1
        %v1602 = vrot.slane %v1310, 1
        %v1603 = vrot.slane %v1311, 1
        %v1604 = vrot.slane %v1312, 1
        %v1605 = vrot.slane %v1313, 1
        %v1606 = vrot.slane %v1314, 1
        %v1607 = vrot.slane %v1315, 1
        %v1608 = vrot.slane %v1316, 1
        %v1609 = vrot.slane %v1317, 1
        %v1610 = vrot.slane %v1318, 1
        %v1611 = vrot.slane %v1319, 1
        %v1612 = vrot.slane %v1320, 1
        %v1613 = vrot.slane %v1321, 1
        %v1614 = vrot.slane %v1322, 1
        %v1615 = vrot.slane %v1323, 1
        %v1616 = vrot.slane %v1324, 1
        %v1617 = vrot.slane %v1325, 1
        %v1618 = vrot.slane %v1326, 1
        %v1619 = vrot.slane %v1327, 1
        %v1620 = vrot.slane %v1328, 1
        %v1621 = vrot.slane %v1329, 1
        %v1622 = vrot.slane %v1330, 1
        %v1623 = vrot.slane %v1331, 1
        %v1624 = vrot.slane %v1332, 1
        %v1625 = vrot.slane %v1333, 1
        %v1626 = vrot.slane %v1334, 1
        %v1627 = vrot.slane %v1335, 1
        %v1628 = vrot.slane %v1336, 1
        %v1629 = vrot.slane %v1337, 1
        %v1630 = vrot.slane %v1338, 1
        %v1631 = vrot.slane %v1339, 1
        %v1632 = vrot.slane %v1340, 1
        %v1633 = vrot.slane %v1341, 1
        %v1634 = vrot.slane %v1342, 1
        %v1635 = vrot.slane %v1343, 1
        %v1636 = vrot.slane %v1344, 1
        %v1637 = vrot.slane %v1345, 1
        %v1638 = vrot.slane %v1346, 1
        %v1639 = vrot.slane %v1347, 1
        %vm1640 = vcmp.lt.s32.totalorder %v1390, 7
        %v1641 = vsel %vm1640, %v1638, %v1639
        %v1642 = vsel %vm1640, %v1637, %v1638
        %v1643 = vsel %vm1640, %v1636, %v1637
        %v1644 = vsel %vm1640, %v1635, %v1636
        %v1645 = vsel %vm1640, %v1634, %v1635
        %v1646 = vsel %vm1640, %v1633, %v1634
        %v1647 = vsel %vm1640, %v1632, %v1633
        %v1648 = vsel %vm1640, %v1631, %v1632
        %v1649 = vsel %vm1640, %v1630, %v1631
        %v1650 = vsel %vm1640, %v1629, %v1630
        %v1651 = vsel %vm1640, %v1628, %v1629
        %v1652 = vsel %vm1640, %v1627, %v1628
        %v1653 = vsel %vm1640, %v1626, %v1627
        %v1654 = vsel %vm1640, %v1625, %v1626
        %v1655 = vsel %vm1640, %v1624, %v1625
        %v1656 = vsel %vm1640, %v1623, %v1624
        %v1657 = vsel %vm1640, %v1622, %v1623
        %v1658 = vsel %vm1640, %v1621, %v1622
        %v1659 = vsel %vm1640, %v1620, %v1621
        %v1660 = vsel %vm1640, %v1619, %v1620
        %v1661 = vsel %vm1640, %v1618, %v1619
        %v1662 = vsel %vm1640, %v1617, %v1618
        %v1663 = vsel %vm1640, %v1616, %v1617
        %v1664 = vsel %vm1640, %v1615, %v1616
        %v1665 = vsel %vm1640, %v1614, %v1615
        %v1666 = vsel %vm1640, %v1613, %v1614
        %v1667 = vsel %vm1640, %v1612, %v1613
        %v1668 = vsel %vm1640, %v1611, %v1612
        %v1669 = vsel %vm1640, %v1610, %v1611
        %v1670 = vsel %vm1640, %v1609, %v1610
        %v1671 = vsel %vm1640, %v1608, %v1609
        %v1672 = vsel %vm1640, %v1607, %v1608
        %v1673 = vsel %vm1640, %v1606, %v1607
        %v1674 = vsel %vm1640, %v1605, %v1606
        %v1675 = vsel %vm1640, %v1604, %v1605
        %v1676 = vsel %vm1640, %v1603, %v1604
        %v1677 = vsel %vm1640, %v1602, %v1603
        %v1678 = vsel %vm1640, %v1601, %v1602
        %v1679 = vsel %vm1640, %v1600, %v1601
        %v1680 = vsel %vm1640, %v1599, %v1600
        %v1681 = vsel %vm1640, %v1639, %v1599
        %v1682 = vrot.slane %v1307, 2
        %v1683 = vrot.slane %v1308, 2
        %v1684 = vrot.slane %v1309, 2
        %v1685 = vrot.slane %v1310, 2
        %v1686 = vrot.slane %v1311, 2
        %v1687 = vrot.slane %v1312, 2
        %v1688 = vrot.slane %v1313, 2
        %v1689 = vrot.slane %v1314, 2
        %v1690 = vrot.slane %v1315, 2
        %v1691 = vrot.slane %v1316, 2
        %v1692 = vrot.slane %v1317, 2
        %v1693 = vrot.slane %v1318, 2
        %v1694 = vrot.slane %v1319, 2
        %v1695 = vrot.slane %v1320, 2
        %v1696 = vrot.slane %v1321, 2
        %v1697 = vrot.slane %v1322, 2
        %v1698 = vrot.slane %v1323, 2
        %v1699 = vrot.slane %v1324, 2
        %v1700 = vrot.slane %v1325, 2
        %v1701 = vrot.slane %v1326, 2
        %v1702 = vrot.slane %v1327, 2
        %v1703 = vrot.slane %v1328, 2
        %v1704 = vrot.slane %v1329, 2
        %v1705 = vrot.slane %v1330, 2
        %v1706 = vrot.slane %v1331, 2
        %v1707 = vrot.slane %v1332, 2
        %v1708 = vrot.slane %v1333, 2
        %v1709 = vrot.slane %v1334, 2
        %v1710 = vrot.slane %v1335, 2
        %v1711 = vrot.slane %v1336, 2
        %v1712 = vrot.slane %v1337, 2
        %v1713 = vrot.slane %v1338, 2
        %v1714 = vrot.slane %v1339, 2
        %v1715 = vrot.slane %v1340, 2
        %v1716 = vrot.slane %v1341, 2
        %v1717 = vrot.slane %v1342, 2
        %v1718 = vrot.slane %v1343, 2
        %v1719 = vrot.slane %v1344, 2
        %v1720 = vrot.slane %v1345, 2
        %v1721 = vrot.slane %v1346, 2
        %v1722 = vrot.slane %v1347, 2
        %vm1723 = vcmp.lt.s32.totalorder %v1390, 6
        %v1724 = vsel %vm1723, %v1721, %v1722
        %v1725 = vsel %vm1723, %v1720, %v1721
        %v1726 = vsel %vm1723, %v1719, %v1720
        %v1727 = vsel %vm1723, %v1718, %v1719
        %v1728 = vsel %vm1723, %v1717, %v1718
        %v1729 = vsel %vm1723, %v1716, %v1717
        %v1730 = vsel %vm1723, %v1715, %v1716
        %v1731 = vsel %vm1723, %v1714, %v1715
        %v1732 = vsel %vm1723, %v1713, %v1714
        %v1733 = vsel %vm1723, %v1712, %v1713
        %v1734 = vsel %vm1723, %v1711, %v1712
        %v1735 = vsel %vm1723, %v1710, %v1711
        %v1736 = vsel %vm1723, %v1709, %v1710
        %v1737 = vsel %vm1723, %v1708, %v1709
        %v1738 = vsel %vm1723, %v1707, %v1708
        %v1739 = vsel %vm1723, %v1706, %v1707
        %v1740 = vsel %vm1723, %v1705, %v1706
        %v1741 = vsel %vm1723, %v1704, %v1705
        %v1742 = vsel %vm1723, %v1703, %v1704
        %v1743 = vsel %vm1723, %v1702, %v1703
        %v1744 = vsel %vm1723, %v1701, %v1702
        %v1745 = vsel %vm1723, %v1700, %v1701
        %v1746 = vsel %vm1723, %v1699, %v1700
        %v1747 = vsel %vm1723, %v1698, %v1699
        %v1748 = vsel %vm1723, %v1697, %v1698
        %v1749 = vsel %vm1723, %v1696, %v1697
        %v1750 = vsel %vm1723, %v1695, %v1696
        %v1751 = vsel %vm1723, %v1694, %v1695
        %v1752 = vsel %vm1723, %v1693, %v1694
        %v1753 = vsel %vm1723, %v1692, %v1693
        %v1754 = vsel %vm1723, %v1691, %v1692
        %v1755 = vsel %vm1723, %v1690, %v1691
        %v1756 = vsel %vm1723, %v1689, %v1690
        %v1757 = vsel %vm1723, %v1688, %v1689
        %v1758 = vsel %vm1723, %v1687, %v1688
        %v1759 = vsel %vm1723, %v1686, %v1687
        %v1760 = vsel %vm1723, %v1685, %v1686
        %v1761 = vsel %vm1723, %v1684, %v1685
        %v1762 = vsel %vm1723, %v1683, %v1684
        %v1763 = vsel %vm1723, %v1682, %v1683
        %v1764 = vsel %vm1723, %v1722, %v1682
        %v1765 = vrot.slane %v1307, 3
        %v1766 = vrot.slane %v1308, 3
        %v1767 = vrot.slane %v1309, 3
        %v1768 = vrot.slane %v1310, 3
        %v1769 = vrot.slane %v1311, 3
        %v1770 = vrot.slane %v1312, 3
        %v1771 = vrot.slane %v1313, 3
        %v1772 = vrot.slane %v1314, 3
        %v1773 = vrot.slane %v1315, 3
        %v1774 = vrot.slane %v1316, 3
        %v1775 = vrot.slane %v1317, 3
        %v1776 = vrot.slane %v1318, 3
        %v1777 = vrot.slane %v1319, 3
        %v1778 = vrot.slane %v1320, 3
        %v1779 = vrot.slane %v1321, 3
        %v1780 = vrot.slane %v1322, 3
        %v1781 = vrot.slane %v1323, 3
        %v1782 = vrot.slane %v1324, 3
        %v1783 = vrot.slane %v1325, 3
        %v1784 = vrot.slane %v1326, 3
        %v1785 = vrot.slane %v1327, 3
        %v1786 = vrot.slane %v1328, 3
        %v1787 = vrot.slane %v1329, 3
        %v1788 = vrot.slane %v1330, 3
        %v1789 = vrot.slane %v1331, 3
        %v1790 = vrot.slane %v1332, 3
        %v1791 = vrot.slane %v1333, 3
        %v1792 = vrot.slane %v1334, 3
        %v1793 = vrot.slane %v1335, 3
        %v1794 = vrot.slane %v1336, 3
        %v1795 = vrot.slane %v1337, 3
        %v1796 = vrot.slane %v1338, 3
        %v1797 = vrot.slane %v1339, 3
        %v1798 = vrot.slane %v1340, 3
        %v1799 = vrot.slane %v1341, 3
        %v1800 = vrot.slane %v1342, 3
        %v1801 = vrot.slane %v1343, 3
        %v1802 = vrot.slane %v1344, 3
        %v1803 = vrot.slane %v1345, 3
        %v1804 = vrot.slane %v1346, 3
        %v1805 = vrot.slane %v1347, 3
        %vm1806 = vcmp.lt.s32.totalorder %v1390, 5
        %v1807 = vsel %vm1806, %v1804, %v1805
        %v1808 = vsel %vm1806, %v1803, %v1804
        %v1809 = vsel %vm1806, %v1802, %v1803
        %v1810 = vsel %vm1806, %v1801, %v1802
        %v1811 = vsel %vm1806, %v1800, %v1801
        %v1812 = vsel %vm1806, %v1799, %v1800
        %v1813 = vsel %vm1806, %v1798, %v1799
        %v1814 = vsel %vm1806, %v1797, %v1798
        %v1815 = vsel %vm1806, %v1796, %v1797
        %v1816 = vsel %vm1806, %v1795, %v1796
        %v1817 = vsel %vm1806, %v1794, %v1795
        %v1818 = vsel %vm1806, %v1793, %v1794
        %v1819 = vsel %vm1806, %v1792, %v1793
        %v1820 = vsel %vm1806, %v1791, %v1792
        %v1821 = vsel %vm1806, %v1790, %v1791
        %v1822 = vsel %vm1806, %v1789, %v1790
        %v1823 = vsel %vm1806, %v1788, %v1789
        %v1824 = vsel %vm1806, %v1787, %v1788
        %v1825 = vsel %vm1806, %v1786, %v1787
        %v1826 = vsel %vm1806, %v1785, %v1786
        %v1827 = vsel %vm1806, %v1784, %v1785
        %v1828 = vsel %vm1806, %v1783, %v1784
        %v1829 = vsel %vm1806, %v1782, %v1783
        %v1830 = vsel %vm1806, %v1781, %v1782
        %v1831 = vsel %vm1806, %v1780, %v1781
        %v1832 = vsel %vm1806, %v1779, %v1780
        %v1833 = vsel %vm1806, %v1778, %v1779
        %v1834 = vsel %vm1806, %v1777, %v1778
        %v1835 = vsel %vm1806, %v1776, %v1777
        %v1836 = vsel %vm1806, %v1775, %v1776
        %v1837 = vsel %vm1806, %v1774, %v1775
        %v1838 = vsel %vm1806, %v1773, %v1774
        %v1839 = vsel %vm1806, %v1772, %v1773
        %v1840 = vsel %vm1806, %v1771, %v1772
        %v1841 = vsel %vm1806, %v1770, %v1771
        %v1842 = vsel %vm1806, %v1769, %v1770
        %v1843 = vsel %vm1806, %v1768, %v1769
        %v1844 = vsel %vm1806, %v1767, %v1768
        %v1845 = vsel %vm1806, %v1766, %v1767
        %v1846 = vsel %vm1806, %v1765, %v1766
        %v1847 = vsel %vm1806, %v1805, %v1765
        %v1848 = vpack.c.bf16 %v1392, %v1393
        %v1849 = vpack.c.bf16 %v1475, %v1476
        %v1850 = vpack.c.bf16 %v1558, %v1559
        %v1851 = vpack.c.bf16 %v1597, %v1598
        %v1852 = vpack.c.bf16 %v1308, %v1307
        %v1853 = vpack.c.bf16 %v1679, %v1680
        %v1854 = vpack.c.bf16 %v1677, %v1678
        %v1855 = vpack.c.bf16 %v1760, %v1761
        %v1856 = vpack.c.bf16 %v1843, %v1844
        %v1857 = vpack.c.bf16 %v1431, %v1432
        %v1858 = vpack.c.bf16 %v1514, %v1515
        %v1859 = vpack.c.bf16 %v1595, %v1596
        %v1860 = vpack.c.bf16 %v1310, %v1309
        %v1861 = vpack.c.bf16 %v1675, %v1676
        %v1862 = vpack.c.bf16 %v1758, %v1759
        %v1863 = vpack.c.bf16 %v1841, %v1842
        %v1864 = vpack.c.bf16 %v1429, %v1430
        %v1865 = vpack.c.bf16 %v1512, %v1513
        %v1866 = vpack.c.bf16 %v1593, %v1594
        %v1867 = vpack.c.bf16 %v1312, %v1311
        %v1868 = vpack.c.bf16 %v1673, %v1674
        %v1869 = vpack.c.bf16 %v1756, %v1757
        %v1870 = vpack.c.bf16 %v1839, %v1840
        %v1871 = vpack.c.bf16 %v1427, %v1428
        %v1872 = vpack.c.bf16 %v1510, %v1511
        %v1873 = vpack.c.bf16 %v1591, %v1592
        %v1874 = vpack.c.bf16 %v1314, %v1313
        %v1875 = vpack.c.bf16 %v1671, %v1672
        %v1876 = vpack.c.bf16 %v1754, %v1755
        %v1877 = vpack.c.bf16 %v1837, %v1838
        %v1878 = vpack.c.bf16 %v1425, %v1426
        %v1879 = vpack.c.bf16 %v1508, %v1509
        %v1880 = vpack.c.bf16 %v1589, %v1590
        %v1881 = vpack.c.bf16 %v1316, %v1315
        %v1882 = vpack.c.bf16 %v1669, %v1670
        %v1883 = vpack.c.bf16 %v1752, %v1753
        %v1884 = vpack.c.bf16 %v1835, %v1836
        %v1885 = vpack.c.bf16 %v1423, %v1424
        %v1886 = vpack.c.bf16 %v1506, %v1507
        %v1887 = vpack.c.bf16 %v1587, %v1588
        %v1888 = vpack.c.bf16 %v1318, %v1317
        %v1889 = vpack.c.bf16 %v1667, %v1668
        %v1890 = vpack.c.bf16 %v1750, %v1751
        %v1891 = vpack.c.bf16 %v1833, %v1834
        %v1892 = vpack.c.bf16 %v1421, %v1422
        %v1893 = vpack.c.bf16 %v1504, %v1505
        %v1894 = vpack.c.bf16 %v1585, %v1586
        %v1895 = vpack.c.bf16 %v1320, %v1319
        %v1896 = vpack.c.bf16 %v1665, %v1666
        %v1897 = vpack.c.bf16 %v1748, %v1749
        %v1898 = vpack.c.bf16 %v1831, %v1832
        %v1899 = vpack.c.bf16 %v1419, %v1420
        %v1900 = vpack.c.bf16 %v1502, %v1503
        %v1901 = vpack.c.bf16 %v1583, %v1584
        %v1902 = vpack.c.bf16 %v1322, %v1321
        %v1903 = vpack.c.bf16 %v1663, %v1664
        %v1904 = vpack.c.bf16 %v1746, %v1747
        %v1905 = vpack.c.bf16 %v1829, %v1830
        %v1906 = vpack.c.bf16 %v1417, %v1418
        %v1907 = vpack.c.bf16 %v1500, %v1501
        %v1908 = vpack.c.bf16 %v1581, %v1582
        %v1909 = vpack.c.bf16 %v1324, %v1323
        %v1910 = vpack.c.bf16 %v1661, %v1662
        %v1911 = vpack.c.bf16 %v1744, %v1745
        %v1912 = vpack.c.bf16 %v1827, %v1828
        %v1913 = vpack.c.bf16 %v1415, %v1416
        %v1914 = vpack.c.bf16 %v1498, %v1499
        %v1915 = vpack.c.bf16 %v1579, %v1580
        %v1916 = vpack.c.bf16 %v1326, %v1325
        %v1917 = vpack.c.bf16 %v1659, %v1660
        %v1918 = vpack.c.bf16 %v1742, %v1743
        %v1919 = vpack.c.bf16 %v1825, %v1826
        %v1920 = vpack.c.bf16 %v1413, %v1414
        %v1921 = vpack.c.bf16 %v1496, %v1497
        %v1922 = vpack.c.bf16 %v1577, %v1578
        %v1923 = vpack.c.bf16 %v1328, %v1327
        %v1924 = vpack.c.bf16 %v1657, %v1658
        %v1925 = vpack.c.bf16 %v1740, %v1741
        %v1926 = vpack.c.bf16 %v1823, %v1824
        %v1927 = vpack.c.bf16 %v1411, %v1412
        %v1928 = vpack.c.bf16 %v1494, %v1495
        %v1929 = vpack.c.bf16 %v1575, %v1576
        %v1930 = vpack.c.bf16 %v1330, %v1329
        %v1931 = vpack.c.bf16 %v1655, %v1656
        %v1932 = vpack.c.bf16 %v1738, %v1739
        %v1933 = vpack.c.bf16 %v1821, %v1822
        %v1934 = vpack.c.bf16 %v1409, %v1410
        %v1935 = vpack.c.bf16 %v1492, %v1493
        %v1936 = vpack.c.bf16 %v1573, %v1574
        %v1937 = vpack.c.bf16 %v1332, %v1331
        %v1938 = vpack.c.bf16 %v1653, %v1654
        %v1939 = vpack.c.bf16 %v1736, %v1737
        %v1940 = vpack.c.bf16 %v1819, %v1820
        %v1941 = vpack.c.bf16 %v1407, %v1408
        %v1942 = vpack.c.bf16 %v1490, %v1491
        %v1943 = vpack.c.bf16 %v1571, %v1572
        %v1944 = vpack.c.bf16 %v1334, %v1333
        %v1945 = vpack.c.bf16 %v1651, %v1652
        %v1946 = vpack.c.bf16 %v1734, %v1735
        %v1947 = vpack.c.bf16 %v1817, %v1818
        %v1948 = vpack.c.bf16 %v1405, %v1406
        %v1949 = vpack.c.bf16 %v1488, %v1489
        %v1950 = vpack.c.bf16 %v1569, %v1570
        %v1951 = vpack.c.bf16 %v1336, %v1335
        %v1952 = vpack.c.bf16 %v1649, %v1650
        %v1953 = vpack.c.bf16 %v1732, %v1733
        %v1954 = vpack.c.bf16 %v1815, %v1816
        %v1955 = vpack.c.bf16 %v1403, %v1404
        %v1956 = vpack.c.bf16 %v1486, %v1487
        %v1957 = vpack.c.bf16 %v1567, %v1568
        %v1958 = vpack.c.bf16 %v1338, %v1337
        %v1959 = vpack.c.bf16 %v1647, %v1648
        %v1960 = vpack.c.bf16 %v1730, %v1731
        %v1961 = vpack.c.bf16 %v1813, %v1814
        %v1962 = vpack.c.bf16 %v1401, %v1402
        %v1963 = vpack.c.bf16 %v1484, %v1485
        %v1964 = vpack.c.bf16 %v1565, %v1566
        %v1965 = vpack.c.bf16 %v1340, %v1339
        %v1966 = vpack.c.bf16 %v1645, %v1646
        %v1967 = vpack.c.bf16 %v1728, %v1729
        %v1968 = vpack.c.bf16 %v1811, %v1812
        %v1969 = vpack.c.bf16 %v1399, %v1400
        %v1970 = vpack.c.bf16 %v1482, %v1483
        %v1971 = vpack.c.bf16 %v1563, %v1564
        %v1972 = vpack.c.bf16 %v1342, %v1341
        %v1973 = vpack.c.bf16 %v1643, %v1644
        %v1974 = vpack.c.bf16 %v1726, %v1727
        %v1975 = vpack.c.bf16 %v1809, %v1810
        %v1976 = vpack.c.bf16 %v1397, %v1398
        %v1977 = vpack.c.bf16 %v1480, %v1481
        %v1978 = vpack.c.bf16 %v1561, %v1562
        %v1979 = vpack.c.bf16 %v1344, %v1343
        %v1980 = vpack.c.bf16 %v1641, %v1642
        %v1981 = vpack.c.bf16 %v1724, %v1725
        %v1982 = vpack.c.bf16 %v1807, %v1808
        %v1983 = vpack.c.bf16 %v1395, %v1396
        %v1984 = vpack.c.bf16 %v1478, %v1479
        %v1985 = vpack.c.bf16 %v1559, %v1560
        %v1986 = vpack.c.bf16 %v1346, %v1345
        %v1987 = vpack.c.bf16 %v1680, %v1681
        %v1988 = vpack.c.bf16 %v1763, %v1764
        %v1989 = vpack.c.bf16 %v1846, %v1847
        %v1990 = vpack.c.bf16 %v1394, %v1394
        %v1991 = vpack.c.bf16 %v1477, %v1477
        %v1992 = vpack.c.bf16 %v1560, %v1560
        %v1993 = vpack.c.bf16 %v1558, %v1558
        %v1994 = vpack.c.bf16 %v1347, %v1347
        %v1995 = vpack.c.bf16 %v1681, %v1681
        %v1996 = vpack.c.bf16 %v1679, %v1679
        %v1997 = vpack.c.bf16 %v1762, %v1762
        %v1998 = vpack.c.bf16 %v1845, %v1845
        %v1999 = vld [vmem:[#allocation5] sm:$0xf]
        %v2000 = vld [vmem:[#allocation5 + $0x4] sm:$0xf]
        %v2001 = vld [vmem:[#allocation5 + $0x8] sm:$0xf]
        %v2002 = vld [vmem:[#allocation5 + $0xc] sm:$0xf]
        %v2003 = vld [vmem:[#allocation5 + $0x10] sm:$0xf]
        %v2004 = vld [vmem:[#allocation5 + $0x14] sm:$0xf]
        %v2005 = vld [vmem:[#allocation5 + $0x18] sm:$0xf]
        %v2006 = vld [vmem:[#allocation5 + $0x1c] sm:$0xf]
        %v2007 = vld [vmem:[#allocation5 + $0x20] sm:$0xf]
        %v2008 = vld [vmem:[#allocation5 + $0x24] sm:$0xf]
        %v2009 = vld [vmem:[#allocation5 + $0x28] sm:$0xf]
        %v2010 = vld [vmem:[#allocation5 + $0x2c] sm:$0xf]
        %v2011 = vld [vmem:[#allocation5 + $0x30] sm:$0xf]
        %v2012 = vld [vmem:[#allocation5 + $0x34] sm:$0xf]
        %v2013 = vld [vmem:[#allocation5 + $0x38] sm:$0xf]
        %v2014 = vld [vmem:[#allocation5 + $0x3c] sm:$0xf]
        %v2015 = vld [vmem:[#allocation5 + $0x40] sm:$0xf]
        %v2016 = vld [vmem:[#allocation5 + $0x44] sm:$0xf]
        %v2017 = vld [vmem:[#allocation5 + $0x48] sm:$0xf]
        %v2018 = vld [vmem:[#allocation5 + $0x4c] sm:$0xf]
        %v2019 = vld [vmem:[#allocation5 + $0x50] sm:$0xf]
        %v2020 = vld [vmem:[#allocation5 + $0x54] sm:$0xf]
        %v2021 = vld [vmem:[#allocation5 + $0x58] sm:$0xf]
        %v2022 = vld [vmem:[#allocation5 + $0x5c] sm:$0xf]
        %v2023 = vld [vmem:[#allocation5 + $0x60] sm:$0xf]
        %v2024 = vld [vmem:[#allocation5 + $0x64] sm:$0xf]
        %v2025 = vld [vmem:[#allocation5 + $0x68] sm:$0xf]
        %v2026 = vld [vmem:[#allocation5 + $0x6c] sm:$0xf]
        %v2027 = vld [vmem:[#allocation5 + $0x70] sm:$0xf]
        %v2028 = vld [vmem:[#allocation5 + $0x74] sm:$0xf]
        %v2029 = vld [vmem:[#allocation5 + $0x78] sm:$0xf]
        %v2030 = vld [vmem:[#allocation5 + $0x7c] sm:$0xf]
        %v2031 = vld [vmem:[#allocation5 + $0x80] sm:$0xf]
        %v2032 = vld [vmem:[#allocation5 + $0x84] sm:$0xf]
        %v2033 = vld [vmem:[#allocation5 + $0x88] sm:$0xf]
        %v2034 = vld [vmem:[#allocation5 + $0x8c] sm:$0xf]
        %v2035 = vld [vmem:[#allocation5 + $0x90] sm:$0xf]
        %v2036 = vld [vmem:[#allocation5 + $0x94] sm:$0xf]
        %v2037 = vld [vmem:[#allocation5 + $0x98] sm:$0xf]
        %v2038 = vld [vmem:[#allocation5 + $0x9c] sm:$0xf]
        %v2039 = vld [vmem:[#allocation5 + $0xa0] sm:$0xf]
        %v2040 = vld [vmem:[#allocation5 + $0xa4] sm:$0xf]
        %v2041 = vld [vmem:[#allocation5 + $0xa8] sm:$0xf]
        %v2042 = vld [vmem:[#allocation5 + $0xac] sm:$0xf]
        %v2043 = vld [vmem:[#allocation5 + $0xb0] sm:$0xf]
        %v2044 = vld [vmem:[#allocation5 + $0xb4] sm:$0xf]
        %v2045 = vld [vmem:[#allocation5 + $0xb8] sm:$0xf]
        %v2046 = vld [vmem:[#allocation5 + $0xbc] sm:$0xf]
        %v2047 = vld [vmem:[#allocation5 + $0xc0] sm:$0xf]
        %v2048 = vld [vmem:[#allocation5 + $0xc4] sm:$0xf]
        %v2049 = vld [vmem:[#allocation5 + $0xc8] sm:$0xf]
        %v2050 = vld [vmem:[#allocation5 + $0xcc] sm:$0xf]
        %v2051 = vld [vmem:[#allocation5 + $0xd0] sm:$0xf]
        %v2052 = vld [vmem:[#allocation5 + $0xd4] sm:$0xf]
        %v2053 = vld [vmem:[#allocation5 + $0xd8] sm:$0xf]
        %v2054 = vld [vmem:[#allocation5 + $0xdc] sm:$0xf]
        %v2055 = vld [vmem:[#allocation5 + $0xe0] sm:$0xf]
        %v2056 = vld [vmem:[#allocation5 + $0xe4] sm:$0xf]
        %v2057 = vld [vmem:[#allocation5 + $0xe8] sm:$0xf]
        %v2058 = vld [vmem:[#allocation5 + $0xec] sm:$0xf]
        %v2059 = vld [vmem:[#allocation5 + $0xf0] sm:$0xf]
        %v2060 = vld [vmem:[#allocation5 + $0xf4] sm:$0xf]
        %v2061 = vld [vmem:[#allocation5 + $0xf8] sm:$0xf]
        %v2062 = vld [vmem:[#allocation5 + $0xfc] sm:$0xf]
        %v2063 = vld [vmem:[#allocation5 + $0x100] sm:$0xf]
        %v2064 = vld [vmem:[#allocation5 + $0x104] sm:$0xf]
        %v2065 = vld [vmem:[#allocation5 + $0x108] sm:$0xf]
        %v2066 = vld [vmem:[#allocation5 + $0x10c] sm:$0xf]
        %v2067 = vld [vmem:[#allocation5 + $0x110] sm:$0xf]
        %v2068 = vld [vmem:[#allocation5 + $0x114] sm:$0xf]
        %v2069 = vld [vmem:[#allocation5 + $0x118] sm:$0xf]
        %v2070 = vld [vmem:[#allocation5 + $0x11c] sm:$0xf]
        %v2071 = vld [vmem:[#allocation5 + $0x120] sm:$0xf]
        %v2072 = vld [vmem:[#allocation5 + $0x124] sm:$0xf]
        %v2073 = vld [vmem:[#allocation5 + $0x128] sm:$0xf]
        %v2074 = vld [vmem:[#allocation5 + $0x12c] sm:$0xf]
        %v2075 = vld [vmem:[#allocation5 + $0x130] sm:$0xf]
        %v2076 = vld [vmem:[#allocation5 + $0x134] sm:$0xf]
        %v2077 = vld [vmem:[#allocation5 + $0x138] sm:$0xf]
        %v2078 = vld [vmem:[#allocation5 + $0x13c] sm:$0xf]
        %v2079 = vld [vmem:[#allocation5 + $0x140] sm:$0xf]
        %v2080 = vld [vmem:[#allocation5 + $0x144] sm:$0xf]
        %v2081 = vld [vmem:[#allocation5 + $0x148] sm:$0xf]
        %v2082 = vld [vmem:[#allocation5 + $0x14c] sm:$0xf]
        %v2083 = vld [vmem:[#allocation5 + $0x150] sm:$0xf]
        %v2084 = vld [vmem:[#allocation5 + $0x154] sm:$0xf]
        %v2085 = vld [vmem:[#allocation5 + $0x158] sm:$0xf]
        %v2086 = vld [vmem:[#allocation5 + $0x15c] sm:$0xf]
        %v2087 = vld [vmem:[#allocation5 + $0x160] sm:$0xf]
        %v2088 = vld [vmem:[#allocation5 + $0x164] sm:$0xf]
        %v2089 = vld [vmem:[#allocation5 + $0x168] sm:$0xf]
        %v2090 = vld [vmem:[#allocation5 + $0x16c] sm:$0xf]
        %v2091 = vld [vmem:[#allocation5 + $0x170] sm:$0xf]
        %v2092 = vld [vmem:[#allocation5 + $0x174] sm:$0xf]
        %v2093 = vld [vmem:[#allocation5 + $0x178] sm:$0xf]
        %v2094 = vld [vmem:[#allocation5 + $0x17c] sm:$0xf]
        %v2095 = vld [vmem:[#allocation5 + $0x180] sm:$0xf]
        %v2096 = vld [vmem:[#allocation5 + $0x184] sm:$0xf]
        %v2097 = vld [vmem:[#allocation5 + $0x188] sm:$0xf]
        %v2098 = vld [vmem:[#allocation5 + $0x18c] sm:$0xf]
        %v2099 = vld [vmem:[#allocation5 + $0x190] sm:$0xf]
        %v2100 = vld [vmem:[#allocation5 + $0x194] sm:$0xf]
        %v2101 = vld [vmem:[#allocation5 + $0x198] sm:$0xf]
        %v2102 = vld [vmem:[#allocation5 + $0x19c] sm:$0xf]
        %v2103 = vld [vmem:[#allocation5 + $0x1a0] sm:$0xf]
        %v2104 = vld [vmem:[#allocation5 + $0x1a4] sm:$0xf]
        %v2105 = vld [vmem:[#allocation5 + $0x1a8] sm:$0xf]
        %v2106 = vld [vmem:[#allocation5 + $0x1ac] sm:$0xf]
        %v2107 = vld [vmem:[#allocation5 + $0x1b0] sm:$0xf]
        %v2108 = vld [vmem:[#allocation5 + $0x1b4] sm:$0xf]
        %v2109 = vld [vmem:[#allocation5 + $0x1b8] sm:$0xf]
        %v2110 = vld [vmem:[#allocation5 + $0x1bc] sm:$0xf]
        %v2111 = vld [vmem:[#allocation5 + $0x1c0] sm:$0xf]
        %v2112 = vld [vmem:[#allocation5 + $0x1c4] sm:$0xf]
        %v2113 = vld [vmem:[#allocation5 + $0x1c8] sm:$0xf]
        %v2114 = vld [vmem:[#allocation5 + $0x1cc] sm:$0xf]
        %v2115 = vld [vmem:[#allocation5 + $0x1d0] sm:$0xf]
        %v2116 = vld [vmem:[#allocation5 + $0x1d4] sm:$0xf]
        %v2117 = vld [vmem:[#allocation5 + $0x1d8] sm:$0xf]
        %v2118 = vld [vmem:[#allocation5 + $0x1dc] sm:$0xf]
        %v2119 = vld [vmem:[#allocation5 + $0x1e0] sm:$0xf]
        %v2120 = vld [vmem:[#allocation5 + $0x1e4] sm:$0xf]
        %v2121 = vld [vmem:[#allocation5 + $0x1e8] sm:$0xf]
        %v2122 = vld [vmem:[#allocation5 + $0x1ec] sm:$0xf]
        %v2123 = vld [vmem:[#allocation5 + $0x1f0] sm:$0xf]
        %v2124 = vld [vmem:[#allocation5 + $0x1f4] sm:$0xf]
        %v2125 = vld [vmem:[#allocation5 + $0x1f8] sm:$0xf]
        %v2126 = vld [vmem:[#allocation5 + $0x1fc] sm:$0xf]
        %v2127 = vld [vmem:[#allocation5 + $0x200] sm:$0xf]
        %v2128 = vld [vmem:[#allocation5 + $0x204] sm:$0xf]
        %v2129 = vld [vmem:[#allocation5 + $0x208] sm:$0xf]
        %v2130 = vld [vmem:[#allocation5 + $0x20c] sm:$0xf]
        %v2131 = vld [vmem:[#allocation5 + $0x210] sm:$0xf]
        %v2132 = vld [vmem:[#allocation5 + $0x214] sm:$0xf]
        %v2133 = vld [vmem:[#allocation5 + $0x218] sm:$0xf]
        %v2134 = vld [vmem:[#allocation5 + $0x21c] sm:$0xf]
        %v2135 = vld [vmem:[#allocation5 + $0x220] sm:$0xf]
        %v2136 = vld [vmem:[#allocation5 + $0x224] sm:$0xf]
        %v2137 = vld [vmem:[#allocation5 + $0x228] sm:$0xf]
        %v2138 = vld [vmem:[#allocation5 + $0x22c] sm:$0xf]
        %v2139 = vld [vmem:[#allocation5 + $0x230] sm:$0xf]
        %v2140 = vld [vmem:[#allocation5 + $0x234] sm:$0xf]
        %v2141 = vld [vmem:[#allocation5 + $0x238] sm:$0xf]
        %v2142 = vld [vmem:[#allocation5 + $0x23c] sm:$0xf]
        %v2287 = vunpack.c.l.b16 %v1999
        %v2288 = vunpack.c.l.b16 %v2000
        %v2289 = vunpack.c.l.b16 %v2001
        %v2290 = vunpack.c.l.b16 %v2002
        %v2291 = vunpack.c.l.b16 %v2003
        %v2292 = vunpack.c.l.b16 %v2004
        %v2293 = vunpack.c.l.b16 %v2005
        %v2294 = vunpack.c.l.b16 %v2006
        %v2295 = vunpack.c.l.b16 %v2007
        %v2296 = vunpack.c.l.b16 %v2008
        %v2297 = vunpack.c.l.b16 %v2009
        %v2298 = vunpack.c.l.b16 %v2010
        %v2299 = vunpack.c.l.b16 %v2011
        %v2300 = vunpack.c.l.b16 %v2012
        %v2301 = vunpack.c.l.b16 %v2013
        %v2302 = vunpack.c.l.b16 %v2014
        %v2303 = vunpack.c.l.b16 %v2015
        %v2304 = vunpack.c.l.b16 %v2016
        %v2305 = vunpack.c.l.b16 %v2017
        %v2306 = vunpack.c.l.b16 %v2018
        %v2307 = vunpack.c.l.b16 %v2019
        %v2308 = vunpack.c.l.b16 %v2020
        %v2309 = vunpack.c.l.b16 %v2021
        %v2310 = vunpack.c.l.b16 %v2022
        %v2311 = vunpack.c.l.b16 %v2023
        %v2312 = vunpack.c.l.b16 %v2024
        %v2313 = vunpack.c.l.b16 %v2025
        %v2314 = vunpack.c.l.b16 %v2026
        %v2315 = vunpack.c.l.b16 %v2027
        %v2316 = vunpack.c.l.b16 %v2028
        %v2317 = vunpack.c.l.b16 %v2029
        %v2318 = vunpack.c.l.b16 %v2030
        %v2319 = vunpack.c.l.b16 %v2031
        %v2320 = vunpack.c.l.b16 %v2032
        %v2321 = vunpack.c.l.b16 %v2033
        %v2322 = vunpack.c.l.b16 %v2034
        %v2323 = vunpack.c.l.b16 %v2035
        %v2324 = vunpack.c.l.b16 %v2036
        %v2325 = vunpack.c.l.b16 %v2037
        %v2326 = vunpack.c.l.b16 %v2038
        %v2327 = vunpack.c.l.b16 %v2039
        %v2328 = vunpack.c.l.b16 %v2040
        %v2329 = vunpack.c.l.b16 %v2041
        %v2330 = vunpack.c.l.b16 %v2042
        %v2331 = vunpack.c.l.b16 %v2043
        %v2332 = vunpack.c.l.b16 %v2044
        %v2333 = vunpack.c.l.b16 %v2045
        %v2334 = vunpack.c.l.b16 %v2046
        %v2335 = vunpack.c.l.b16 %v2047
        %v2336 = vunpack.c.l.b16 %v2048
        %v2337 = vunpack.c.l.b16 %v2049
        %v2338 = vunpack.c.l.b16 %v2050
        %v2339 = vunpack.c.l.b16 %v2051
        %v2340 = vunpack.c.l.b16 %v2052
        %v2341 = vunpack.c.l.b16 %v2053
        %v2342 = vunpack.c.l.b16 %v2054
        %v2343 = vunpack.c.l.b16 %v2055
        %v2344 = vunpack.c.l.b16 %v2056
        %v2345 = vunpack.c.l.b16 %v2057
        %v2346 = vunpack.c.l.b16 %v2058
        %v2347 = vunpack.c.l.b16 %v2059
        %v2348 = vunpack.c.l.b16 %v2060
        %v2349 = vunpack.c.l.b16 %v2061
        %v2350 = vunpack.c.l.b16 %v2062
        %v2351 = vunpack.c.l.b16 %v2063
        %v2352 = vunpack.c.l.b16 %v2064
        %v2353 = vunpack.c.l.b16 %v2065
        %v2354 = vunpack.c.l.b16 %v2066
        %v2355 = vunpack.c.l.b16 %v2067
        %v2356 = vunpack.c.l.b16 %v2068
        %v2357 = vunpack.c.l.b16 %v2069
        %v2358 = vunpack.c.l.b16 %v2070
        %v2359 = vunpack.c.l.b16 %v2071
        %v2360 = vunpack.c.l.b16 %v2072
        %v2361 = vunpack.c.l.b16 %v2073
        %v2362 = vunpack.c.l.b16 %v2074
        %v2363 = vunpack.c.l.b16 %v2075
        %v2364 = vunpack.c.l.b16 %v2076
        %v2365 = vunpack.c.l.b16 %v2077
        %v2366 = vunpack.c.l.b16 %v2078
        %v2367 = vunpack.c.l.b16 %v2079
        %v2368 = vunpack.c.l.b16 %v2080
        %v2369 = vunpack.c.l.b16 %v2081
        %v2370 = vunpack.c.l.b16 %v2082
        %v2371 = vunpack.c.l.b16 %v2083
        %v2372 = vunpack.c.l.b16 %v2084
        %v2373 = vunpack.c.l.b16 %v2085
        %v2374 = vunpack.c.l.b16 %v2086
        %v2375 = vunpack.c.l.b16 %v2087
        %v2376 = vunpack.c.l.b16 %v2088
        %v2377 = vunpack.c.l.b16 %v2089
        %v2378 = vunpack.c.l.b16 %v2090
        %v2379 = vunpack.c.l.b16 %v2091
        %v2380 = vunpack.c.l.b16 %v2092
        %v2381 = vunpack.c.l.b16 %v2093
        %v2382 = vunpack.c.l.b16 %v2094
        %v2383 = vunpack.c.l.b16 %v2095
        %v2384 = vunpack.c.l.b16 %v2096
        %v2385 = vunpack.c.l.b16 %v2097
        %v2386 = vunpack.c.l.b16 %v2098
        %v2387 = vunpack.c.l.b16 %v2099
        %v2388 = vunpack.c.l.b16 %v2100
        %v2389 = vunpack.c.l.b16 %v2101
        %v2390 = vunpack.c.l.b16 %v2102
        %v2391 = vunpack.c.l.b16 %v2103
        %v2392 = vunpack.c.l.b16 %v2104
        %v2393 = vunpack.c.l.b16 %v2105
        %v2394 = vunpack.c.l.b16 %v2106
        %v2395 = vunpack.c.l.b16 %v2107
        %v2396 = vunpack.c.l.b16 %v2108
        %v2397 = vunpack.c.l.b16 %v2109
        %v2398 = vunpack.c.l.b16 %v2110
        %v2399 = vunpack.c.l.b16 %v2111
        %v2400 = vunpack.c.l.b16 %v2112
        %v2401 = vunpack.c.l.b16 %v2113
        %v2402 = vunpack.c.l.b16 %v2114
        %v2403 = vunpack.c.l.b16 %v2115
        %v2404 = vunpack.c.l.b16 %v2116
        %v2405 = vunpack.c.l.b16 %v2117
        %v2406 = vunpack.c.l.b16 %v2118
        %v2407 = vunpack.c.l.b16 %v2119
        %v2408 = vunpack.c.l.b16 %v2120
        %v2409 = vunpack.c.l.b16 %v2121
        %v2410 = vunpack.c.l.b16 %v2122
        %v2411 = vunpack.c.l.b16 %v2123
        %v2412 = vunpack.c.l.b16 %v2124
        %v2413 = vunpack.c.l.b16 %v2125
        %v2414 = vunpack.c.l.b16 %v2126
        %v2415 = vunpack.c.l.b16 %v2127
        %v2416 = vunpack.c.l.b16 %v2128
        %v2417 = vunpack.c.l.b16 %v2129
        %v2418 = vunpack.c.l.b16 %v2130
        %v2419 = vunpack.c.l.b16 %v2131
        %v2420 = vunpack.c.l.b16 %v2132
        %v2421 = vunpack.c.l.b16 %v2133
        %v2422 = vunpack.c.l.b16 %v2134
        %v2423 = vunpack.c.l.b16 %v2135
        %v2424 = vunpack.c.l.b16 %v2136
        %v2425 = vunpack.c.l.b16 %v2137
        %v2426 = vunpack.c.l.b16 %v2138
        %v2427 = vunpack.c.l.b16 %v2139
        %v2428 = vunpack.c.l.b16 %v2140
        %v2429 = vunpack.c.l.b16 %v2141
        %v2430 = vunpack.c.l.b16 %v2142
        %v2431 = vpack.c.b16 %v2288, %v2287
        %v2432 = vpack.c.b16 %v2290, %v2289
        %v2433 = vpack.c.b16 %v2292, %v2291
        %v2434 = vpack.c.b16 %v2294, %v2293
        %v2435 = vpack.c.b16 %v2296, %v2295
        %v2436 = vpack.c.b16 %v2298, %v2297
        %v2437 = vpack.c.b16 %v2300, %v2299
        %v2438 = vpack.c.b16 %v2302, %v2301
        %v2439 = vpack.c.b16 %v2304, %v2303
        %v2440 = vpack.c.b16 %v2306, %v2305
        %v2441 = vpack.c.b16 %v2308, %v2307
        %v2442 = vpack.c.b16 %v2310, %v2309
        %v2443 = vpack.c.b16 %v2312, %v2311
        %v2444 = vpack.c.b16 %v2314, %v2313
        %v2445 = vpack.c.b16 %v2316, %v2315
        %v2446 = vpack.c.b16 %v2318, %v2317
        %v2447 = vpack.c.b16 %v2320, %v2319
        %v2448 = vpack.c.b16 %v2322, %v2321
        %v2449 = vpack.c.b16 %v2324, %v2323
        %v2450 = vpack.c.b16 %v2326, %v2325
        %v2451 = vpack.c.b16 %v2328, %v2327
        %v2452 = vpack.c.b16 %v2330, %v2329
        %v2453 = vpack.c.b16 %v2332, %v2331
        %v2454 = vpack.c.b16 %v2334, %v2333
        %v2455 = vpack.c.b16 %v2336, %v2335
        %v2456 = vpack.c.b16 %v2338, %v2337
        %v2457 = vpack.c.b16 %v2340, %v2339
        %v2458 = vpack.c.b16 %v2342, %v2341
        %v2459 = vpack.c.b16 %v2344, %v2343
        %v2460 = vpack.c.b16 %v2346, %v2345
        %v2461 = vpack.c.b16 %v2348, %v2347
        %v2462 = vpack.c.b16 %v2350, %v2349
        %v2463 = vpack.c.b16 %v2352, %v2351
        %v2464 = vpack.c.b16 %v2354, %v2353
        %v2465 = vpack.c.b16 %v2356, %v2355
        %v2466 = vpack.c.b16 %v2358, %v2357
        %v2467 = vpack.c.b16 %v2360, %v2359
        %v2468 = vpack.c.b16 %v2362, %v2361
        %v2469 = vpack.c.b16 %v2364, %v2363
        %v2470 = vpack.c.b16 %v2366, %v2365
        %v2471 = vpack.c.b16 %v2368, %v2367
        %v2472 = vpack.c.b16 %v2370, %v2369
        %v2473 = vpack.c.b16 %v2372, %v2371
        %v2474 = vpack.c.b16 %v2374, %v2373
        %v2475 = vpack.c.b16 %v2376, %v2375
        %v2476 = vpack.c.b16 %v2378, %v2377
        %v2477 = vpack.c.b16 %v2380, %v2379
        %v2478 = vpack.c.b16 %v2382, %v2381
        %v2479 = vpack.c.b16 %v2384, %v2383
        %v2480 = vpack.c.b16 %v2386, %v2385
        %v2481 = vpack.c.b16 %v2388, %v2387
        %v2482 = vpack.c.b16 %v2390, %v2389
        %v2483 = vpack.c.b16 %v2392, %v2391
        %v2484 = vpack.c.b16 %v2394, %v2393
        %v2485 = vpack.c.b16 %v2396, %v2395
        %v2486 = vpack.c.b16 %v2398, %v2397
        %v2487 = vpack.c.b16 %v2400, %v2399
        %v2488 = vpack.c.b16 %v2402, %v2401
        %v2489 = vpack.c.b16 %v2404, %v2403
        %v2490 = vpack.c.b16 %v2406, %v2405
        %v2491 = vpack.c.b16 %v2408, %v2407
        %v2492 = vpack.c.b16 %v2410, %v2409
        %v2493 = vpack.c.b16 %v2412, %v2411
        %v2494 = vpack.c.b16 %v2414, %v2413
        %v2495 = vpack.c.b16 %v2416, %v2415
        %v2496 = vpack.c.b16 %v2418, %v2417
        %v2497 = vpack.c.b16 %v2420, %v2419
        %v2498 = vpack.c.b16 %v2422, %v2421
        %v2499 = vpack.c.b16 %v2424, %v2423
        %v2500 = vpack.c.b16 %v2426, %v2425
        %v2501 = vpack.c.b16 %v2428, %v2427
        %v2502 = vpack.c.b16 %v2430, %v2429
        %2575 = vmatprep.subr.bf16.mxu0 0
        %2576 = vmatpush1.bf16.msra.mxu0 %v2438
        %2577 = vmatprep.subr.bf16.mxu0 0
        %2578 = vmatpush1.bf16.msra.mxu0 %v2437
        %2579 = vmatprep.subr.bf16.mxu0 0
        %2580 = vmatpush1.bf16.msra.mxu0 %v2436
        %2581 = vmatprep.subr.bf16.mxu0 0
        %2582 = vmatpush1.bf16.msra.mxu0 %v2435
        %2583 = vmatprep.subr.bf16.mxu0 0
        %2584 = vmatpush1.bf16.msra.mxu0 %v2434
        %2585 = vmatprep.subr.bf16.mxu0 0
        %2586 = vmatpush1.bf16.msra.mxu0 %v2433
        %2587 = vmatprep.subr.bf16.mxu0 0
        %2588 = vmatpush1.bf16.msra.mxu0 %v2432
        %2589 = vmatprep.subr.bf16.mxu0 0
        %2590 = vmatpush1.bf16.msra.mxu0 %v2431
        %2591 = vmatprep.subr.bf16.mxu0 0
        %2592 = vmatpush2.bf16.msra.mxu0 %v2446
        %2593 = vmatprep.subr.bf16.mxu0 0
        %2594 = vmatpush2.bf16.msra.mxu0 %v2445
        %2595 = vmatprep.subr.bf16.mxu0 0
        %2596 = vmatpush2.bf16.msra.mxu0 %v2444
        %2597 = vmatprep.subr.bf16.mxu0 0
        %2598 = vmatpush2.bf16.msra.mxu0 %v2443
        %2599 = vmatprep.subr.bf16.mxu0 0
        %2600 = vmatpush2.bf16.msra.mxu0 %v2442
        %2601 = vmatprep.subr.bf16.mxu0 0
        %2602 = vmatpush2.bf16.msra.mxu0 %v2441
        %2603 = vmatprep.subr.bf16.mxu0 0
        %2604 = vmatpush2.bf16.msra.mxu0 %v2440
        %2605 = vmatprep.subr.bf16.mxu0 0
        %2606 = vmatpush2.bf16.msra.mxu0 %v2439
        %2607 = vmatprep.mubr.bf16.mxu0 %v1849
        %2608 = vmatmul.mubr.bf16.gmra.mxu0 %v1848
        %v2609 = vpop.f32.mrf.mxu0
        %v2610 = vadd.f32 0.0, %v2609
        %v2611 = vpop.f32.mrf.mxu0
        %v2612 = vpop.f32.mrf.mxu0
        %v2613 = vadd.f32 0.0, %v2612
        %v2614 = vpop.f32.mrf.mxu0
        %2615 = vmatprep.mubr.bf16.mxu0 %v1858
        %2616 = vmatmul.mubr.bf16.gmra.mxu0 %v1857
        %v2617 = vpop.f32.mrf.mxu0
        %v2618 = vadd.f32 0.0, %v2617
        %v2619 = vpop.f32.mrf.mxu0
        %v2620 = vpop.f32.mrf.mxu0
        %v2621 = vadd.f32 0.0, %v2620
        %v2622 = vpop.f32.mrf.mxu0
        %2623 = vmatprep.mubr.bf16.mxu0 %v1865
        %2624 = vmatmul.mubr.bf16.gmra.mxu0 %v1864
        %v2625 = vpop.f32.mrf.mxu0
        %v2626 = vadd.f32 0.0, %v2625
        %v2627 = vpop.f32.mrf.mxu0
        %v2628 = vpop.f32.mrf.mxu0
        %v2629 = vadd.f32 0.0, %v2628
        %v2630 = vpop.f32.mrf.mxu0
        %2631 = vmatprep.mubr.bf16.mxu0 %v1872
        %2632 = vmatmul.mubr.bf16.gmra.mxu0 %v1871
        %v2633 = vpop.f32.mrf.mxu0
        %v2634 = vadd.f32 0.0, %v2633
        %v2635 = vpop.f32.mrf.mxu0
        %v2636 = vpop.f32.mrf.mxu0
        %v2637 = vadd.f32 0.0, %v2636
        %v2638 = vpop.f32.mrf.mxu0
        %2639 = vmatprep.mubr.bf16.mxu0 %v1879
        %2640 = vmatmul.mubr.bf16.gmra.mxu0 %v1878
        %v2641 = vpop.f32.mrf.mxu0
        %v2642 = vadd.f32 0.0, %v2641
        %v2643 = vpop.f32.mrf.mxu0
        %v2644 = vpop.f32.mrf.mxu0
        %v2645 = vadd.f32 0.0, %v2644
        %v2646 = vpop.f32.mrf.mxu0
        %2647 = vmatprep.mubr.bf16.mxu0 %v1886
        %2648 = vmatmul.mubr.bf16.gmra.mxu0 %v1885
        %v2649 = vpop.f32.mrf.mxu0
        %v2650 = vadd.f32 0.0, %v2649
        %v2651 = vpop.f32.mrf.mxu0
        %v2652 = vpop.f32.mrf.mxu0
        %v2653 = vadd.f32 0.0, %v2652
        %v2654 = vpop.f32.mrf.mxu0
        %2655 = vmatprep.mubr.bf16.mxu0 %v1893
        %2656 = vmatmul.mubr.bf16.gmra.mxu0 %v1892
        %v2657 = vpop.f32.mrf.mxu0
        %v2658 = vadd.f32 0.0, %v2657
        %v2659 = vpop.f32.mrf.mxu0
        %v2660 = vpop.f32.mrf.mxu0
        %v2661 = vadd.f32 0.0, %v2660
        %v2662 = vpop.f32.mrf.mxu0
        %2663 = vmatprep.mubr.bf16.mxu0 %v1900
        %2664 = vmatmul.mubr.bf16.gmra.mxu0 %v1899
        %v2665 = vpop.f32.mrf.mxu0
        %v2666 = vadd.f32 0.0, %v2665
        %v2667 = vpop.f32.mrf.mxu0
        %v2668 = vpop.f32.mrf.mxu0
        %v2669 = vadd.f32 0.0, %v2668
        %v2670 = vpop.f32.mrf.mxu0
        %2671 = vmatprep.mubr.bf16.mxu0 %v1907
        %2672 = vmatmul.mubr.bf16.gmra.mxu0 %v1906
        %v2673 = vpop.f32.mrf.mxu0
        %v2674 = vadd.f32 0.0, %v2673
        %v2675 = vpop.f32.mrf.mxu0
        %v2676 = vpop.f32.mrf.mxu0
        %v2677 = vadd.f32 0.0, %v2676
        %v2678 = vpop.f32.mrf.mxu0
        %2679 = vmatprep.mubr.bf16.mxu0 %v1914
        %2680 = vmatmul.mubr.bf16.gmra.mxu0 %v1913
        %v2681 = vpop.f32.mrf.mxu0
        %v2682 = vadd.f32 0.0, %v2681
        %v2683 = vpop.f32.mrf.mxu0
        %v2684 = vpop.f32.mrf.mxu0
        %v2685 = vadd.f32 0.0, %v2684
        %v2686 = vpop.f32.mrf.mxu0
        %2687 = vmatprep.mubr.bf16.mxu0 %v1921
        %2688 = vmatmul.mubr.bf16.gmra.mxu0 %v1920
        %v2689 = vpop.f32.mrf.mxu0
        %v2690 = vadd.f32 0.0, %v2689
        %v2691 = vpop.f32.mrf.mxu0
        %v2692 = vpop.f32.mrf.mxu0
        %v2693 = vadd.f32 0.0, %v2692
        %v2694 = vpop.f32.mrf.mxu0
        %2695 = vmatprep.mubr.bf16.mxu0 %v1928
        %2696 = vmatmul.mubr.bf16.gmra.mxu0 %v1927
        %v2697 = vpop.f32.mrf.mxu0
        %v2698 = vadd.f32 0.0, %v2697
        %v2699 = vpop.f32.mrf.mxu0
        %v2700 = vpop.f32.mrf.mxu0
        %v2701 = vadd.f32 0.0, %v2700
        %v2702 = vpop.f32.mrf.mxu0
        %2703 = vmatprep.mubr.bf16.mxu0 %v1935
        %2704 = vmatmul.mubr.bf16.gmra.mxu0 %v1934
        %v2705 = vpop.f32.mrf.mxu0
        %v2706 = vadd.f32 0.0, %v2705
        %v2707 = vpop.f32.mrf.mxu0
        %v2708 = vpop.f32.mrf.mxu0
        %v2709 = vadd.f32 0.0, %v2708
        %v2710 = vpop.f32.mrf.mxu0
        %2711 = vmatprep.mubr.bf16.mxu0 %v1942
        %2712 = vmatmul.mubr.bf16.gmra.mxu0 %v1941
        %v2713 = vpop.f32.mrf.mxu0
        %v2714 = vadd.f32 0.0, %v2713
        %v2715 = vpop.f32.mrf.mxu0
        %v2716 = vpop.f32.mrf.mxu0
        %v2717 = vadd.f32 0.0, %v2716
        %v2718 = vpop.f32.mrf.mxu0
        %2719 = vmatprep.mubr.bf16.mxu0 %v1949
        %2720 = vmatmul.mubr.bf16.gmra.mxu0 %v1948
        %v2721 = vpop.f32.mrf.mxu0
        %v2722 = vadd.f32 0.0, %v2721
        %v2723 = vpop.f32.mrf.mxu0
        %v2724 = vpop.f32.mrf.mxu0
        %v2725 = vadd.f32 0.0, %v2724
        %v2726 = vpop.f32.mrf.mxu0
        %2727 = vmatprep.mubr.bf16.mxu0 %v1956
        %2728 = vmatmul.mubr.bf16.gmra.mxu0 %v1955
        %v2729 = vpop.f32.mrf.mxu0
        %v2730 = vadd.f32 0.0, %v2729
        %v2731 = vpop.f32.mrf.mxu0
        %v2732 = vpop.f32.mrf.mxu0
        %v2733 = vadd.f32 0.0, %v2732
        %v2734 = vpop.f32.mrf.mxu0
        %2735 = vmatprep.mubr.bf16.mxu0 %v1963
        %2736 = vmatmul.mubr.bf16.gmra.mxu0 %v1962
        %v2737 = vpop.f32.mrf.mxu0
        %v2738 = vadd.f32 0.0, %v2737
        %v2739 = vpop.f32.mrf.mxu0
        %v2740 = vpop.f32.mrf.mxu0
        %v2741 = vadd.f32 0.0, %v2740
        %v2742 = vpop.f32.mrf.mxu0
        %2743 = vmatprep.mubr.bf16.mxu0 %v1970
        %2744 = vmatmul.mubr.bf16.gmra.mxu0 %v1969
        %v2745 = vpop.f32.mrf.mxu0
        %v2746 = vadd.f32 0.0, %v2745
        %v2747 = vpop.f32.mrf.mxu0
        %v2748 = vpop.f32.mrf.mxu0
        %v2749 = vadd.f32 0.0, %v2748
        %v2750 = vpop.f32.mrf.mxu0
        %2751 = vmatprep.mubr.bf16.mxu0 %v1977
        %2752 = vmatmul.mubr.bf16.gmra.mxu0 %v1976
        %v2753 = vpop.f32.mrf.mxu0
        %v2754 = vadd.f32 0.0, %v2753
        %v2755 = vpop.f32.mrf.mxu0
        %v2756 = vpop.f32.mrf.mxu0
        %v2757 = vadd.f32 0.0, %v2756
        %v2758 = vpop.f32.mrf.mxu0
        %2759 = vmatprep.mubr.bf16.mxu0 %v1984
        %2760 = vmatmul.mubr.bf16.gmra.mxu0 %v1983
        %v2761 = vpop.f32.mrf.mxu0
        %v2762 = vadd.f32 0.0, %v2761
        %v2763 = vpop.f32.mrf.mxu0
        %v2764 = vpop.f32.mrf.mxu0
        %v2765 = vadd.f32 0.0, %v2764
        %v2766 = vpop.f32.mrf.mxu0
        %2767 = vmatprep.mubr.bf16.mxu0 %v1991
        %2768 = vmatmul.mubr.bf16.gmra.mxu0 %v1990
        %v2769 = vpop.f32.mrf.mxu0
        %v2770 = vadd.f32 0.0, %v2769
        %v2771 = vpop.f32.mrf.mxu0
        %v2772 = vpop.f32.mrf.mxu0
        %v2773 = vpop.f32.mrf.mxu0
        %2774 = vdwg.mxu0
        %2775 = vmatprep.subr.bf16.mxu0 0
        %2776 = vmatpush1.bf16.msra.mxu0 %v2454
        %2777 = vmatprep.subr.bf16.mxu0 0
        %2778 = vmatpush1.bf16.msra.mxu0 %v2453
        %2779 = vmatprep.subr.bf16.mxu0 0
        %2780 = vmatpush1.bf16.msra.mxu0 %v2452
        %2781 = vmatprep.subr.bf16.mxu0 0
        %2782 = vmatpush1.bf16.msra.mxu0 %v2451
        %2783 = vmatprep.subr.bf16.mxu0 0
        %2784 = vmatpush1.bf16.msra.mxu0 %v2450
        %2785 = vmatprep.subr.bf16.mxu0 0
        %2786 = vmatpush1.bf16.msra.mxu0 %v2449
        %2787 = vmatprep.subr.bf16.mxu0 0
        %2788 = vmatpush1.bf16.msra.mxu0 %v2448
        %2789 = vmatprep.subr.bf16.mxu0 0
        %2790 = vmatpush1.bf16.msra.mxu0 %v2447
        %2791 = vmatprep.subr.bf16.mxu0 0
        %2792 = vmatpush2.bf16.msra.mxu0 %v2462
        %2793 = vmatprep.subr.bf16.mxu0 0
        %2794 = vmatpush2.bf16.msra.mxu0 %v2461
        %2795 = vmatprep.subr.bf16.mxu0 0
        %2796 = vmatpush2.bf16.msra.mxu0 %v2460
        %2797 = vmatprep.subr.bf16.mxu0 0
        %2798 = vmatpush2.bf16.msra.mxu0 %v2459
        %2799 = vmatprep.subr.bf16.mxu0 0
        %2800 = vmatpush2.bf16.msra.mxu0 %v2458
        %2801 = vmatprep.subr.bf16.mxu0 0
        %2802 = vmatpush2.bf16.msra.mxu0 %v2457
        %2803 = vmatprep.subr.bf16.mxu0 0
        %2804 = vmatpush2.bf16.msra.mxu0 %v2456
        %2805 = vmatprep.subr.bf16.mxu0 0
        %2806 = vmatpush2.bf16.msra.mxu0 %v2455
        %2807 = vmatprep.mubr.bf16.mxu0 %v1851
        %2808 = vmatmul.mubr.bf16.gmra.mxu0 %v1850
        %v2809 = vpop.f32.mrf.mxu0
        %v2810 = vadd.f32 %v2610, %v2809
        %v2811 = vpop.f32.mrf.mxu0
        %v2812 = vpop.f32.mrf.mxu0
        %v2813 = vadd.f32 %v2613, %v2812
        %v2814 = vpop.f32.mrf.mxu0
        %2815 = vmatprep.mubr.bf16.mxu0 %v1859
        %2816 = vmatmul.mubr.bf16.gmra.mxu0 %v1851
        %v2817 = vpop.f32.mrf.mxu0
        %v2818 = vadd.f32 %v2618, %v2817
        %v2819 = vpop.f32.mrf.mxu0
        %v2820 = vpop.f32.mrf.mxu0
        %v2821 = vadd.f32 %v2621, %v2820
        %v2822 = vpop.f32.mrf.mxu0
        %2823 = vmatprep.mubr.bf16.mxu0 %v1866
        %2824 = vmatmul.mubr.bf16.gmra.mxu0 %v1859
        %v2825 = vpop.f32.mrf.mxu0
        %v2826 = vadd.f32 %v2626, %v2825
        %v2827 = vpop.f32.mrf.mxu0
        %v2828 = vpop.f32.mrf.mxu0
        %v2829 = vadd.f32 %v2629, %v2828
        %v2830 = vpop.f32.mrf.mxu0
        %2831 = vmatprep.mubr.bf16.mxu0 %v1873
        %2832 = vmatmul.mubr.bf16.gmra.mxu0 %v1866
        %v2833 = vpop.f32.mrf.mxu0
        %v2834 = vadd.f32 %v2634, %v2833
        %v2835 = vpop.f32.mrf.mxu0
        %v2836 = vpop.f32.mrf.mxu0
        %v2837 = vadd.f32 %v2637, %v2836
        %v2838 = vpop.f32.mrf.mxu0
        %2839 = vmatprep.mubr.bf16.mxu0 %v1880
        %2840 = vmatmul.mubr.bf16.gmra.mxu0 %v1873
        %v2841 = vpop.f32.mrf.mxu0
        %v2842 = vadd.f32 %v2642, %v2841
        %v2843 = vpop.f32.mrf.mxu0
        %v2844 = vpop.f32.mrf.mxu0
        %v2845 = vadd.f32 %v2645, %v2844
        %v2846 = vpop.f32.mrf.mxu0
        %2847 = vmatprep.mubr.bf16.mxu0 %v1887
        %2848 = vmatmul.mubr.bf16.gmra.mxu0 %v1880
        %v2849 = vpop.f32.mrf.mxu0
        %v2850 = vadd.f32 %v2650, %v2849
        %v2851 = vpop.f32.mrf.mxu0
        %v2852 = vpop.f32.mrf.mxu0
        %v2853 = vadd.f32 %v2653, %v2852
        %v2854 = vpop.f32.mrf.mxu0
        %2855 = vmatprep.mubr.bf16.mxu0 %v1894
        %2856 = vmatmul.mubr.bf16.gmra.mxu0 %v1887
        %v2857 = vpop.f32.mrf.mxu0
        %v2858 = vadd.f32 %v2658, %v2857
        %v2859 = vpop.f32.mrf.mxu0
        %v2860 = vpop.f32.mrf.mxu0
        %v2861 = vadd.f32 %v2661, %v2860
        %v2862 = vpop.f32.mrf.mxu0
        %2863 = vmatprep.mubr.bf16.mxu0 %v1901
        %2864 = vmatmul.mubr.bf16.gmra.mxu0 %v1894
        %v2865 = vpop.f32.mrf.mxu0
        %v2866 = vadd.f32 %v2666, %v2865
        %v2867 = vpop.f32.mrf.mxu0
        %v2868 = vpop.f32.mrf.mxu0
        %v2869 = vadd.f32 %v2669, %v2868
        %v2870 = vpop.f32.mrf.mxu0
        %2871 = vmatprep.mubr.bf16.mxu0 %v1908
        %2872 = vmatmul.mubr.bf16.gmra.mxu0 %v1901
        %v2873 = vpop.f32.mrf.mxu0
        %v2874 = vadd.f32 %v2674, %v2873
        %v2875 = vpop.f32.mrf.mxu0
        %v2876 = vpop.f32.mrf.mxu0
        %v2877 = vadd.f32 %v2677, %v2876
        %v2878 = vpop.f32.mrf.mxu0
        %2879 = vmatprep.mubr.bf16.mxu0 %v1915
        %2880 = vmatmul.mubr.bf16.gmra.mxu0 %v1908
        %v2881 = vpop.f32.mrf.mxu0
        %v2882 = vadd.f32 %v2682, %v2881
        %v2883 = vpop.f32.mrf.mxu0
        %v2884 = vpop.f32.mrf.mxu0
        %v2885 = vadd.f32 %v2685, %v2884
        %v2886 = vpop.f32.mrf.mxu0
        %2887 = vmatprep.mubr.bf16.mxu0 %v1922
        %2888 = vmatmul.mubr.bf16.gmra.mxu0 %v1915
        %v2889 = vpop.f32.mrf.mxu0
        %v2890 = vadd.f32 %v2690, %v2889
        %v2891 = vpop.f32.mrf.mxu0
        %v2892 = vpop.f32.mrf.mxu0
        %v2893 = vadd.f32 %v2693, %v2892
        %v2894 = vpop.f32.mrf.mxu0
        %2895 = vmatprep.mubr.bf16.mxu0 %v1929
        %2896 = vmatmul.mubr.bf16.gmra.mxu0 %v1922
        %v2897 = vpop.f32.mrf.mxu0
        %v2898 = vadd.f32 %v2698, %v2897
        %v2899 = vpop.f32.mrf.mxu0
        %v2900 = vpop.f32.mrf.mxu0
        %v2901 = vadd.f32 %v2701, %v2900
        %v2902 = vpop.f32.mrf.mxu0
        %2903 = vmatprep.mubr.bf16.mxu0 %v1936
        %2904 = vmatmul.mubr.bf16.gmra.mxu0 %v1929
        %v2905 = vpop.f32.mrf.mxu0
        %v2906 = vadd.f32 %v2706, %v2905
        %v2907 = vpop.f32.mrf.mxu0
        %v2908 = vpop.f32.mrf.mxu0
        %v2909 = vadd.f32 %v2709, %v2908
        %v2910 = vpop.f32.mrf.mxu0
        %2911 = vmatprep.mubr.bf16.mxu0 %v1943
        %2912 = vmatmul.mubr.bf16.gmra.mxu0 %v1936
        %v2913 = vpop.f32.mrf.mxu0
        %v2914 = vadd.f32 %v2714, %v2913
        %v2915 = vpop.f32.mrf.mxu0
        %v2916 = vpop.f32.mrf.mxu0
        %v2917 = vadd.f32 %v2717, %v2916
        %v2918 = vpop.f32.mrf.mxu0
        %2919 = vmatprep.mubr.bf16.mxu0 %v1950
        %2920 = vmatmul.mubr.bf16.gmra.mxu0 %v1943
        %v2921 = vpop.f32.mrf.mxu0
        %v2922 = vadd.f32 %v2722, %v2921
        %v2923 = vpop.f32.mrf.mxu0
        %v2924 = vpop.f32.mrf.mxu0
        %v2925 = vadd.f32 %v2725, %v2924
        %v2926 = vpop.f32.mrf.mxu0
        %2927 = vmatprep.mubr.bf16.mxu0 %v1957
        %2928 = vmatmul.mubr.bf16.gmra.mxu0 %v1950
        %v2929 = vpop.f32.mrf.mxu0
        %v2930 = vadd.f32 %v2730, %v2929
        %v2931 = vpop.f32.mrf.mxu0
        %v2932 = vpop.f32.mrf.mxu0
        %v2933 = vadd.f32 %v2733, %v2932
        %v2934 = vpop.f32.mrf.mxu0
        %2935 = vmatprep.mubr.bf16.mxu0 %v1964
        %2936 = vmatmul.mubr.bf16.gmra.mxu0 %v1957
        %v2937 = vpop.f32.mrf.mxu0
        %v2938 = vadd.f32 %v2738, %v2937
        %v2939 = vpop.f32.mrf.mxu0
        %v2940 = vpop.f32.mrf.mxu0
        %v2941 = vadd.f32 %v2741, %v2940
        %v2942 = vpop.f32.mrf.mxu0
        %2943 = vmatprep.mubr.bf16.mxu0 %v1971
        %2944 = vmatmul.mubr.bf16.gmra.mxu0 %v1964
        %v2945 = vpop.f32.mrf.mxu0
        %v2946 = vadd.f32 %v2746, %v2945
        %v2947 = vpop.f32.mrf.mxu0
        %v2948 = vpop.f32.mrf.mxu0
        %v2949 = vadd.f32 %v2749, %v2948
        %v2950 = vpop.f32.mrf.mxu0
        %2951 = vmatprep.mubr.bf16.mxu0 %v1978
        %2952 = vmatmul.mubr.bf16.gmra.mxu0 %v1971
        %v2953 = vpop.f32.mrf.mxu0
        %v2954 = vadd.f32 %v2754, %v2953
        %v2955 = vpop.f32.mrf.mxu0
        %v2956 = vpop.f32.mrf.mxu0
        %v2957 = vadd.f32 %v2757, %v2956
        %v2958 = vpop.f32.mrf.mxu0
        %2959 = vmatprep.mubr.bf16.mxu0 %v1985
        %2960 = vmatmul.mubr.bf16.gmra.mxu0 %v1978
        %v2961 = vpop.f32.mrf.mxu0
        %v2962 = vadd.f32 %v2762, %v2961
        %v2963 = vpop.f32.mrf.mxu0
        %v2964 = vpop.f32.mrf.mxu0
        %v2965 = vadd.f32 %v2765, %v2964
        %v2966 = vpop.f32.mrf.mxu0
        %2967 = vmatprep.mubr.bf16.mxu0 %v1993
        %2968 = vmatmul.mubr.bf16.gmra.mxu0 %v1992
        %v2969 = vpop.f32.mrf.mxu0
        %v2970 = vadd.f32 %v2770, %v2969
        %v2971 = vpop.f32.mrf.mxu0
        %v2972 = vpop.f32.mrf.mxu0
        %v2973 = vpop.f32.mrf.mxu0
        %2974 = vdwg.mxu0
        %2975 = vmatprep.subr.bf16.mxu0 0
        %2976 = vmatpush1.bf16.msra.mxu0 %v2470
        %2977 = vmatprep.subr.bf16.mxu0 0
        %2978 = vmatpush1.bf16.msra.mxu0 %v2469
        %2979 = vmatprep.subr.bf16.mxu0 0
        %2980 = vmatpush1.bf16.msra.mxu0 %v2468
        %2981 = vmatprep.subr.bf16.mxu0 0
        %2982 = vmatpush1.bf16.msra.mxu0 %v2467
        %2983 = vmatprep.subr.bf16.mxu0 0
        %2984 = vmatpush1.bf16.msra.mxu0 %v2466
        %2985 = vmatprep.subr.bf16.mxu0 0
        %2986 = vmatpush1.bf16.msra.mxu0 %v2465
        %2987 = vmatprep.subr.bf16.mxu0 0
        %2988 = vmatpush1.bf16.msra.mxu0 %v2464
        %2989 = vmatprep.subr.bf16.mxu0 0
        %2990 = vmatpush1.bf16.msra.mxu0 %v2463
        %2991 = vmatprep.subr.bf16.mxu0 0
        %2992 = vmatpush2.bf16.msra.mxu0 %v2478
        %2993 = vmatprep.subr.bf16.mxu0 0
        %2994 = vmatpush2.bf16.msra.mxu0 %v2477
        %2995 = vmatprep.subr.bf16.mxu0 0
        %2996 = vmatpush2.bf16.msra.mxu0 %v2476
        %2997 = vmatprep.subr.bf16.mxu0 0
        %2998 = vmatpush2.bf16.msra.mxu0 %v2475
        %2999 = vmatprep.subr.bf16.mxu0 0
        %3000 = vmatpush2.bf16.msra.mxu0 %v2474
        %3001 = vmatprep.subr.bf16.mxu0 0
        %3002 = vmatpush2.bf16.msra.mxu0 %v2473
        %3003 = vmatprep.subr.bf16.mxu0 0
        %3004 = vmatpush2.bf16.msra.mxu0 %v2472
        %3005 = vmatprep.subr.bf16.mxu0 0
        %3006 = vmatpush2.bf16.msra.mxu0 %v2471
        %3007 = vmatprep.mubr.bf16.mxu0 %v1853
        %3008 = vmatmul.mubr.bf16.gmra.mxu0 %v1852
        %v3009 = vpop.f32.mrf.mxu0
        %v3010 = vadd.f32 %v2810, %v3009
        %v3011 = vpop.f32.mrf.mxu0
        %v3012 = vpop.f32.mrf.mxu0
        %v3013 = vadd.f32 %v2813, %v3012
        %v3014 = vpop.f32.mrf.mxu0
        %3015 = vmatprep.mubr.bf16.mxu0 %v1854
        %3016 = vmatmul.mubr.bf16.gmra.mxu0 %v1860
        %v3017 = vpop.f32.mrf.mxu0
        %v3018 = vadd.f32 %v2818, %v3017
        %v3019 = vpop.f32.mrf.mxu0
        %v3020 = vpop.f32.mrf.mxu0
        %v3021 = vadd.f32 %v2821, %v3020
        %v3022 = vpop.f32.mrf.mxu0
        %3023 = vmatprep.mubr.bf16.mxu0 %v1861
        %3024 = vmatmul.mubr.bf16.gmra.mxu0 %v1867
        %v3025 = vpop.f32.mrf.mxu0
        %v3026 = vadd.f32 %v2826, %v3025
        %v3027 = vpop.f32.mrf.mxu0
        %v3028 = vpop.f32.mrf.mxu0
        %v3029 = vadd.f32 %v2829, %v3028
        %v3030 = vpop.f32.mrf.mxu0
        %3031 = vmatprep.mubr.bf16.mxu0 %v1868
        %3032 = vmatmul.mubr.bf16.gmra.mxu0 %v1874
        %v3033 = vpop.f32.mrf.mxu0
        %v3034 = vadd.f32 %v2834, %v3033
        %v3035 = vpop.f32.mrf.mxu0
        %v3036 = vpop.f32.mrf.mxu0
        %v3037 = vadd.f32 %v2837, %v3036
        %v3038 = vpop.f32.mrf.mxu0
        %3039 = vmatprep.mubr.bf16.mxu0 %v1875
        %3040 = vmatmul.mubr.bf16.gmra.mxu0 %v1881
        %v3041 = vpop.f32.mrf.mxu0
        %v3042 = vadd.f32 %v2842, %v3041
        %v3043 = vpop.f32.mrf.mxu0
        %v3044 = vpop.f32.mrf.mxu0
        %v3045 = vadd.f32 %v2845, %v3044
        %v3046 = vpop.f32.mrf.mxu0
        %3047 = vmatprep.mubr.bf16.mxu0 %v1882
        %3048 = vmatmul.mubr.bf16.gmra.mxu0 %v1888
        %v3049 = vpop.f32.mrf.mxu0
        %v3050 = vadd.f32 %v2850, %v3049
        %v3051 = vpop.f32.mrf.mxu0
        %v3052 = vpop.f32.mrf.mxu0
        %v3053 = vadd.f32 %v2853, %v3052
        %v3054 = vpop.f32.mrf.mxu0
        %3055 = vmatprep.mubr.bf16.mxu0 %v1889
        %3056 = vmatmul.mubr.bf16.gmra.mxu0 %v1895
        %v3057 = vpop.f32.mrf.mxu0
        %v3058 = vadd.f32 %v2858, %v3057
        %v3059 = vpop.f32.mrf.mxu0
        %v3060 = vpop.f32.mrf.mxu0
        %v3061 = vadd.f32 %v2861, %v3060
        %v3062 = vpop.f32.mrf.mxu0
        %3063 = vmatprep.mubr.bf16.mxu0 %v1896
        %3064 = vmatmul.mubr.bf16.gmra.mxu0 %v1902
        %v3065 = vpop.f32.mrf.mxu0
        %v3066 = vadd.f32 %v2866, %v3065
        %v3067 = vpop.f32.mrf.mxu0
        %v3068 = vpop.f32.mrf.mxu0
        %v3069 = vadd.f32 %v2869, %v3068
        %v3070 = vpop.f32.mrf.mxu0
        %3071 = vmatprep.mubr.bf16.mxu0 %v1903
        %3072 = vmatmul.mubr.bf16.gmra.mxu0 %v1909
        %v3073 = vpop.f32.mrf.mxu0
        %v3074 = vadd.f32 %v2874, %v3073
        %v3075 = vpop.f32.mrf.mxu0
        %v3076 = vpop.f32.mrf.mxu0
        %v3077 = vadd.f32 %v2877, %v3076
        %v3078 = vpop.f32.mrf.mxu0
        %3079 = vmatprep.mubr.bf16.mxu0 %v1910
        %3080 = vmatmul.mubr.bf16.gmra.mxu0 %v1916
        %v3081 = vpop.f32.mrf.mxu0
        %v3082 = vadd.f32 %v2882, %v3081
        %v3083 = vpop.f32.mrf.mxu0
        %v3084 = vpop.f32.mrf.mxu0
        %v3085 = vadd.f32 %v2885, %v3084
        %v3086 = vpop.f32.mrf.mxu0
        %3087 = vmatprep.mubr.bf16.mxu0 %v1917
        %3088 = vmatmul.mubr.bf16.gmra.mxu0 %v1923
        %v3089 = vpop.f32.mrf.mxu0
        %v3090 = vadd.f32 %v2890, %v3089
        %v3091 = vpop.f32.mrf.mxu0
        %v3092 = vpop.f32.mrf.mxu0
        %v3093 = vadd.f32 %v2893, %v3092
        %v3094 = vpop.f32.mrf.mxu0
        %3095 = vmatprep.mubr.bf16.mxu0 %v1924
        %3096 = vmatmul.mubr.bf16.gmra.mxu0 %v1930
        %v3097 = vpop.f32.mrf.mxu0
        %v3098 = vadd.f32 %v2898, %v3097
        %v3099 = vpop.f32.mrf.mxu0
        %v3100 = vpop.f32.mrf.mxu0
        %v3101 = vadd.f32 %v2901, %v3100
        %v3102 = vpop.f32.mrf.mxu0
        %3103 = vmatprep.mubr.bf16.mxu0 %v1931
        %3104 = vmatmul.mubr.bf16.gmra.mxu0 %v1937
        %v3105 = vpop.f32.mrf.mxu0
        %v3106 = vadd.f32 %v2906, %v3105
        %v3107 = vpop.f32.mrf.mxu0
        %v3108 = vpop.f32.mrf.mxu0
        %v3109 = vadd.f32 %v2909, %v3108
        %v3110 = vpop.f32.mrf.mxu0
        %3111 = vmatprep.mubr.bf16.mxu0 %v1938
        %3112 = vmatmul.mubr.bf16.gmra.mxu0 %v1944
        %v3113 = vpop.f32.mrf.mxu0
        %v3114 = vadd.f32 %v2914, %v3113
        %v3115 = vpop.f32.mrf.mxu0
        %v3116 = vpop.f32.mrf.mxu0
        %v3117 = vadd.f32 %v2917, %v3116
        %v3118 = vpop.f32.mrf.mxu0
        %3119 = vmatprep.mubr.bf16.mxu0 %v1945
        %3120 = vmatmul.mubr.bf16.gmra.mxu0 %v1951
        %v3121 = vpop.f32.mrf.mxu0
        %v3122 = vadd.f32 %v2922, %v3121
        %v3123 = vpop.f32.mrf.mxu0
        %v3124 = vpop.f32.mrf.mxu0
        %v3125 = vadd.f32 %v2925, %v3124
        %v3126 = vpop.f32.mrf.mxu0
        %3127 = vmatprep.mubr.bf16.mxu0 %v1952
        %3128 = vmatmul.mubr.bf16.gmra.mxu0 %v1958
        %v3129 = vpop.f32.mrf.mxu0
        %v3130 = vadd.f32 %v2930, %v3129
        %v3131 = vpop.f32.mrf.mxu0
        %v3132 = vpop.f32.mrf.mxu0
        %v3133 = vadd.f32 %v2933, %v3132
        %v3134 = vpop.f32.mrf.mxu0
        %3135 = vmatprep.mubr.bf16.mxu0 %v1959
        %3136 = vmatmul.mubr.bf16.gmra.mxu0 %v1965
        %v3137 = vpop.f32.mrf.mxu0
        %v3138 = vadd.f32 %v2938, %v3137
        %v3139 = vpop.f32.mrf.mxu0
        %v3140 = vpop.f32.mrf.mxu0
        %v3141 = vadd.f32 %v2941, %v3140
        %v3142 = vpop.f32.mrf.mxu0
        %3143 = vmatprep.mubr.bf16.mxu0 %v1966
        %3144 = vmatmul.mubr.bf16.gmra.mxu0 %v1972
        %v3145 = vpop.f32.mrf.mxu0
        %v3146 = vadd.f32 %v2946, %v3145
        %v3147 = vpop.f32.mrf.mxu0
        %v3148 = vpop.f32.mrf.mxu0
        %v3149 = vadd.f32 %v2949, %v3148
        %v3150 = vpop.f32.mrf.mxu0
        %3151 = vmatprep.mubr.bf16.mxu0 %v1973
        %3152 = vmatmul.mubr.bf16.gmra.mxu0 %v1979
        %v3153 = vpop.f32.mrf.mxu0
        %v3154 = vadd.f32 %v2954, %v3153
        %v3155 = vpop.f32.mrf.mxu0
        %v3156 = vpop.f32.mrf.mxu0
        %v3157 = vadd.f32 %v2957, %v3156
        %v3158 = vpop.f32.mrf.mxu0
        %3159 = vmatprep.mubr.bf16.mxu0 %v1980
        %3160 = vmatmul.mubr.bf16.gmra.mxu0 %v1986
        %v3161 = vpop.f32.mrf.mxu0
        %v3162 = vadd.f32 %v2962, %v3161
        %v3163 = vpop.f32.mrf.mxu0
        %v3164 = vpop.f32.mrf.mxu0
        %v3165 = vadd.f32 %v2965, %v3164
        %v3166 = vpop.f32.mrf.mxu0
        %3167 = vmatprep.mubr.bf16.mxu0 %v1995
        %3168 = vmatmul.mubr.bf16.gmra.mxu0 %v1994
        %v3169 = vpop.f32.mrf.mxu0
        %v3170 = vadd.f32 %v2970, %v3169
        %v3171 = vpop.f32.mrf.mxu0
        %v3172 = vpop.f32.mrf.mxu0
        %v3173 = vpop.f32.mrf.mxu0
        %3174 = vdwg.mxu0
        %3175 = vmatprep.subr.bf16.mxu0 0
        %3176 = vmatpush1.bf16.msra.mxu0 %v2486
        %3177 = vmatprep.subr.bf16.mxu0 0
        %3178 = vmatpush1.bf16.msra.mxu0 %v2485
        %3179 = vmatprep.subr.bf16.mxu0 0
        %3180 = vmatpush1.bf16.msra.mxu0 %v2484
        %3181 = vmatprep.subr.bf16.mxu0 0
        %3182 = vmatpush1.bf16.msra.mxu0 %v2483
        %3183 = vmatprep.subr.bf16.mxu0 0
        %3184 = vmatpush1.bf16.msra.mxu0 %v2482
        %3185 = vmatprep.subr.bf16.mxu0 0
        %3186 = vmatpush1.bf16.msra.mxu0 %v2481
        %3187 = vmatprep.subr.bf16.mxu0 0
        %3188 = vmatpush1.bf16.msra.mxu0 %v2480
        %3189 = vmatprep.subr.bf16.mxu0 0
        %3190 = vmatpush1.bf16.msra.mxu0 %v2479
        %3191 = vmatprep.subr.bf16.mxu0 0
        %3192 = vmatpush2.bf16.msra.mxu0 %v2494
        %3193 = vmatprep.subr.bf16.mxu0 0
        %3194 = vmatpush2.bf16.msra.mxu0 %v2493
        %3195 = vmatprep.subr.bf16.mxu0 0
        %3196 = vmatpush2.bf16.msra.mxu0 %v2492
        %3197 = vmatprep.subr.bf16.mxu0 0
        %3198 = vmatpush2.bf16.msra.mxu0 %v2491
        %3199 = vmatprep.subr.bf16.mxu0 0
        %3200 = vmatpush2.bf16.msra.mxu0 %v2490
        %3201 = vmatprep.subr.bf16.mxu0 0
        %3202 = vmatpush2.bf16.msra.mxu0 %v2489
        %3203 = vmatprep.subr.bf16.mxu0 0
        %3204 = vmatpush2.bf16.msra.mxu0 %v2488
        %3205 = vmatprep.subr.bf16.mxu0 0
        %3206 = vmatpush2.bf16.msra.mxu0 %v2487
        %3207 = vmatprep.mubr.bf16.mxu0 %v1855
        %3208 = vmatmul.mubr.bf16.gmra.mxu0 %v1854
        %v3209 = vpop.f32.mrf.mxu0
        %v3210 = vadd.f32 %v3010, %v3209
        %v3211 = vpop.f32.mrf.mxu0
        %v3212 = vpop.f32.mrf.mxu0
        %v3213 = vadd.f32 %v3013, %v3212
        %v3214 = vpop.f32.mrf.mxu0
        %3215 = vmatprep.mubr.bf16.mxu0 %v1862
        %3216 = vmatmul.mubr.bf16.gmra.mxu0 %v1861
        %v3217 = vpop.f32.mrf.mxu0
        %v3218 = vadd.f32 %v3018, %v3217
        %v3219 = vpop.f32.mrf.mxu0
        %v3220 = vpop.f32.mrf.mxu0
        %v3221 = vadd.f32 %v3021, %v3220
        %v3222 = vpop.f32.mrf.mxu0
        %3223 = vmatprep.mubr.bf16.mxu0 %v1869
        %3224 = vmatmul.mubr.bf16.gmra.mxu0 %v1868
        %v3225 = vpop.f32.mrf.mxu0
        %v3226 = vadd.f32 %v3026, %v3225
        %v3227 = vpop.f32.mrf.mxu0
        %v3228 = vpop.f32.mrf.mxu0
        %v3229 = vadd.f32 %v3029, %v3228
        %v3230 = vpop.f32.mrf.mxu0
        %3231 = vmatprep.mubr.bf16.mxu0 %v1876
        %3232 = vmatmul.mubr.bf16.gmra.mxu0 %v1875
        %v3233 = vpop.f32.mrf.mxu0
        %v3234 = vadd.f32 %v3034, %v3233
        %v3235 = vpop.f32.mrf.mxu0
        %v3236 = vpop.f32.mrf.mxu0
        %v3237 = vadd.f32 %v3037, %v3236
        %v3238 = vpop.f32.mrf.mxu0
        %3239 = vmatprep.mubr.bf16.mxu0 %v1883
        %3240 = vmatmul.mubr.bf16.gmra.mxu0 %v1882
        %v3241 = vpop.f32.mrf.mxu0
        %v3242 = vadd.f32 %v3042, %v3241
        %v3243 = vpop.f32.mrf.mxu0
        %v3244 = vpop.f32.mrf.mxu0
        %v3245 = vadd.f32 %v3045, %v3244
        %v3246 = vpop.f32.mrf.mxu0
        %3247 = vmatprep.mubr.bf16.mxu0 %v1890
        %3248 = vmatmul.mubr.bf16.gmra.mxu0 %v1889
        %v3249 = vpop.f32.mrf.mxu0
        %v3250 = vadd.f32 %v3050, %v3249
        %v3251 = vpop.f32.mrf.mxu0
        %v3252 = vpop.f32.mrf.mxu0
        %v3253 = vadd.f32 %v3053, %v3252
        %v3254 = vpop.f32.mrf.mxu0
        %3255 = vmatprep.mubr.bf16.mxu0 %v1897
        %3256 = vmatmul.mubr.bf16.gmra.mxu0 %v1896
        %v3257 = vpop.f32.mrf.mxu0
        %v3258 = vadd.f32 %v3058, %v3257
        %v3259 = vpop.f32.mrf.mxu0
        %v3260 = vpop.f32.mrf.mxu0
        %v3261 = vadd.f32 %v3061, %v3260
        %v3262 = vpop.f32.mrf.mxu0
        %3263 = vmatprep.mubr.bf16.mxu0 %v1904
        %3264 = vmatmul.mubr.bf16.gmra.mxu0 %v1903
        %v3265 = vpop.f32.mrf.mxu0
        %v3266 = vadd.f32 %v3066, %v3265
        %v3267 = vpop.f32.mrf.mxu0
        %v3268 = vpop.f32.mrf.mxu0
        %v3269 = vadd.f32 %v3069, %v3268
        %v3270 = vpop.f32.mrf.mxu0
        %3271 = vmatprep.mubr.bf16.mxu0 %v1911
        %3272 = vmatmul.mubr.bf16.gmra.mxu0 %v1910
        %v3273 = vpop.f32.mrf.mxu0
        %v3274 = vadd.f32 %v3074, %v3273
        %v3275 = vpop.f32.mrf.mxu0
        %v3276 = vpop.f32.mrf.mxu0
        %v3277 = vadd.f32 %v3077, %v3276
        %v3278 = vpop.f32.mrf.mxu0
        %3279 = vmatprep.mubr.bf16.mxu0 %v1918
        %3280 = vmatmul.mubr.bf16.gmra.mxu0 %v1917
        %v3281 = vpop.f32.mrf.mxu0
        %v3282 = vadd.f32 %v3082, %v3281
        %v3283 = vpop.f32.mrf.mxu0
        %v3284 = vpop.f32.mrf.mxu0
        %v3285 = vadd.f32 %v3085, %v3284
        %v3286 = vpop.f32.mrf.mxu0
        %3287 = vmatprep.mubr.bf16.mxu0 %v1925
        %3288 = vmatmul.mubr.bf16.gmra.mxu0 %v1924
        %v3289 = vpop.f32.mrf.mxu0
        %v3290 = vadd.f32 %v3090, %v3289
        %v3291 = vpop.f32.mrf.mxu0
        %v3292 = vpop.f32.mrf.mxu0
        %v3293 = vadd.f32 %v3093, %v3292
        %v3294 = vpop.f32.mrf.mxu0
        %3295 = vmatprep.mubr.bf16.mxu0 %v1932
        %3296 = vmatmul.mubr.bf16.gmra.mxu0 %v1931
        %v3297 = vpop.f32.mrf.mxu0
        %v3298 = vadd.f32 %v3098, %v3297
        %v3299 = vpop.f32.mrf.mxu0
        %v3300 = vpop.f32.mrf.mxu0
        %v3301 = vadd.f32 %v3101, %v3300
        %v3302 = vpop.f32.mrf.mxu0
        %3303 = vmatprep.mubr.bf16.mxu0 %v1939
        %3304 = vmatmul.mubr.bf16.gmra.mxu0 %v1938
        %v3305 = vpop.f32.mrf.mxu0
        %v3306 = vadd.f32 %v3106, %v3305
        %v3307 = vpop.f32.mrf.mxu0
        %v3308 = vpop.f32.mrf.mxu0
        %v3309 = vadd.f32 %v3109, %v3308
        %v3310 = vpop.f32.mrf.mxu0
        %3311 = vmatprep.mubr.bf16.mxu0 %v1946
        %3312 = vmatmul.mubr.bf16.gmra.mxu0 %v1945
        %v3313 = vpop.f32.mrf.mxu0
        %v3314 = vadd.f32 %v3114, %v3313
        %v3315 = vpop.f32.mrf.mxu0
        %v3316 = vpop.f32.mrf.mxu0
        %v3317 = vadd.f32 %v3117, %v3316
        %v3318 = vpop.f32.mrf.mxu0
        %3319 = vmatprep.mubr.bf16.mxu0 %v1953
        %3320 = vmatmul.mubr.bf16.gmra.mxu0 %v1952
        %v3321 = vpop.f32.mrf.mxu0
        %v3322 = vadd.f32 %v3122, %v3321
        %v3323 = vpop.f32.mrf.mxu0
        %v3324 = vpop.f32.mrf.mxu0
        %v3325 = vadd.f32 %v3125, %v3324
        %v3326 = vpop.f32.mrf.mxu0
        %3327 = vmatprep.mubr.bf16.mxu0 %v1960
        %3328 = vmatmul.mubr.bf16.gmra.mxu0 %v1959
        %v3329 = vpop.f32.mrf.mxu0
        %v3330 = vadd.f32 %v3130, %v3329
        %v3331 = vpop.f32.mrf.mxu0
        %v3332 = vpop.f32.mrf.mxu0
        %v3333 = vadd.f32 %v3133, %v3332
        %v3334 = vpop.f32.mrf.mxu0
        %3335 = vmatprep.mubr.bf16.mxu0 %v1967
        %3336 = vmatmul.mubr.bf16.gmra.mxu0 %v1966
        %v3337 = vpop.f32.mrf.mxu0
        %v3338 = vadd.f32 %v3138, %v3337
        %v3339 = vpop.f32.mrf.mxu0
        %v3340 = vpop.f32.mrf.mxu0
        %v3341 = vadd.f32 %v3141, %v3340
        %v3342 = vpop.f32.mrf.mxu0
        %3343 = vmatprep.mubr.bf16.mxu0 %v1974
        %3344 = vmatmul.mubr.bf16.gmra.mxu0 %v1973
        %v3345 = vpop.f32.mrf.mxu0
        %v3346 = vadd.f32 %v3146, %v3345
        %v3347 = vpop.f32.mrf.mxu0
        %v3348 = vpop.f32.mrf.mxu0
        %v3349 = vadd.f32 %v3149, %v3348
        %v3350 = vpop.f32.mrf.mxu0
        %3351 = vmatprep.mubr.bf16.mxu0 %v1981
        %3352 = vmatmul.mubr.bf16.gmra.mxu0 %v1980
        %v3353 = vpop.f32.mrf.mxu0
        %v3354 = vadd.f32 %v3154, %v3353
        %v3355 = vpop.f32.mrf.mxu0
        %v3356 = vpop.f32.mrf.mxu0
        %v3357 = vadd.f32 %v3157, %v3356
        %v3358 = vpop.f32.mrf.mxu0
        %3359 = vmatprep.mubr.bf16.mxu0 %v1988
        %3360 = vmatmul.mubr.bf16.gmra.mxu0 %v1987
        %v3361 = vpop.f32.mrf.mxu0
        %v3362 = vadd.f32 %v3162, %v3361
        %v3363 = vpop.f32.mrf.mxu0
        %v3364 = vpop.f32.mrf.mxu0
        %v3365 = vadd.f32 %v3165, %v3364
        %v3366 = vpop.f32.mrf.mxu0
        %3367 = vmatprep.mubr.bf16.mxu0 %v1997
        %3368 = vmatmul.mubr.bf16.gmra.mxu0 %v1996
        %v3369 = vpop.f32.mrf.mxu0
        %v3370 = vadd.f32 %v3170, %v3369
        %v3371 = vpop.f32.mrf.mxu0
        %v3372 = vpop.f32.mrf.mxu0
        %v3373 = vpop.f32.mrf.mxu0
        %3374 = vdwg.mxu0
        %3375 = vmatprep.subr.bf16.mxu0 0
        %3376 = vmatpush1.bf16.msra.mxu0 %v2502
        %3377 = vmatprep.subr.bf16.mxu0 0
        %3378 = vmatpush1.bf16.msra.mxu0 %v2501
        %3379 = vmatprep.subr.bf16.mxu0 0
        %3380 = vmatpush1.bf16.msra.mxu0 %v2500
        %3381 = vmatprep.subr.bf16.mxu0 0
        %3382 = vmatpush1.bf16.msra.mxu0 %v2499
        %3383 = vmatprep.subr.bf16.mxu0 0
        %3384 = vmatpush1.bf16.msra.mxu0 %v2498
        %3385 = vmatprep.subr.bf16.mxu0 0
        %3386 = vmatpush1.bf16.msra.mxu0 %v2497
        %3387 = vmatprep.subr.bf16.mxu0 0
        %3388 = vmatpush1.bf16.msra.mxu0 %v2496
        %3389 = vmatprep.subr.bf16.mxu0 0
        %3390 = vmatpush1.bf16.msra.mxu0 %v2495
        %3391 = vmatprep.subr.bf16.mxu0 0
        %3392 = vmatpush2.bf16.msra.mxu0 0
        %3393 = vmatprep.subr.bf16.mxu0 0
        %3394 = vmatpush2.bf16.msra.mxu0 0
        %3395 = vmatprep.subr.bf16.mxu0 0
        %3396 = vmatpush2.bf16.msra.mxu0 0
        %3397 = vmatprep.subr.bf16.mxu0 0
        %3398 = vmatpush2.bf16.msra.mxu0 0
        %3399 = vmatprep.subr.bf16.mxu0 0
        %3400 = vmatpush2.bf16.msra.mxu0 0
        %3401 = vmatprep.subr.bf16.mxu0 0
        %3402 = vmatpush2.bf16.msra.mxu0 0
        %3403 = vmatprep.subr.bf16.mxu0 0
        %3404 = vmatpush2.bf16.msra.mxu0 0
        %3405 = vmatprep.subr.bf16.mxu0 0
        %3406 = vmatpush2.bf16.msra.mxu0 0
        %3407 = vmatprep.mubr.bf16.mxu0 0
        %3408 = vmatmul.mubr.bf16.gmra.mxu0 %v1856
        %v3409 = vpop.f32.mrf.mxu0
        %v3410 = vadd.f32 %v3210, %v3409
        %v3411 = vpop.f32.mrf.mxu0
        %v3412 = vpop.f32.mrf.mxu0
        %v3413 = vadd.f32 %v3213, %v3412
        %v3414 = vpop.f32.mrf.mxu0
        %3415 = vmatprep.mubr.bf16.mxu0 0
        %3416 = vmatmul.mubr.bf16.gmra.mxu0 %v1863
        %v3417 = vpop.f32.mrf.mxu0
        %v3418 = vadd.f32 %v3218, %v3417
        %v3419 = vpop.f32.mrf.mxu0
        %v3420 = vpop.f32.mrf.mxu0
        %v3421 = vadd.f32 %v3221, %v3420
        %v3422 = vpop.f32.mrf.mxu0
        %3423 = vmatprep.mubr.bf16.mxu0 0
        %3424 = vmatmul.mubr.bf16.gmra.mxu0 %v1870
        %v3425 = vpop.f32.mrf.mxu0
        %v3426 = vadd.f32 %v3226, %v3425
        %v3427 = vpop.f32.mrf.mxu0
        %v3428 = vpop.f32.mrf.mxu0
        %v3429 = vadd.f32 %v3229, %v3428
        %v3430 = vpop.f32.mrf.mxu0
        %3431 = vmatprep.mubr.bf16.mxu0 0
        %3432 = vmatmul.mubr.bf16.gmra.mxu0 %v1877
        %v3433 = vpop.f32.mrf.mxu0
        %v3434 = vadd.f32 %v3234, %v3433
        %v3435 = vpop.f32.mrf.mxu0
        %v3436 = vpop.f32.mrf.mxu0
        %v3437 = vadd.f32 %v3237, %v3436
        %v3438 = vpop.f32.mrf.mxu0
        %3439 = vmatprep.mubr.bf16.mxu0 0
        %3440 = vmatmul.mubr.bf16.gmra.mxu0 %v1884
        %v3441 = vpop.f32.mrf.mxu0
        %v3442 = vadd.f32 %v3242, %v3441
        %v3443 = vpop.f32.mrf.mxu0
        %v3444 = vpop.f32.mrf.mxu0
        %v3445 = vadd.f32 %v3245, %v3444
        %v3446 = vpop.f32.mrf.mxu0
        %3447 = vmatprep.mubr.bf16.mxu0 0
        %3448 = vmatmul.mubr.bf16.gmra.mxu0 %v1891
        %v3449 = vpop.f32.mrf.mxu0
        %v3450 = vadd.f32 %v3250, %v3449
        %v3451 = vpop.f32.mrf.mxu0
        %v3452 = vpop.f32.mrf.mxu0
        %v3453 = vadd.f32 %v3253, %v3452
        %v3454 = vpop.f32.mrf.mxu0
        %3455 = vmatprep.mubr.bf16.mxu0 0
        %3456 = vmatmul.mubr.bf16.gmra.mxu0 %v1898
        %v3457 = vpop.f32.mrf.mxu0
        %v3458 = vadd.f32 %v3258, %v3457
        %v3459 = vpop.f32.mrf.mxu0
        %v3460 = vpop.f32.mrf.mxu0
        %v3461 = vadd.f32 %v3261, %v3460
        %v3462 = vpop.f32.mrf.mxu0
        %3463 = vmatprep.mubr.bf16.mxu0 0
        %3464 = vmatmul.mubr.bf16.gmra.mxu0 %v1905
        %v3465 = vpop.f32.mrf.mxu0
        %v3466 = vadd.f32 %v3266, %v3465
        %v3467 = vpop.f32.mrf.mxu0
        %v3468 = vpop.f32.mrf.mxu0
        %v3469 = vadd.f32 %v3269, %v3468
        %v3470 = vpop.f32.mrf.mxu0
        %3471 = vmatprep.mubr.bf16.mxu0 0
        %3472 = vmatmul.mubr.bf16.gmra.mxu0 %v1912
        %v3473 = vpop.f32.mrf.mxu0
        %v3474 = vadd.f32 %v3274, %v3473
        %v3475 = vpop.f32.mrf.mxu0
        %v3476 = vpop.f32.mrf.mxu0
        %v3477 = vadd.f32 %v3277, %v3476
        %v3478 = vpop.f32.mrf.mxu0
        %3479 = vmatprep.mubr.bf16.mxu0 0
        %3480 = vmatmul.mubr.bf16.gmra.mxu0 %v1919
        %v3481 = vpop.f32.mrf.mxu0
        %v3482 = vadd.f32 %v3282, %v3481
        %v3483 = vpop.f32.mrf.mxu0
        %v3484 = vpop.f32.mrf.mxu0
        %v3485 = vadd.f32 %v3285, %v3484
        %v3486 = vpop.f32.mrf.mxu0
        %3487 = vmatprep.mubr.bf16.mxu0 0
        %3488 = vmatmul.mubr.bf16.gmra.mxu0 %v1926
        %v3489 = vpop.f32.mrf.mxu0
        %v3490 = vadd.f32 %v3290, %v3489
        %v3491 = vpop.f32.mrf.mxu0
        %v3492 = vpop.f32.mrf.mxu0
        %v3493 = vadd.f32 %v3293, %v3492
        %v3494 = vpop.f32.mrf.mxu0
        %3495 = vmatprep.mubr.bf16.mxu0 0
        %3496 = vmatmul.mubr.bf16.gmra.mxu0 %v1933
        %v3497 = vpop.f32.mrf.mxu0
        %v3498 = vadd.f32 %v3298, %v3497
        %v3499 = vpop.f32.mrf.mxu0
        %v3500 = vpop.f32.mrf.mxu0
        %v3501 = vadd.f32 %v3301, %v3500
        %v3502 = vpop.f32.mrf.mxu0
        %3503 = vmatprep.mubr.bf16.mxu0 0
        %3504 = vmatmul.mubr.bf16.gmra.mxu0 %v1940
        %v3505 = vpop.f32.mrf.mxu0
        %v3506 = vadd.f32 %v3306, %v3505
        %v3507 = vpop.f32.mrf.mxu0
        %v3508 = vpop.f32.mrf.mxu0
        %v3509 = vadd.f32 %v3309, %v3508
        %v3510 = vpop.f32.mrf.mxu0
        %3511 = vmatprep.mubr.bf16.mxu0 0
        %3512 = vmatmul.mubr.bf16.gmra.mxu0 %v1947
        %v3513 = vpop.f32.mrf.mxu0
        %v3514 = vadd.f32 %v3314, %v3513
        %v3515 = vpop.f32.mrf.mxu0
        %v3516 = vpop.f32.mrf.mxu0
        %v3517 = vadd.f32 %v3317, %v3516
        %v3518 = vpop.f32.mrf.mxu0
        %3519 = vmatprep.mubr.bf16.mxu0 0
        %3520 = vmatmul.mubr.bf16.gmra.mxu0 %v1954
        %v3521 = vpop.f32.mrf.mxu0
        %v3522 = vadd.f32 %v3322, %v3521
        %v3523 = vpop.f32.mrf.mxu0
        %v3524 = vpop.f32.mrf.mxu0
        %v3525 = vadd.f32 %v3325, %v3524
        %v3526 = vpop.f32.mrf.mxu0
        %3527 = vmatprep.mubr.bf16.mxu0 0
        %3528 = vmatmul.mubr.bf16.gmra.mxu0 %v1961
        %v3529 = vpop.f32.mrf.mxu0
        %v3530 = vadd.f32 %v3330, %v3529
        %v3531 = vpop.f32.mrf.mxu0
        %v3532 = vpop.f32.mrf.mxu0
        %v3533 = vadd.f32 %v3333, %v3532
        %v3534 = vpop.f32.mrf.mxu0
        %3535 = vmatprep.mubr.bf16.mxu0 0
        %3536 = vmatmul.mubr.bf16.gmra.mxu0 %v1968
        %v3537 = vpop.f32.mrf.mxu0
        %v3538 = vadd.f32 %v3338, %v3537
        %v3539 = vpop.f32.mrf.mxu0
        %v3540 = vpop.f32.mrf.mxu0
        %v3541 = vadd.f32 %v3341, %v3540
        %v3542 = vpop.f32.mrf.mxu0
        %3543 = vmatprep.mubr.bf16.mxu0 0
        %3544 = vmatmul.mubr.bf16.gmra.mxu0 %v1975
        %v3545 = vpop.f32.mrf.mxu0
        %v3546 = vadd.f32 %v3346, %v3545
        %v3547 = vpop.f32.mrf.mxu0
        %v3548 = vpop.f32.mrf.mxu0
        %v3549 = vadd.f32 %v3349, %v3548
        %v3550 = vpop.f32.mrf.mxu0
        %3551 = vmatprep.mubr.bf16.mxu0 0
        %3552 = vmatmul.mubr.bf16.gmra.mxu0 %v1982
        %v3553 = vpop.f32.mrf.mxu0
        %v3554 = vadd.f32 %v3354, %v3553
        %v3555 = vpop.f32.mrf.mxu0
        %v3556 = vpop.f32.mrf.mxu0
        %v3557 = vadd.f32 %v3357, %v3556
        %v3558 = vpop.f32.mrf.mxu0
        %3559 = vmatprep.mubr.bf16.mxu0 0
        %3560 = vmatmul.mubr.bf16.gmra.mxu0 %v1989
        %v3561 = vpop.f32.mrf.mxu0
        %v3562 = vadd.f32 %v3362, %v3561
        %v3563 = vpop.f32.mrf.mxu0
        %v3564 = vpop.f32.mrf.mxu0
        %v3565 = vadd.f32 %v3365, %v3564
        %v3566 = vpop.f32.mrf.mxu0
        %3567 = vmatprep.mubr.bf16.mxu0 0
        %3568 = vmatmul.mubr.bf16.gmra.mxu0 %v1998
        %v3569 = vpop.f32.mrf.mxu0
        %v3570 = vadd.f32 %v3370, %v3569
        %v3571 = vpop.f32.mrf.mxu0
        %v3572 = vpop.f32.mrf.mxu0
        %v3573 = vpop.f32.mrf.mxu0
        %3574 = vdwg.mxu0
        %v3575 = vld [vmem:[%s8] sm:$0x1]
        %v3577 = vlaneseq
        %v3578 = vshrl.u32 %v3577, 7
        %v3579 = vsub.s32 0, %v3578
        %v3580 = vrot.slane %v3575, %v3579
        %v3582 = vmul.f32 %v3410, %v3580
        %v3583 = vmul.f32 %v3413, %v3580
        %v3584 = vmul.f32 %v3418, %v3580
        %v3585 = vmul.f32 %v3421, %v3580
        %v3586 = vmul.f32 %v3426, %v3580
        %v3587 = vmul.f32 %v3429, %v3580
        %v3588 = vmul.f32 %v3434, %v3580
        %v3589 = vmul.f32 %v3437, %v3580
        %v3590 = vmul.f32 %v3442, %v3580
        %v3591 = vmul.f32 %v3445, %v3580
        %v3592 = vmul.f32 %v3450, %v3580
        %v3593 = vmul.f32 %v3453, %v3580
        %v3594 = vmul.f32 %v3458, %v3580
        %v3595 = vmul.f32 %v3461, %v3580
        %v3596 = vmul.f32 %v3466, %v3580
        %v3597 = vmul.f32 %v3469, %v3580
        %v3598 = vmul.f32 %v3474, %v3580
        %v3599 = vmul.f32 %v3477, %v3580
        %v3600 = vmul.f32 %v3482, %v3580
        %v3601 = vmul.f32 %v3485, %v3580
        %v3602 = vmul.f32 %v3490, %v3580
        %v3603 = vmul.f32 %v3493, %v3580
        %v3604 = vmul.f32 %v3498, %v3580
        %v3605 = vmul.f32 %v3501, %v3580
        %v3606 = vmul.f32 %v3506, %v3580
        %v3607 = vmul.f32 %v3509, %v3580
        %v3608 = vmul.f32 %v3514, %v3580
        %v3609 = vmul.f32 %v3517, %v3580
        %v3610 = vmul.f32 %v3522, %v3580
        %v3611 = vmul.f32 %v3525, %v3580
        %v3612 = vmul.f32 %v3530, %v3580
        %v3613 = vmul.f32 %v3533, %v3580
        %v3614 = vmul.f32 %v3538, %v3580
        %v3615 = vmul.f32 %v3541, %v3580
        %v3616 = vmul.f32 %v3546, %v3580
        %v3617 = vmul.f32 %v3549, %v3580
        %v3618 = vmul.f32 %v3554, %v3580
        %v3619 = vmul.f32 %v3557, %v3580
        %v3620 = vmul.f32 %v3562, %v3580
        %v3621 = vmul.f32 %v3565, %v3580
        %v3622 = vmul.f32 %v3570, %v3580
        %v3623 = vld [vmem:[%s9] sm:$0x1]
        %v3625 = vlaneseq
        %v3626 = vshrl.u32 %v3625, 7
        %v3627 = vsub.s32 0, %v3626
        %v3628 = vrot.slane %v3623, %v3627
        %v3630 = vadd.f32 %v3582, %v3628
        %v3631 = vadd.f32 %v3583, %v3628
        %v3632 = vadd.f32 %v3584, %v3628
        %v3633 = vadd.f32 %v3585, %v3628
        %v3634 = vadd.f32 %v3586, %v3628
        %v3635 = vadd.f32 %v3587, %v3628
        %v3636 = vadd.f32 %v3588, %v3628
        %v3637 = vadd.f32 %v3589, %v3628
        %v3638 = vadd.f32 %v3590, %v3628
        %v3639 = vadd.f32 %v3591, %v3628
        %v3640 = vadd.f32 %v3592, %v3628
        %v3641 = vadd.f32 %v3593, %v3628
        %v3642 = vadd.f32 %v3594, %v3628
        %v3643 = vadd.f32 %v3595, %v3628
        %v3644 = vadd.f32 %v3596, %v3628
        %v3645 = vadd.f32 %v3597, %v3628
        %v3646 = vadd.f32 %v3598, %v3628
        %v3647 = vadd.f32 %v3599, %v3628
        %v3648 = vadd.f32 %v3600, %v3628
        %v3649 = vadd.f32 %v3601, %v3628
        %v3650 = vadd.f32 %v3602, %v3628
        %v3651 = vadd.f32 %v3603, %v3628
        %v3652 = vadd.f32 %v3604, %v3628
        %v3653 = vadd.f32 %v3605, %v3628
        %v3654 = vadd.f32 %v3606, %v3628
        %v3655 = vadd.f32 %v3607, %v3628
        %v3656 = vadd.f32 %v3608, %v3628
        %v3657 = vadd.f32 %v3609, %v3628
        %v3658 = vadd.f32 %v3610, %v3628
        %v3659 = vadd.f32 %v3611, %v3628
        %v3660 = vadd.f32 %v3612, %v3628
        %v3661 = vadd.f32 %v3613, %v3628
        %v3662 = vadd.f32 %v3614, %v3628
        %v3663 = vadd.f32 %v3615, %v3628
        %v3664 = vadd.f32 %v3616, %v3628
        %v3665 = vadd.f32 %v3617, %v3628
        %v3666 = vadd.f32 %v3618, %v3628
        %v3667 = vadd.f32 %v3619, %v3628
        %v3668 = vadd.f32 %v3620, %v3628
        %v3669 = vadd.f32 %v3621, %v3628
        %v3670 = vadd.f32 %v3622, %v3628
        %v3671 = vmax.f32 %v3630, 0.0
        %v3672 = vmax.f32 %v3631, 0.0
        %v3673 = vmax.f32 %v3632, 0.0
        %v3674 = vmax.f32 %v3633, 0.0
        %v3675 = vmax.f32 %v3634, 0.0
        %v3676 = vmax.f32 %v3635, 0.0
        %v3677 = vmax.f32 %v3636, 0.0
        %v3678 = vmax.f32 %v3637, 0.0
        %v3679 = vmax.f32 %v3638, 0.0
        %v3680 = vmax.f32 %v3639, 0.0
        %v3681 = vmax.f32 %v3640, 0.0
        %v3682 = vmax.f32 %v3641, 0.0
        %v3683 = vmax.f32 %v3642, 0.0
        %v3684 = vmax.f32 %v3643, 0.0
        %v3685 = vmax.f32 %v3644, 0.0
        %v3686 = vmax.f32 %v3645, 0.0
        %v3687 = vmax.f32 %v3646, 0.0
        %v3688 = vmax.f32 %v3647, 0.0
        %v3689 = vmax.f32 %v3648, 0.0
        %v3690 = vmax.f32 %v3649, 0.0
        %v3691 = vmax.f32 %v3650, 0.0
        %v3692 = vmax.f32 %v3651, 0.0
        %v3693 = vmax.f32 %v3652, 0.0
        %v3694 = vmax.f32 %v3653, 0.0
        %v3695 = vmax.f32 %v3654, 0.0
        %v3696 = vmax.f32 %v3655, 0.0
        %v3697 = vmax.f32 %v3656, 0.0
        %v3698 = vmax.f32 %v3657, 0.0
        %v3699 = vmax.f32 %v3658, 0.0
        %v3700 = vmax.f32 %v3659, 0.0
        %v3701 = vmax.f32 %v3660, 0.0
        %v3702 = vmax.f32 %v3661, 0.0
        %v3703 = vmax.f32 %v3662, 0.0
        %v3704 = vmax.f32 %v3663, 0.0
        %v3705 = vmax.f32 %v3664, 0.0
        %v3706 = vmax.f32 %v3665, 0.0
        %v3707 = vmax.f32 %v3666, 0.0
        %v3708 = vmax.f32 %v3667, 0.0
        %v3709 = vmax.f32 %v3668, 0.0
        %v3710 = vmax.f32 %v3669, 0.0
        %v3711 = vmax.f32 %v3670, 0.0
        %v3712 = vpack.c.bf16 %v3672, %v3671
        %v3713 = vpack.c.bf16 %v3674, %v3673
        %v3714 = vpack.c.bf16 %v3676, %v3675
        %v3715 = vpack.c.bf16 %v3678, %v3677
        %v3716 = vpack.c.bf16 %v3680, %v3679
        %v3717 = vpack.c.bf16 %v3682, %v3681
        %v3718 = vpack.c.bf16 %v3684, %v3683
        %v3719 = vpack.c.bf16 %v3686, %v3685
        %v3720 = vpack.c.bf16 %v3688, %v3687
        %v3721 = vpack.c.bf16 %v3690, %v3689
        %v3722 = vpack.c.bf16 %v3692, %v3691
        %v3723 = vpack.c.bf16 %v3694, %v3693
        %v3724 = vpack.c.bf16 %v3696, %v3695
        %v3725 = vpack.c.bf16 %v3698, %v3697
        %v3726 = vpack.c.bf16 %v3700, %v3699
        %v3727 = vpack.c.bf16 %v3702, %v3701
        %v3728 = vpack.c.bf16 %v3704, %v3703
        %v3729 = vpack.c.bf16 %v3706, %v3705
        %v3730 = vpack.c.bf16 %v3708, %v3707
        %v3731 = vpack.c.bf16 %v3710, %v3709
        %v3732 = vpack.c.bf16 %v3711, %v3711
        %v3733 = vld [vmem:[%s10] sm:$0xf]
        %v3734 = vld [vmem:[%s10 + $0x4] sm:$0xf]
        %v3735 = vld [vmem:[%s10 + $0x8] sm:$0xf]
        %v3736 = vld [vmem:[%s10 + $0xc] sm:$0xf]
        %v3737 = vld [vmem:[%s10 + $0x10] sm:$0xf]
        %v3738 = vld [vmem:[%s10 + $0x14] sm:$0xf]
        %v3739 = vld [vmem:[%s10 + $0x18] sm:$0xf]
        %v3740 = vld [vmem:[%s10 + $0x1c] sm:$0xf]
        %v3741 = vld [vmem:[%s10 + $0x20] sm:$0xf]
        %v3742 = vld [vmem:[%s10 + $0x24] sm:$0xf]
        %v3743 = vld [vmem:[%s10 + $0x28] sm:$0xf]
        %v3744 = vld [vmem:[%s10 + $0x2c] sm:$0xf]
        %v3745 = vld [vmem:[%s10 + $0x30] sm:$0xf]
        %v3746 = vld [vmem:[%s10 + $0x34] sm:$0xf]
        %v3747 = vld [vmem:[%s10 + $0x38] sm:$0xf]
        %v3748 = vld [vmem:[%s10 + $0x3c] sm:$0xf]
        %v3765 = vunpack.c.l.b16 %v3733
        %v3766 = vunpack.c.l.b16 %v3734
        %v3767 = vunpack.c.l.b16 %v3735
        %v3768 = vunpack.c.l.b16 %v3736
        %v3769 = vunpack.c.l.b16 %v3737
        %v3770 = vunpack.c.l.b16 %v3738
        %v3771 = vunpack.c.l.b16 %v3739
        %v3772 = vunpack.c.l.b16 %v3740
        %v3773 = vunpack.c.l.b16 %v3741
        %v3774 = vunpack.c.l.b16 %v3742
        %v3775 = vunpack.c.l.b16 %v3743
        %v3776 = vunpack.c.l.b16 %v3744
        %v3777 = vunpack.c.l.b16 %v3745
        %v3778 = vunpack.c.l.b16 %v3746
        %v3779 = vunpack.c.l.b16 %v3747
        %v3780 = vunpack.c.l.b16 %v3748
        %v3781 = vpack.c.b16 %v3766, %v3765
        %v3782 = vpack.c.b16 %v3768, %v3767
        %v3783 = vpack.c.b16 %v3770, %v3769
        %v3784 = vpack.c.b16 %v3772, %v3771
        %v3785 = vpack.c.b16 %v3774, %v3773
        %v3786 = vpack.c.b16 %v3776, %v3775
        %v3787 = vpack.c.b16 %v3778, %v3777
        %v3788 = vpack.c.b16 %v3780, %v3779
        %3797 = vmatprep.subr.bf16.mxu0 0
        %3798 = vmatpush1.bf16.msra.mxu0 %v3788
        %3799 = vmatprep.subr.bf16.mxu0 0
        %3800 = vmatpush1.bf16.msra.mxu0 %v3787
        %3801 = vmatprep.subr.bf16.mxu0 0
        %3802 = vmatpush1.bf16.msra.mxu0 %v3786
        %3803 = vmatprep.subr.bf16.mxu0 0
        %3804 = vmatpush1.bf16.msra.mxu0 %v3785
        %3805 = vmatprep.subr.bf16.mxu0 0
        %3806 = vmatpush1.bf16.msra.mxu0 %v3784
        %3807 = vmatprep.subr.bf16.mxu0 0
        %3808 = vmatpush1.bf16.msra.mxu0 %v3783
        %3809 = vmatprep.subr.bf16.mxu0 0
        %3810 = vmatpush1.bf16.msra.mxu0 %v3782
        %3811 = vmatprep.subr.bf16.mxu0 0
        %3812 = vmatpush1.bf16.msra.mxu0 %v3781
        %3813 = vmatprep.subr.bf16.mxu0 0
        %3814 = vmatpush2.bf16.msra.mxu0 0
        %3815 = vmatprep.subr.bf16.mxu0 0
        %3816 = vmatpush2.bf16.msra.mxu0 0
        %3817 = vmatprep.subr.bf16.mxu0 0
        %3818 = vmatpush2.bf16.msra.mxu0 0
        %3819 = vmatprep.subr.bf16.mxu0 0
        %3820 = vmatpush2.bf16.msra.mxu0 0
        %3821 = vmatprep.subr.bf16.mxu0 0
        %3822 = vmatpush2.bf16.msra.mxu0 0
        %3823 = vmatprep.subr.bf16.mxu0 0
        %3824 = vmatpush2.bf16.msra.mxu0 0
        %3825 = vmatprep.subr.bf16.mxu0 0
        %3826 = vmatpush2.bf16.msra.mxu0 0
        %3827 = vmatprep.subr.bf16.mxu0 0
        %3828 = vmatpush2.bf16.msra.mxu0 0
        %3829 = vmatprep.mubr.bf16.mxu0 0
        %3830 = vmatmul.mubr.bf16.gmra.mxu0 %v3712
        %v3831 = vpop.f32.mrf.mxu0
        %v3832 = vadd.f32 0.0, %v3831
        %v3833 = vpop.f32.mrf.mxu0
        %v3834 = vpop.f32.mrf.mxu0
        %v3835 = vadd.f32 0.0, %v3834
        %v3836 = vpop.f32.mrf.mxu0
        %3837 = vmatprep.mubr.bf16.mxu0 0
        %3838 = vmatmul.mubr.bf16.gmra.mxu0 %v3713
        %v3839 = vpop.f32.mrf.mxu0
        %v3840 = vadd.f32 0.0, %v3839
        %v3841 = vpop.f32.mrf.mxu0
        %v3842 = vpop.f32.mrf.mxu0
        %v3843 = vadd.f32 0.0, %v3842
        %v3844 = vpop.f32.mrf.mxu0
        %3845 = vmatprep.mubr.bf16.mxu0 0
        %3846 = vmatmul.mubr.bf16.gmra.mxu0 %v3714
        %v3847 = vpop.f32.mrf.mxu0
        %v3848 = vadd.f32 0.0, %v3847
        %v3849 = vpop.f32.mrf.mxu0
        %v3850 = vpop.f32.mrf.mxu0
        %v3851 = vadd.f32 0.0, %v3850
        %v3852 = vpop.f32.mrf.mxu0
        %3853 = vmatprep.mubr.bf16.mxu0 0
        %3854 = vmatmul.mubr.bf16.gmra.mxu0 %v3715
        %v3855 = vpop.f32.mrf.mxu0
        %v3856 = vadd.f32 0.0, %v3855
        %v3857 = vpop.f32.mrf.mxu0
        %v3858 = vpop.f32.mrf.mxu0
        %v3859 = vadd.f32 0.0, %v3858
        %v3860 = vpop.f32.mrf.mxu0
        %3861 = vmatprep.mubr.bf16.mxu0 0
        %3862 = vmatmul.mubr.bf16.gmra.mxu0 %v3716
        %v3863 = vpop.f32.mrf.mxu0
        %v3864 = vadd.f32 0.0, %v3863
        %v3865 = vpop.f32.mrf.mxu0
        %v3866 = vpop.f32.mrf.mxu0
        %v3867 = vadd.f32 0.0, %v3866
        %v3868 = vpop.f32.mrf.mxu0
        %3869 = vmatprep.mubr.bf16.mxu0 0
        %3870 = vmatmul.mubr.bf16.gmra.mxu0 %v3717
        %v3871 = vpop.f32.mrf.mxu0
        %v3872 = vadd.f32 0.0, %v3871
        %v3873 = vpop.f32.mrf.mxu0
        %v3874 = vpop.f32.mrf.mxu0
        %v3875 = vadd.f32 0.0, %v3874
        %v3876 = vpop.f32.mrf.mxu0
        %3877 = vmatprep.mubr.bf16.mxu0 0
        %3878 = vmatmul.mubr.bf16.gmra.mxu0 %v3718
        %v3879 = vpop.f32.mrf.mxu0
        %v3880 = vadd.f32 0.0, %v3879
        %v3881 = vpop.f32.mrf.mxu0
        %v3882 = vpop.f32.mrf.mxu0
        %v3883 = vadd.f32 0.0, %v3882
        %v3884 = vpop.f32.mrf.mxu0
        %3885 = vmatprep.mubr.bf16.mxu0 0
        %3886 = vmatmul.mubr.bf16.gmra.mxu0 %v3719
        %v3887 = vpop.f32.mrf.mxu0
        %v3888 = vadd.f32 0.0, %v3887
        %v3889 = vpop.f32.mrf.mxu0
        %v3890 = vpop.f32.mrf.mxu0
        %v3891 = vadd.f32 0.0, %v3890
        %v3892 = vpop.f32.mrf.mxu0
        %3893 = vmatprep.mubr.bf16.mxu0 0
        %3894 = vmatmul.mubr.bf16.gmra.mxu0 %v3720
        %v3895 = vpop.f32.mrf.mxu0
        %v3896 = vadd.f32 0.0, %v3895
        %v3897 = vpop.f32.mrf.mxu0
        %v3898 = vpop.f32.mrf.mxu0
        %v3899 = vadd.f32 0.0, %v3898
        %v3900 = vpop.f32.mrf.mxu0
        %3901 = vmatprep.mubr.bf16.mxu0 0
        %3902 = vmatmul.mubr.bf16.gmra.mxu0 %v3721
        %v3903 = vpop.f32.mrf.mxu0
        %v3904 = vadd.f32 0.0, %v3903
        %v3905 = vpop.f32.mrf.mxu0
        %v3906 = vpop.f32.mrf.mxu0
        %v3907 = vadd.f32 0.0, %v3906
        %v3908 = vpop.f32.mrf.mxu0
        %3909 = vmatprep.mubr.bf16.mxu0 0
        %3910 = vmatmul.mubr.bf16.gmra.mxu0 %v3722
        %v3911 = vpop.f32.mrf.mxu0
        %v3912 = vadd.f32 0.0, %v3911
        %v3913 = vpop.f32.mrf.mxu0
        %v3914 = vpop.f32.mrf.mxu0
        %v3915 = vadd.f32 0.0, %v3914
        %v3916 = vpop.f32.mrf.mxu0
        %3917 = vmatprep.mubr.bf16.mxu0 0
        %3918 = vmatmul.mubr.bf16.gmra.mxu0 %v3723
        %v3919 = vpop.f32.mrf.mxu0
        %v3920 = vadd.f32 0.0, %v3919
        %v3921 = vpop.f32.mrf.mxu0
        %v3922 = vpop.f32.mrf.mxu0
        %v3923 = vadd.f32 0.0, %v3922
        %v3924 = vpop.f32.mrf.mxu0
        %3925 = vmatprep.mubr.bf16.mxu0 0
        %3926 = vmatmul.mubr.bf16.gmra.mxu0 %v3724
        %v3927 = vpop.f32.mrf.mxu0
        %v3928 = vadd.f32 0.0, %v3927
        %v3929 = vpop.f32.mrf.mxu0
        %v3930 = vpop.f32.mrf.mxu0
        %v3931 = vadd.f32 0.0, %v3930
        %v3932 = vpop.f32.mrf.mxu0
        %3933 = vmatprep.mubr.bf16.mxu0 0
        %3934 = vmatmul.mubr.bf16.gmra.mxu0 %v3725
        %v3935 = vpop.f32.mrf.mxu0
        %v3936 = vadd.f32 0.0, %v3935
        %v3937 = vpop.f32.mrf.mxu0
        %v3938 = vpop.f32.mrf.mxu0
        %v3939 = vadd.f32 0.0, %v3938
        %v3940 = vpop.f32.mrf.mxu0
        %3941 = vmatprep.mubr.bf16.mxu0 0
        %3942 = vmatmul.mubr.bf16.gmra.mxu0 %v3726
        %v3943 = vpop.f32.mrf.mxu0
        %v3944 = vadd.f32 0.0, %v3943
        %v3945 = vpop.f32.mrf.mxu0
        %v3946 = vpop.f32.mrf.mxu0
        %v3947 = vadd.f32 0.0, %v3946
        %v3948 = vpop.f32.mrf.mxu0
        %3949 = vmatprep.mubr.bf16.mxu0 0
        %3950 = vmatmul.mubr.bf16.gmra.mxu0 %v3727
        %v3951 = vpop.f32.mrf.mxu0
        %v3952 = vadd.f32 0.0, %v3951
        %v3953 = vpop.f32.mrf.mxu0
        %v3954 = vpop.f32.mrf.mxu0
        %v3955 = vadd.f32 0.0, %v3954
        %v3956 = vpop.f32.mrf.mxu0
        %3957 = vmatprep.mubr.bf16.mxu0 0
        %3958 = vmatmul.mubr.bf16.gmra.mxu0 %v3728
        %v3959 = vpop.f32.mrf.mxu0
        %v3960 = vadd.f32 0.0, %v3959
        %v3961 = vpop.f32.mrf.mxu0
        %v3962 = vpop.f32.mrf.mxu0
        %v3963 = vadd.f32 0.0, %v3962
        %v3964 = vpop.f32.mrf.mxu0
        %3965 = vmatprep.mubr.bf16.mxu0 0
        %3966 = vmatmul.mubr.bf16.gmra.mxu0 %v3729
        %v3967 = vpop.f32.mrf.mxu0
        %v3968 = vadd.f32 0.0, %v3967
        %v3969 = vpop.f32.mrf.mxu0
        %v3970 = vpop.f32.mrf.mxu0
        %v3971 = vadd.f32 0.0, %v3970
        %v3972 = vpop.f32.mrf.mxu0
        %3973 = vmatprep.mubr.bf16.mxu0 0
        %3974 = vmatmul.mubr.bf16.gmra.mxu0 %v3730
        %v3975 = vpop.f32.mrf.mxu0
        %v3976 = vadd.f32 0.0, %v3975
        %v3977 = vpop.f32.mrf.mxu0
        %v3978 = vpop.f32.mrf.mxu0
        %v3979 = vadd.f32 0.0, %v3978
        %v3980 = vpop.f32.mrf.mxu0
        %3981 = vmatprep.mubr.bf16.mxu0 0
        %3982 = vmatmul.mubr.bf16.gmra.mxu0 %v3731
        %v3983 = vpop.f32.mrf.mxu0
        %v3984 = vadd.f32 0.0, %v3983
        %v3985 = vpop.f32.mrf.mxu0
        %v3986 = vpop.f32.mrf.mxu0
        %v3987 = vadd.f32 0.0, %v3986
        %v3988 = vpop.f32.mrf.mxu0
        %3989 = vmatprep.mubr.bf16.mxu0 0
        %3990 = vmatmul.mubr.bf16.gmra.mxu0 %v3732
        %v3991 = vpop.f32.mrf.mxu0
        %v3992 = vadd.f32 0.0, %v3991
        %v3993 = vpop.f32.mrf.mxu0
        %v3994 = vpop.f32.mrf.mxu0
        %v3995 = vpop.f32.mrf.mxu0
        %3996 = vdwg.mxu0
        %v3997 = vld [vmem:[%s11] sm:$0x1]
        %v3999 = vlaneseq
        %v4000 = vshrl.u32 %v3999, 7
        %v4001 = vsub.s32 0, %v4000
        %v4002 = vrot.slane %v3997, %v4001
        %v4004 = vmul.f32 %v3832, %v4002
        %v4005 = vmul.f32 %v3835, %v4002
        %v4006 = vmul.f32 %v3840, %v4002
        %v4007 = vmul.f32 %v3843, %v4002
        %v4008 = vmul.f32 %v3848, %v4002
        %v4009 = vmul.f32 %v3851, %v4002
        %v4010 = vmul.f32 %v3856, %v4002
        %v4011 = vmul.f32 %v3859, %v4002
        %v4012 = vmul.f32 %v3864, %v4002
        %v4013 = vmul.f32 %v3867, %v4002
        %v4014 = vmul.f32 %v3872, %v4002
        %v4015 = vmul.f32 %v3875, %v4002
        %v4016 = vmul.f32 %v3880, %v4002
        %v4017 = vmul.f32 %v3883, %v4002
        %v4018 = vmul.f32 %v3888, %v4002
        %v4019 = vmul.f32 %v3891, %v4002
        %v4020 = vmul.f32 %v3896, %v4002
        %v4021 = vmul.f32 %v3899, %v4002
        %v4022 = vmul.f32 %v3904, %v4002
        %v4023 = vmul.f32 %v3907, %v4002
        %v4024 = vmul.f32 %v3912, %v4002
        %v4025 = vmul.f32 %v3915, %v4002
        %v4026 = vmul.f32 %v3920, %v4002
        %v4027 = vmul.f32 %v3923, %v4002
        %v4028 = vmul.f32 %v3928, %v4002
        %v4029 = vmul.f32 %v3931, %v4002
        %v4030 = vmul.f32 %v3936, %v4002
        %v4031 = vmul.f32 %v3939, %v4002
        %v4032 = vmul.f32 %v3944, %v4002
        %v4033 = vmul.f32 %v3947, %v4002
        %v4034 = vmul.f32 %v3952, %v4002
        %v4035 = vmul.f32 %v3955, %v4002
        %v4036 = vmul.f32 %v3960, %v4002
        %v4037 = vmul.f32 %v3963, %v4002
        %v4038 = vmul.f32 %v3968, %v4002
        %v4039 = vmul.f32 %v3971, %v4002
        %v4040 = vmul.f32 %v3976, %v4002
        %v4041 = vmul.f32 %v3979, %v4002
        %v4042 = vmul.f32 %v3984, %v4002
        %v4043 = vmul.f32 %v3987, %v4002
        %v4044 = vmul.f32 %v3992, %v4002
        %v4045 = vld [vmem:[%s12] sm:$0x1]
        %v4047 = vlaneseq
        %v4048 = vshrl.u32 %v4047, 7
        %v4049 = vsub.s32 0, %v4048
        %v4050 = vrot.slane %v4045, %v4049
        %v4052 = vadd.f32 %v4004, %v4050
        %v4053 = vadd.f32 %v4005, %v4050
        %v4054 = vadd.f32 %v4006, %v4050
        %v4055 = vadd.f32 %v4007, %v4050
        %v4056 = vadd.f32 %v4008, %v4050
        %v4057 = vadd.f32 %v4009, %v4050
        %v4058 = vadd.f32 %v4010, %v4050
        %v4059 = vadd.f32 %v4011, %v4050
        %v4060 = vadd.f32 %v4012, %v4050
        %v4061 = vadd.f32 %v4013, %v4050
        %v4062 = vadd.f32 %v4014, %v4050
        %v4063 = vadd.f32 %v4015, %v4050
        %v4064 = vadd.f32 %v4016, %v4050
        %v4065 = vadd.f32 %v4017, %v4050
        %v4066 = vadd.f32 %v4018, %v4050
        %v4067 = vadd.f32 %v4019, %v4050
        %v4068 = vadd.f32 %v4020, %v4050
        %v4069 = vadd.f32 %v4021, %v4050
        %v4070 = vadd.f32 %v4022, %v4050
        %v4071 = vadd.f32 %v4023, %v4050
        %v4072 = vadd.f32 %v4024, %v4050
        %v4073 = vadd.f32 %v4025, %v4050
        %v4074 = vadd.f32 %v4026, %v4050
        %v4075 = vadd.f32 %v4027, %v4050
        %v4076 = vadd.f32 %v4028, %v4050
        %v4077 = vadd.f32 %v4029, %v4050
        %v4078 = vadd.f32 %v4030, %v4050
        %v4079 = vadd.f32 %v4031, %v4050
        %v4080 = vadd.f32 %v4032, %v4050
        %v4081 = vadd.f32 %v4033, %v4050
        %v4082 = vadd.f32 %v4034, %v4050
        %v4083 = vadd.f32 %v4035, %v4050
        %v4084 = vadd.f32 %v4036, %v4050
        %v4085 = vadd.f32 %v4037, %v4050
        %v4086 = vadd.f32 %v4038, %v4050
        %v4087 = vadd.f32 %v4039, %v4050
        %v4088 = vadd.f32 %v4040, %v4050
        %v4089 = vadd.f32 %v4041, %v4050
        %v4090 = vadd.f32 %v4042, %v4050
        %v4091 = vadd.f32 %v4043, %v4050
        %v4092 = vadd.f32 %v4044, %v4050
        %v4093 = vld [vmem:[%s13] sm:$0xf]
        %v4094 = vld [vmem:[%s13 + $0x4] sm:$0xf]
        %v4095 = vld [vmem:[%s13 + $0x8] sm:$0xf]
        %v4096 = vld [vmem:[%s13 + $0xc] sm:$0xf]
        %v4097 = vld [vmem:[%s13 + $0x10] sm:$0xf]
        %v4098 = vld [vmem:[%s13 + $0x14] sm:$0xf]
        %v4099 = vld [vmem:[%s13 + $0x18] sm:$0xf]
        %v4100 = vld [vmem:[%s13 + $0x1c] sm:$0xf]
        %v4101 = vld [vmem:[%s13 + $0x20] sm:$0xf]
        %v4102 = vld [vmem:[%s13 + $0x24] sm:$0xf]
        %v4103 = vld [vmem:[%s13 + $0x28] sm:$0xf]
        %v4104 = vld [vmem:[%s13 + $0x2c] sm:$0xf]
        %v4105 = vld [vmem:[%s13 + $0x30] sm:$0xf]
        %v4106 = vld [vmem:[%s13 + $0x34] sm:$0xf]
        %v4107 = vld [vmem:[%s13 + $0x38] sm:$0xf]
        %v4108 = vld [vmem:[%s13 + $0x3c] sm:$0xf]
        %v4125 = vunpack.c.l.b16 %v4093
        %v4126 = vunpack.c.l.b16 %v4094
        %v4127 = vunpack.c.l.b16 %v4095
        %v4128 = vunpack.c.l.b16 %v4096
        %v4129 = vunpack.c.l.b16 %v4097
        %v4130 = vunpack.c.l.b16 %v4098
        %v4131 = vunpack.c.l.b16 %v4099
        %v4132 = vunpack.c.l.b16 %v4100
        %v4133 = vunpack.c.l.b16 %v4101
        %v4134 = vunpack.c.l.b16 %v4102
        %v4135 = vunpack.c.l.b16 %v4103
        %v4136 = vunpack.c.l.b16 %v4104
        %v4137 = vunpack.c.l.b16 %v4105
        %v4138 = vunpack.c.l.b16 %v4106
        %v4139 = vunpack.c.l.b16 %v4107
        %v4140 = vunpack.c.l.b16 %v4108
        %v4141 = vpack.c.b16 %v4126, %v4125
        %v4142 = vpack.c.b16 %v4128, %v4127
        %v4143 = vpack.c.b16 %v4130, %v4129
        %v4144 = vpack.c.b16 %v4132, %v4131
        %v4145 = vpack.c.b16 %v4134, %v4133
        %v4146 = vpack.c.b16 %v4136, %v4135
        %v4147 = vpack.c.b16 %v4138, %v4137
        %v4148 = vpack.c.b16 %v4140, %v4139
        %4157 = vmatprep.subr.bf16.mxu0 0
        %4158 = vmatpush1.bf16.msra.mxu0 %v4148
        %4159 = vmatprep.subr.bf16.mxu0 0
        %4160 = vmatpush1.bf16.msra.mxu0 %v4147
        %4161 = vmatprep.subr.bf16.mxu0 0
        %4162 = vmatpush1.bf16.msra.mxu0 %v4146
        %4163 = vmatprep.subr.bf16.mxu0 0
        %4164 = vmatpush1.bf16.msra.mxu0 %v4145
        %4165 = vmatprep.subr.bf16.mxu0 0
        %4166 = vmatpush1.bf16.msra.mxu0 %v4144
        %4167 = vmatprep.subr.bf16.mxu0 0
        %4168 = vmatpush1.bf16.msra.mxu0 %v4143
        %4169 = vmatprep.subr.bf16.mxu0 0
        %4170 = vmatpush1.bf16.msra.mxu0 %v4142
        %4171 = vmatprep.subr.bf16.mxu0 0
        %4172 = vmatpush1.bf16.msra.mxu0 %v4141
        %4173 = vmatprep.subr.bf16.mxu0 0
        %4174 = vmatpush2.bf16.msra.mxu0 0
        %4175 = vmatprep.subr.bf16.mxu0 0
        %4176 = vmatpush2.bf16.msra.mxu0 0
        %4177 = vmatprep.subr.bf16.mxu0 0
        %4178 = vmatpush2.bf16.msra.mxu0 0
        %4179 = vmatprep.subr.bf16.mxu0 0
        %4180 = vmatpush2.bf16.msra.mxu0 0
        %4181 = vmatprep.subr.bf16.mxu0 0
        %4182 = vmatpush2.bf16.msra.mxu0 0
        %4183 = vmatprep.subr.bf16.mxu0 0
        %4184 = vmatpush2.bf16.msra.mxu0 0
        %4185 = vmatprep.subr.bf16.mxu0 0
        %4186 = vmatpush2.bf16.msra.mxu0 0
        %4187 = vmatprep.subr.bf16.mxu0 0
        %4188 = vmatpush2.bf16.msra.mxu0 0
        %4189 = vmatprep.mubr.bf16.mxu0 0
        %4190 = vmatmul.mubr.bf16.gmra.mxu0 %v639
        %v4191 = vpop.f32.mrf.mxu0
        %v4192 = vadd.f32 0.0, %v4191
        %v4193 = vpop.f32.mrf.mxu0
        %v4194 = vpop.f32.mrf.mxu0
        %v4195 = vadd.f32 0.0, %v4194
        %v4196 = vpop.f32.mrf.mxu0
        %4197 = vmatprep.mubr.bf16.mxu0 0
        %4198 = vmatmul.mubr.bf16.gmra.mxu0 %v640
        %v4199 = vpop.f32.mrf.mxu0
        %v4200 = vadd.f32 0.0, %v4199
        %v4201 = vpop.f32.mrf.mxu0
        %v4202 = vpop.f32.mrf.mxu0
        %v4203 = vadd.f32 0.0, %v4202
        %v4204 = vpop.f32.mrf.mxu0
        %4205 = vmatprep.mubr.bf16.mxu0 0
        %4206 = vmatmul.mubr.bf16.gmra.mxu0 %v641
        %v4207 = vpop.f32.mrf.mxu0
        %v4208 = vadd.f32 0.0, %v4207
        %v4209 = vpop.f32.mrf.mxu0
        %v4210 = vpop.f32.mrf.mxu0
        %v4211 = vadd.f32 0.0, %v4210
        %v4212 = vpop.f32.mrf.mxu0
        %4213 = vmatprep.mubr.bf16.mxu0 0
        %4214 = vmatmul.mubr.bf16.gmra.mxu0 %v642
        %v4215 = vpop.f32.mrf.mxu0
        %v4216 = vadd.f32 0.0, %v4215
        %v4217 = vpop.f32.mrf.mxu0
        %v4218 = vpop.f32.mrf.mxu0
        %v4219 = vadd.f32 0.0, %v4218
        %v4220 = vpop.f32.mrf.mxu0
        %4221 = vmatprep.mubr.bf16.mxu0 0
        %4222 = vmatmul.mubr.bf16.gmra.mxu0 %v643
        %v4223 = vpop.f32.mrf.mxu0
        %v4224 = vadd.f32 0.0, %v4223
        %v4225 = vpop.f32.mrf.mxu0
        %v4226 = vpop.f32.mrf.mxu0
        %v4227 = vadd.f32 0.0, %v4226
        %v4228 = vpop.f32.mrf.mxu0
        %4229 = vmatprep.mubr.bf16.mxu0 0
        %4230 = vmatmul.mubr.bf16.gmra.mxu0 %v644
        %v4231 = vpop.f32.mrf.mxu0
        %v4232 = vadd.f32 0.0, %v4231
        %v4233 = vpop.f32.mrf.mxu0
        %v4234 = vpop.f32.mrf.mxu0
        %v4235 = vadd.f32 0.0, %v4234
        %v4236 = vpop.f32.mrf.mxu0
        %4237 = vmatprep.mubr.bf16.mxu0 0
        %4238 = vmatmul.mubr.bf16.gmra.mxu0 %v645
        %v4239 = vpop.f32.mrf.mxu0
        %v4240 = vadd.f32 0.0, %v4239
        %v4241 = vpop.f32.mrf.mxu0
        %v4242 = vpop.f32.mrf.mxu0
        %v4243 = vadd.f32 0.0, %v4242
        %v4244 = vpop.f32.mrf.mxu0
        %4245 = vmatprep.mubr.bf16.mxu0 0
        %4246 = vmatmul.mubr.bf16.gmra.mxu0 %v646
        %v4247 = vpop.f32.mrf.mxu0
        %v4248 = vadd.f32 0.0, %v4247
        %v4249 = vpop.f32.mrf.mxu0
        %v4250 = vpop.f32.mrf.mxu0
        %v4251 = vadd.f32 0.0, %v4250
        %v4252 = vpop.f32.mrf.mxu0
        %4253 = vmatprep.mubr.bf16.mxu0 0
        %4254 = vmatmul.mubr.bf16.gmra.mxu0 %v647
        %v4255 = vpop.f32.mrf.mxu0
        %v4256 = vadd.f32 0.0, %v4255
        %v4257 = vpop.f32.mrf.mxu0
        %v4258 = vpop.f32.mrf.mxu0
        %v4259 = vadd.f32 0.0, %v4258
        %v4260 = vpop.f32.mrf.mxu0
        %4261 = vmatprep.mubr.bf16.mxu0 0
        %4262 = vmatmul.mubr.bf16.gmra.mxu0 %v648
        %v4263 = vpop.f32.mrf.mxu0
        %v4264 = vadd.f32 0.0, %v4263
        %v4265 = vpop.f32.mrf.mxu0
        %v4266 = vpop.f32.mrf.mxu0
        %v4267 = vadd.f32 0.0, %v4266
        %v4268 = vpop.f32.mrf.mxu0
        %4269 = vmatprep.mubr.bf16.mxu0 0
        %4270 = vmatmul.mubr.bf16.gmra.mxu0 %v649
        %v4271 = vpop.f32.mrf.mxu0
        %v4272 = vadd.f32 0.0, %v4271
        %v4273 = vpop.f32.mrf.mxu0
        %v4274 = vpop.f32.mrf.mxu0
        %v4275 = vadd.f32 0.0, %v4274
        %v4276 = vpop.f32.mrf.mxu0
        %4277 = vmatprep.mubr.bf16.mxu0 0
        %4278 = vmatmul.mubr.bf16.gmra.mxu0 %v650
        %v4279 = vpop.f32.mrf.mxu0
        %v4280 = vadd.f32 0.0, %v4279
        %v4281 = vpop.f32.mrf.mxu0
        %v4282 = vpop.f32.mrf.mxu0
        %v4283 = vadd.f32 0.0, %v4282
        %v4284 = vpop.f32.mrf.mxu0
        %4285 = vmatprep.mubr.bf16.mxu0 0
        %4286 = vmatmul.mubr.bf16.gmra.mxu0 %v651
        %v4287 = vpop.f32.mrf.mxu0
        %v4288 = vadd.f32 0.0, %v4287
        %v4289 = vpop.f32.mrf.mxu0
        %v4290 = vpop.f32.mrf.mxu0
        %v4291 = vadd.f32 0.0, %v4290
        %v4292 = vpop.f32.mrf.mxu0
        %4293 = vmatprep.mubr.bf16.mxu0 0
        %4294 = vmatmul.mubr.bf16.gmra.mxu0 %v652
        %v4295 = vpop.f32.mrf.mxu0
        %v4296 = vadd.f32 0.0, %v4295
        %v4297 = vpop.f32.mrf.mxu0
        %v4298 = vpop.f32.mrf.mxu0
        %v4299 = vadd.f32 0.0, %v4298
        %v4300 = vpop.f32.mrf.mxu0
        %4301 = vmatprep.mubr.bf16.mxu0 0
        %4302 = vmatmul.mubr.bf16.gmra.mxu0 %v653
        %v4303 = vpop.f32.mrf.mxu0
        %v4304 = vadd.f32 0.0, %v4303
        %v4305 = vpop.f32.mrf.mxu0
        %v4306 = vpop.f32.mrf.mxu0
        %v4307 = vadd.f32 0.0, %v4306
        %v4308 = vpop.f32.mrf.mxu0
        %4309 = vmatprep.mubr.bf16.mxu0 0
        %4310 = vmatmul.mubr.bf16.gmra.mxu0 %v654
        %v4311 = vpop.f32.mrf.mxu0
        %v4312 = vadd.f32 0.0, %v4311
        %v4313 = vpop.f32.mrf.mxu0
        %v4314 = vpop.f32.mrf.mxu0
        %v4315 = vadd.f32 0.0, %v4314
        %v4316 = vpop.f32.mrf.mxu0
        %4317 = vmatprep.mubr.bf16.mxu0 0
        %4318 = vmatmul.mubr.bf16.gmra.mxu0 %v655
        %v4319 = vpop.f32.mrf.mxu0
        %v4320 = vadd.f32 0.0, %v4319
        %v4321 = vpop.f32.mrf.mxu0
        %v4322 = vpop.f32.mrf.mxu0
        %v4323 = vadd.f32 0.0, %v4322
        %v4324 = vpop.f32.mrf.mxu0
        %4325 = vmatprep.mubr.bf16.mxu0 0
        %4326 = vmatmul.mubr.bf16.gmra.mxu0 %v656
        %v4327 = vpop.f32.mrf.mxu0
        %v4328 = vadd.f32 0.0, %v4327
        %v4329 = vpop.f32.mrf.mxu0
        %v4330 = vpop.f32.mrf.mxu0
        %v4331 = vadd.f32 0.0, %v4330
        %v4332 = vpop.f32.mrf.mxu0
        %4333 = vmatprep.mubr.bf16.mxu0 0
        %4334 = vmatmul.mubr.bf16.gmra.mxu0 %v657
        %v4335 = vpop.f32.mrf.mxu0
        %v4336 = vadd.f32 0.0, %v4335
        %v4337 = vpop.f32.mrf.mxu0
        %v4338 = vpop.f32.mrf.mxu0
        %v4339 = vadd.f32 0.0, %v4338
        %v4340 = vpop.f32.mrf.mxu0
        %4341 = vmatprep.mubr.bf16.mxu0 0
        %4342 = vmatmul.mubr.bf16.gmra.mxu0 %v658
        %v4343 = vpop.f32.mrf.mxu0
        %v4344 = vadd.f32 0.0, %v4343
        %v4345 = vpop.f32.mrf.mxu0
        %v4346 = vpop.f32.mrf.mxu0
        %v4347 = vadd.f32 0.0, %v4346
        %v4348 = vpop.f32.mrf.mxu0
        %4349 = vmatprep.mubr.bf16.mxu0 0
        %4350 = vmatmul.mubr.bf16.gmra.mxu0 %v659
        %v4351 = vpop.f32.mrf.mxu0
        %v4352 = vadd.f32 0.0, %v4351
        %v4353 = vpop.f32.mrf.mxu0
        %v4354 = vpop.f32.mrf.mxu0
        %v4355 = vpop.f32.mrf.mxu0
        %4356 = vdwg.mxu0
        %v4357 = vadd.f32 %v4052, %v4192
        %v4358 = vadd.f32 %v4053, %v4195
        %v4359 = vadd.f32 %v4054, %v4200
        %v4360 = vadd.f32 %v4055, %v4203
        %v4361 = vadd.f32 %v4056, %v4208
        %v4362 = vadd.f32 %v4057, %v4211
        %v4363 = vadd.f32 %v4058, %v4216
        %v4364 = vadd.f32 %v4059, %v4219
        %v4365 = vadd.f32 %v4060, %v4224
        %v4366 = vadd.f32 %v4061, %v4227
        %v4367 = vadd.f32 %v4062, %v4232
        %v4368 = vadd.f32 %v4063, %v4235
        %v4369 = vadd.f32 %v4064, %v4240
        %v4370 = vadd.f32 %v4065, %v4243
        %v4371 = vadd.f32 %v4066, %v4248
        %v4372 = vadd.f32 %v4067, %v4251
        %v4373 = vadd.f32 %v4068, %v4256
        %v4374 = vadd.f32 %v4069, %v4259
        %v4375 = vadd.f32 %v4070, %v4264
        %v4376 = vadd.f32 %v4071, %v4267
        %v4377 = vadd.f32 %v4072, %v4272
        %v4378 = vadd.f32 %v4073, %v4275
        %v4379 = vadd.f32 %v4074, %v4280
        %v4380 = vadd.f32 %v4075, %v4283
        %v4381 = vadd.f32 %v4076, %v4288
        %v4382 = vadd.f32 %v4077, %v4291
        %v4383 = vadd.f32 %v4078, %v4296
        %v4384 = vadd.f32 %v4079, %v4299
        %v4385 = vadd.f32 %v4080, %v4304
        %v4386 = vadd.f32 %v4081, %v4307
        %v4387 = vadd.f32 %v4082, %v4312
        %v4388 = vadd.f32 %v4083, %v4315
        %v4389 = vadd.f32 %v4084, %v4320
        %v4390 = vadd.f32 %v4085, %v4323
        %v4391 = vadd.f32 %v4086, %v4328
        %v4392 = vadd.f32 %v4087, %v4331
        %v4393 = vadd.f32 %v4088, %v4336
        %v4394 = vadd.f32 %v4089, %v4339
        %v4395 = vadd.f32 %v4090, %v4344
        %v4396 = vadd.f32 %v4091, %v4347
        %v4397 = vadd.f32 %v4092, %v4352
        %4398 = vst [vmem:[%s500] sm:$0xff] %v4357
        %4399 = vst [vmem:[%s500 + $0x8] sm:$0xff] %v4358
        %4400 = vst [vmem:[%s500 + $0x10] sm:$0xff] %v4359
        %4401 = vst [vmem:[%s500 + $0x18] sm:$0xff] %v4360
        %4402 = vst [vmem:[%s500 + $0x20] sm:$0xff] %v4361
        %4403 = vst [vmem:[%s500 + $0x28] sm:$0xff] %v4362
        %4404 = vst [vmem:[%s500 + $0x30] sm:$0xff] %v4363
        %4405 = vst [vmem:[%s500 + $0x38] sm:$0xff] %v4364
        %4406 = vst [vmem:[%s500 + $0x40] sm:$0xff] %v4365
        %4407 = vst [vmem:[%s500 + $0x48] sm:$0xff] %v4366
        %4408 = vst [vmem:[%s500 + $0x50] sm:$0xff] %v4367
        %4409 = vst [vmem:[%s500 + $0x58] sm:$0xff] %v4368
        %4410 = vst [vmem:[%s500 + $0x60] sm:$0xff] %v4369
        %4411 = vst [vmem:[%s500 + $0x68] sm:$0xff] %v4370
        %4412 = vst [vmem:[%s500 + $0x70] sm:$0xff] %v4371
        %4413 = vst [vmem:[%s500 + $0x78] sm:$0xff] %v4372
        %4414 = vst [vmem:[%s500 + $0x80] sm:$0xff] %v4373
        %4415 = vst [vmem:[%s500 + $0x88] sm:$0xff] %v4374
        %4416 = vst [vmem:[%s500 + $0x90] sm:$0xff] %v4375
        %4417 = vst [vmem:[%s500 + $0x98] sm:$0xff] %v4376
        %4418 = vst [vmem:[%s500 + $0xa0] sm:$0xff] %v4377
        %4419 = vst [vmem:[%s500 + $0xa8] sm:$0xff] %v4378
        %4420 = vst [vmem:[%s500 + $0xb0] sm:$0xff] %v4379
        %4421 = vst [vmem:[%s500 + $0xb8] sm:$0xff] %v4380
        %4422 = vst [vmem:[%s500 + $0xc0] sm:$0xff] %v4381
        %4423 = vst [vmem:[%s500 + $0xc8] sm:$0xff] %v4382
        %4424 = vst [vmem:[%s500 + $0xd0] sm:$0xff] %v4383
        %4425 = vst [vmem:[%s500 + $0xd8] sm:$0xff] %v4384
        %4426 = vst [vmem:[%s500 + $0xe0] sm:$0xff] %v4385
        %4427 = vst [vmem:[%s500 + $0xe8] sm:$0xff] %v4386
        %4428 = vst [vmem:[%s500 + $0xf0] sm:$0xff] %v4387
        %4429 = vst [vmem:[%s500 + $0xf8] sm:$0xff] %v4388
        %4430 = vst [vmem:[%s500 + $0x100] sm:$0xff] %v4389
        %4431 = vst [vmem:[%s500 + $0x108] sm:$0xff] %v4390
        %4432 = vst [vmem:[%s500 + $0x110] sm:$0xff] %v4391
        %4433 = vst [vmem:[%s500 + $0x118] sm:$0xff] %v4392
        %4434 = vst [vmem:[%s500 + $0x120] sm:$0xff] %v4393
        %4435 = vst [vmem:[%s500 + $0x128] sm:$0xff] %v4394
        %4436 = vst [vmem:[%s500 + $0x130] sm:$0xff] %v4395
        %4437 = vst [vmem:[%s500 + $0x138] sm:$0xff] %v4396
        %4438 = vst [vmem:[%s500 + $0x140] sm:$0xff] %v4397
        %s4439 = sand.u32 %s339, 1
        %s4440 = scalar_lea.sflag [#allocation4], %s4439
        %s4441 = sand.u32 %s339, 1
        %s4442 = smul.addr %s4441, 328
        %s4443 = scalar_lea.vmem [#allocation7], %s4442
        // Predicated region
        $region85: #{tpu_custom_call.1} parent=75 // pred_check
          %p4444 = pneg %p349
        $region86: #{tpu_custom_call.1} parent=75 // pred_check_branch
          %4446 = sbr.rel (%p4444) target = $region88
        $region87: #{tpu_custom_call.1} parent=75 // pred_region
          %s4448 = ssub.s32 5248, 5248
          %4449 = vsyncadd %s4440, %s4448
          %s4450 = smul.addr %s32, 41
          %s4451 = smul.addr %s4450, 128
          %s4452 = scalar_lea.hbm %s14, %s4451
          %s4453 = sshll.u32 %s4443, 4
          %s4454 = int_to_ptr.vmem [resolvable:$true] %s4453
          %4459 = dma.vmem_to_hbm [thread:$0]  %s4454, 5248, %s4452, %s4440, 128, 128, 8
        $region88: #{tpu_custom_call.1} parent=75 // pred_fallthru
          _
      $region76: #{tpu_custom_call.1} parent=5 // pred_fallthru
        _
      %p4460 = scmp.le.s32.totalorder 2, %s27
      // Predicated region
      $region89: #{tpu_custom_call.1} parent=5 // pred_check
        %p4461 = pneg %p4460
      $region90: #{tpu_custom_call.1} parent=5 // pred_check_branch
        %4463 = sbr.rel (%p4461) target = $region92
      $region91: #{tpu_custom_call.1} parent=5 // pred_region
        %s4464 = ssub.s32 %s27, 2
        // Predicated region
        $region93: #{tpu_custom_call.1} parent=91 // pred_check
          %p4465 = pneg %p355
        $region94: #{tpu_custom_call.1} parent=91 // pred_check_branch
          %4467 = sbr.rel (%p4465) target = $region96
        $region95: #{tpu_custom_call.1} parent=91 // pred_region
          %s4468 = sand.u32 %s340, 1
          %s4469 = scalar_lea.sflag [#allocation4], %s4468
          %s4470 = sand.u32 %s340, 1
          %s4471 = smul.addr %s4470, 328
          %s4472 = scalar_lea.vmem [#allocation7], %s4471
          %4473 = dma.done %s4469, 5248
        $region96: #{tpu_custom_call.1} parent=91 // pred_fallthru
          _
      $region92: #{tpu_custom_call.1} parent=5 // pred_fallthru
        _
    $region6: #{tpu_custom_call.1} parent=1 // loop_footer
      %s31 = sadd.s32 1, %s27
    $region7: #{tpu_custom_call.1} parent=1 // loop_footer_branch
      %26 = sbr.rel target = $region3
    $region8: #{tpu_custom_call.1} parent=1 // loop_exit
      _
    %4474 = vsyncpa [#allocation3], 1
    %s4475 = scalar_lea.sflag [#allocation3], 1
    %4476 = vsyncpa %s4475, 1
    %4477 = vsyncpa [#allocation6], 1
    %4478 = vsyncpa [#allocation4], 1
    %s4479 = scalar_lea.sflag [#allocation4], 1
    %4480 = vsyncpa %s4479, 1

</llo_original>
